<compile_context>
chip_gen: v6e
topology: v6e:2x2x1
jax: 0.10.0
libtpu: 0.0.40
codegen_flags: <defaults>
</compile_context>

<pallas_src>
import functools

import jax
import jax.numpy as jnp
import numpy as np
from jax.experimental import pallas as pl
from jax.experimental.pallas import tpu as pltpu

# ---------------- model hyper-parameters (small, consistent with the module) ----------
INPUT_SPACE = 4
ACTION_SPACE = 2          # scaling tensor has 2 entries -> action_space must be 2
LSTM_HIDDEN = 32
FC_HIDDEN = 32
BATCH = 2
SEQ = 8

MAX_ACCELERATION = 5.0
MAX_YAW_RATE = 0.7

_VMEM = pl.BlockSpec(memory_space=pltpu.MemorySpace.VMEM)


def _dpad(d):
    """Round the input-feature count up to a sublane multiple (8) for aligned packing."""
    return ((d + 7) // 8) * 8


# ---------------- fused Pallas kernel -------------------------------------------------
def lstm_fc_kernel(x_ref,          # (B*T, D)        rows ordered b*T + t
                   wpack_ref,      # (D_pad+3H, 4H)  [wih0_pad; whh0; wih1; whh1]
                   bpack_ref,      # (2, 4H)         [b0; b1]
                   fc1_ref,        # (H+1, F)        [fc_w1; fc_b1]
                   fc2_ref,        # (F+2, A)        [fc_w2; fc_b2; scale]
                   out_ref,        # (B*T, A)        rows ordered b*T + t
                   *, B, T, D, H, F, A):
    f32 = jnp.float32
    dp = _dpad(D)

    # Static, 8-sublane-aligned slices of the packed parameter blocks (loop-invariant,
    # hoisted once; no per-step loads).
    wih0 = wpack_ref[0:D, :]
    whh0 = wpack_ref[dp:dp + H, :]
    wih1 = wpack_ref[dp + H:dp + 2 * H, :]
    whh1 = wpack_ref[dp + 2 * H:dp + 3 * H, :]
    b0 = bpack_ref[0:1, :]
    b1 = bpack_ref[1:2, :]
    fw1 = fc1_ref[0:H, :]
    fb1 = fc1_ref[H:H + 1, :]
    fw2 = fc2_ref[0:F, :]
    fb2 = fc2_ref[F:F + 1, :]
    scale = fc2_ref[F + 1:F + 2, :]

    # Hoisted layer-0 input projection: one batched matmul (+ bias) for all timesteps.
    xproj = jnp.dot(x_ref[...], wih0, preferred_element_type=f32) + b0   # (B*T, 4H)

    def gates(z):                                 # PyTorch gate order: (i, f, g, o)
        i = jax.nn.sigmoid(z[:, 0 * H:1 * H])
        f = jax.nn.sigmoid(z[:, 1 * H:2 * H])
        g = jnp.tanh(z[:, 2 * H:3 * H])
        o = jax.nn.sigmoid(z[:, 3 * H:4 * H])
        return i, f, g, o

    # State carried in registers (no VMEM scratch, no per-step state stores/loads).
    h0 = jnp.zeros((B, H), f32)
    c0 = jnp.zeros((B, H), f32)
    h1 = jnp.zeros((B, H), f32)
    c1 = jnp.zeros((B, H), f32)

    h1_steps = []
    for t in range(T):                            # fully unrolled (T static & small)
        # Rows of xproj belonging to timestep t (one per batch element): static slices
        # + sublane concat, independent of the recurrence -> schedulable up-front.
        xp_t = jnp.concatenate(
            [xproj[b * T + t: b * T + t + 1, :] for b in range(B)], axis=0)  # (B, 4H)

        # ---- layer 0: only the recurrent matmul remains on the serial path.
        z0 = xp_t + jnp.dot(h0, whh0, preferred_element_type=f32)
        i0, f0, g0, o0 = gates(z0)
        c0 = f0 * c0 + i0 * g0
        h0 = o0 * jnp.tanh(c0)

        # ---- layer 1: h1(t-1) @ W_hh1 only needs last step's state -> overlaps layer 0.
        z1 = (jnp.dot(h0, wih1, preferred_element_type=f32)
              + jnp.dot(h1, whh1, preferred_element_type=f32) + b1)
        i1, f1, g1, o1 = gates(z1)
        c1 = f1 * c1 + i1 * g1
        h1 = o1 * jnp.tanh(c1)
        h1_steps.append(h1)

    # ---- FC head on all hidden states at once, while still on-chip ----
    # Reorder to (b, t) row order to match out_ref (static slices + sublane concat).
    hflat = jnp.concatenate(
        [h1_steps[t][b: b + 1, :] for b in range(B) for t in range(T)],
        axis=0)                                                     # (B*T, H)

    y = jnp.dot(hflat, fw1, preferred_element_type=f32) + fb1
    y = jnp.maximum(y, 0.0)                       # ReLU (Dropout = identity at inference)
    z = jnp.dot(y, fw2, preferred_element_type=f32) + fb2
    out_ref[...] = jnp.tanh(z) * scale            # Tanh, then * [MAX_ACC, MAX_YAW_RATE]


# ---------------- wrapper --------------------------------------------------------------
@jax.jit
def lstm_model_forward(history, packed):
    """history: (B, T, INPUT_SPACE) float32 -> (B, T, ACTION_SPACE) float32."""
    B, T, D = history.shape
    H, F, A = LSTM_HIDDEN, FC_HIDDEN, ACTION_SPACE
    G = 4 * H

    x2d = history.reshape(B * T, D)               # free, contiguous reshape (no transpose)

    # Advisory cost estimate so XLA doesn't treat the custom call as zero-cost.
    flops = (2 * B * T * D * G                    # hoisted input projection
             + T * 3 * (2 * B * H * G)            # per-step matmuls: whh0, wih1, whh1
             + 2 * B * T * H * F + 2 * B * T * F * A)
    transcendentals = T * 10 * B * H + B * T * A
    bytes_accessed = 4 * (B * T * D
                          + packed["w_pack"].size + packed["b_pack"].size
                          + packed["fc1_pack"].size + packed["fc2_pack"].size
                          + B * T * A)

    out2d = pl.pallas_call(
        functools.partial(lstm_fc_kernel, B=B, T=T, D=D, H=H, F=F, A=A),
        out_shape=jax.ShapeDtypeStruct((B * T, A), jnp.float32),
        in_specs=[_VMEM] * 5,
        out_specs=_VMEM,
        cost_estimate=pl.CostEstimate(flops=flops,
                                      transcendentals=transcendentals,
                                      bytes_accessed=bytes_accessed),
    )(x2d, packed["w_pack"], packed["b_pack"], packed["fc1_pack"], packed["fc2_pack"])

    return out2d.reshape(B, T, A)                 # free reshape back to (B, T, A)


# ---------------- parameter init & packing ---------------------------------------------
def init_params(key):
    """Deterministic init matching the module's shapes.
    LSTM: uniform(-1/sqrt(H), 1/sqrt(H)) like PyTorch default. FC: xavier-normal, zero bias."""
    H, D, F, A = LSTM_HIDDEN, INPUT_SPACE, FC_HIDDEN, ACTION_SPACE
    ks = jax.random.split(key, 12)
    bound = 1.0 / np.sqrt(H)
    u = lambda k, s: jax.random.uniform(k, s, jnp.float32, -bound, bound)

    # LSTM layer 0 (PyTorch stores (4H, in); we keep transposed (in, 4H) for x @ W)
    wih0 = u(ks[0], (D, 4 * H))
    whh0 = u(ks[1], (H, 4 * H))
    b0 = (u(ks[2], (1, 4 * H)) + u(ks[3], (1, 4 * H)))        # b_ih + b_hh
    # LSTM layer 1
    wih1 = u(ks[4], (H, 4 * H))
    whh1 = u(ks[5], (H, 4 * H))
    b1 = (u(ks[6], (1, 4 * H)) + u(ks[7], (1, 4 * H)))

    # FC (xavier normal), stored transposed for x @ W
    xn = lambda k, fan_in, fan_out: (jax.random.normal(k, (fan_in, fan_out), jnp.float32)
                                     * np.sqrt(2.0 / (fan_in + fan_out)))
    fc_w1 = xn(ks[8], H, F)
    fc_b1 = jnp.zeros((1, F), jnp.float32)
    fc_w2 = xn(ks[9], F, A)
    fc_b2 = jnp.zeros((1, A), jnp.float32)

    scale = jnp.array([[MAX_ACCELERATION, MAX_YAW_RATE]], jnp.float32)

    return dict(wih0=wih0, whh0=whh0, b0=b0, wih1=wih1, whh1=whh1, b1=b1,
                fc_w1=fc_w1, fc_b1=fc_b1, fc_w2=fc_w2, fc_b2=fc_b2, scale=scale)


def pack_params(p):
    """Pack the 11 logical parameter arrays into 4 kernel operands (done once, off-line).
    All segments start at 8-sublane-aligned row offsets so in-kernel slices are tile-aligned."""
    D, H = INPUT_SPACE, LSTM_HIDDEN
    dp = _dpad(D)
    wih0_pad = jnp.zeros((dp, 4 * H), jnp.float32).at[:D, :].set(p["wih0"])
    w_pack = jnp.concatenate([wih0_pad, p["whh0"], p["wih1"], p["whh1"]], axis=0)
    b_pack = jnp.concatenate([p["b0"], p["b1"]], axis=0)
    fc1_pack = jnp.concatenate([p["fc_w1"], p["fc_b1"]], axis=0)
    fc2_pack = jnp.concatenate([p["fc_w2"], p["fc_b2"], p["scale"]], axis=0)
    return dict(w_pack=w_pack, b_pack=b_pack, fc1_pack=fc1_pack, fc2_pack=fc2_pack)


# ---------------- pure-JAX reference (correctness sanity check) ------------------------
def reference_forward(history, p):
    B, T, D = history.shape
    H = LSTM_HIDDEN

    def cell(x_t, h, c, wih, whh, b):
        z = x_t @ wih + h @ whh + b
        i = jax.nn.sigmoid(z[:, :H])
        f = jax.nn.sigmoid(z[:, H:2 * H])
        g = jnp.tanh(z[:, 2 * H:3 * H])
        o = jax.nn.sigmoid(z[:, 3 * H:])
        c = f * c + i * g
        return o * jnp.tanh(c), c

    h0 = c0 = h1 = c1 = jnp.zeros((B, H), jnp.float32)
    outs = []
    for t in range(T):
        h0, c0 = cell(history[:, t, :], h0, c0, p["wih0"], p["whh0"], p["b0"])
        h1, c1 = cell(h0, h1, c1, p["wih1"], p["whh1"], p["b1"])
        outs.append(h1)
    out = jnp.stack(outs, axis=1)                              # (B, T, H)
    y = jnp.maximum(out @ p["fc_w1"] + p["fc_b1"], 0.0)
    z = jnp.tanh(y @ p["fc_w2"] + p["fc_b2"])
    return z * p["scale"]


if __name__ == "__main__":
    key = jax.random.PRNGKey(0)
    k_param, k_x = jax.random.split(key)
    params = init_params(k_param)
    packed = pack_params(params)
    history = jax.random.normal(k_x, (BATCH, SEQ, INPUT_SPACE), jnp.float32)

    out = lstm_model_forward(history, packed)
    out = jax.block_until_ready(out)

    ref = jax.block_until_ready(reference_forward(history, params))
    np.testing.assert_allclose(np.asarray(out), np.asarray(ref), rtol=1e-3, atol=1e-3)

    assert out.shape == (BATCH, SEQ, ACTION_SPACE)
    print("KERNEL_OK")
</pallas_src>

<mosaic_0001>
module attributes {stable_mosaic.version = 11 : i64} {
  func.func @lstm_fc_kernel(%arg0: memref<16x4xf32, #tpu.memory_space<vmem>>, %arg1: memref<104x128xf32, #tpu.memory_space<vmem>>, %arg2: memref<2x128xf32, #tpu.memory_space<vmem>>, %arg3: memref<33x32xf32, #tpu.memory_space<vmem>>, %arg4: memref<34x2xf32, #tpu.memory_space<vmem>>, %arg5: memref<16x2xf32, #tpu.memory_space<vmem>>) attributes {dimension_semantics = [], scalar_prefetch = 0 : i64, scratch_operands = 0 : i64, tpu.core_type = #tpu.core_type<tc>} {
    %c0 = arith.constant 0 : index
    %c0_0 = arith.constant 0 : index
    %0 = vector.load %arg1[%c0, %c0_0] : memref<104x128xf32, #tpu.memory_space<vmem>>, vector<4x128xf32>
    %c8 = arith.constant 8 : index
    %c0_1 = arith.constant 0 : index
    %1 = vector.load %arg1[%c8, %c0_1] : memref<104x128xf32, #tpu.memory_space<vmem>>, vector<32x128xf32>
    %c40 = arith.constant 40 : index
    %c0_2 = arith.constant 0 : index
    %2 = vector.load %arg1[%c40, %c0_2] : memref<104x128xf32, #tpu.memory_space<vmem>>, vector<32x128xf32>
    %c72 = arith.constant 72 : index
    %c0_3 = arith.constant 0 : index
    %3 = vector.load %arg1[%c72, %c0_3] : memref<104x128xf32, #tpu.memory_space<vmem>>, vector<32x128xf32>
    %c0_4 = arith.constant 0 : index
    %c0_5 = arith.constant 0 : index
    %4 = vector.load %arg2[%c0_4, %c0_5] : memref<2x128xf32, #tpu.memory_space<vmem>>, vector<1x128xf32>
    %c1 = arith.constant 1 : index
    %c0_6 = arith.constant 0 : index
    %5 = vector.load %arg2[%c1, %c0_6] : memref<2x128xf32, #tpu.memory_space<vmem>>, vector<1x128xf32>
    %c0_7 = arith.constant 0 : index
    %c0_8 = arith.constant 0 : index
    %6 = vector.load %arg3[%c0_7, %c0_8] : memref<33x32xf32, #tpu.memory_space<vmem>>, vector<32x32xf32>
    %c32 = arith.constant 32 : index
    %c0_9 = arith.constant 0 : index
    %7 = vector.load %arg3[%c32, %c0_9] : memref<33x32xf32, #tpu.memory_space<vmem>>, vector<1x32xf32>
    %c0_10 = arith.constant 0 : index
    %c0_11 = arith.constant 0 : index
    %8 = vector.load %arg4[%c0_10, %c0_11] : memref<34x2xf32, #tpu.memory_space<vmem>>, vector<32x2xf32>
    %c32_12 = arith.constant 32 : index
    %c0_13 = arith.constant 0 : index
    %9 = vector.load %arg4[%c32_12, %c0_13] : memref<34x2xf32, #tpu.memory_space<vmem>>, vector<1x2xf32>
    %c33 = arith.constant 33 : index
    %c0_14 = arith.constant 0 : index
    %10 = vector.load %arg4[%c33, %c0_14] : memref<34x2xf32, #tpu.memory_space<vmem>>, vector<1x2xf32>
    %c0_15 = arith.constant 0 : index
    %c0_16 = arith.constant 0 : index
    %11 = vector.load %arg0[%c0_15, %c0_16] : memref<16x4xf32, #tpu.memory_space<vmem>>, vector<16x4xf32>
    %cst = arith.constant dense<0.000000e+00> : vector<16x128xf32>
    %12 = tpu.matmul %11, %0, %cst {dimension_numbers = #tpu.dot_dimension_numbers<[1], [0], [0], [1], [0, 0, 1, 1], [], []>} : vector<16x4xf32>, vector<4x128xf32>, vector<16x128xf32> -> vector<16x128xf32>
    %13 = vector.broadcast %4 : vector<1x128xf32> to vector<16x128xf32>
    %14 = arith.addf %12, %13 : vector<16x128xf32>
    %cst_17 = arith.constant 0.000000e+00 : f32
    %15 = vector.broadcast %cst_17 : f32 to vector<2x32xf32>
    %cst_18 = arith.constant 0.000000e+00 : f32
    %16 = vector.broadcast %cst_18 : f32 to vector<2x32xf32>
    %cst_19 = arith.constant 0.000000e+00 : f32
    %17 = vector.broadcast %cst_19 : f32 to vector<2x32xf32>
    %cst_20 = arith.constant 0.000000e+00 : f32
    %18 = vector.broadcast %cst_20 : f32 to vector<2x32xf32>
    %19 = vector.extract_strided_slice %14 {offsets = [0, 0], sizes = [1, 128], strides = [1, 1]} : vector<16x128xf32> to vector<1x128xf32>
    %20 = vector.extract_strided_slice %14 {offsets = [8, 0], sizes = [1, 128], strides = [1, 1]} : vector<16x128xf32> to vector<1x128xf32>
    %21 = tpu.concatenate %19, %20 in 0 : vector<1x128xf32>, vector<1x128xf32> -> vector<2x128xf32>
    %cst_21 = arith.constant dense<0.000000e+00> : vector<2x128xf32>
    %22 = tpu.matmul %15, %1, %cst_21 {dimension_numbers = #tpu.dot_dimension_numbers<[1], [0], [0], [1], [0, 0, 1, 1], [], []>} : vector<2x32xf32>, vector<32x128xf32>, vector<2x128xf32> -> vector<2x128xf32>
    %23 = arith.addf %21, %22 : vector<2x128xf32>
    %24 = vector.extract_strided_slice %23 {offsets = [0, 0], sizes = [2, 32], strides = [1, 1]} : vector<2x128xf32> to vector<2x32xf32>
    %25 = arith.negf %24 : vector<2x32xf32>
    %26 = math.exp %25 : vector<2x32xf32>
    %cst_22 = arith.constant 1.000000e+00 : f32
    %27 = vector.broadcast %cst_22 : f32 to vector<2x32xf32>
    %28 = arith.addf %27, %26 : vector<2x32xf32>
    %29 = arith.divf %27, %28 : vector<2x32xf32>
    %30 = vector.extract_strided_slice %23 {offsets = [0, 32], sizes = [2, 32], strides = [1, 1]} : vector<2x128xf32> to vector<2x32xf32>
    %31 = arith.negf %30 : vector<2x32xf32>
    %32 = math.exp %31 : vector<2x32xf32>
    %cst_23 = arith.constant 1.000000e+00 : f32
    %33 = vector.broadcast %cst_23 : f32 to vector<2x32xf32>
    %34 = arith.addf %33, %32 : vector<2x32xf32>
    %35 = arith.divf %33, %34 : vector<2x32xf32>
    %36 = vector.extract_strided_slice %23 {offsets = [0, 64], sizes = [2, 32], strides = [1, 1]} : vector<2x128xf32> to vector<2x32xf32>
    %37 = math.tanh %36 : vector<2x32xf32>
    %38 = vector.extract_strided_slice %23 {offsets = [0, 96], sizes = [2, 32], strides = [1, 1]} : vector<2x128xf32> to vector<2x32xf32>
    %39 = arith.negf %38 : vector<2x32xf32>
    %40 = math.exp %39 : vector<2x32xf32>
    %cst_24 = arith.constant 1.000000e+00 : f32
    %41 = vector.broadcast %cst_24 : f32 to vector<2x32xf32>
    %42 = arith.addf %41, %40 : vector<2x32xf32>
    %43 = arith.divf %41, %42 : vector<2x32xf32>
    %44 = arith.mulf %35, %16 : vector<2x32xf32>
    %45 = arith.mulf %29, %37 : vector<2x32xf32>
    %46 = arith.addf %44, %45 : vector<2x32xf32>
    %47 = math.tanh %46 : vector<2x32xf32>
    %48 = arith.mulf %43, %47 : vector<2x32xf32>
    %cst_25 = arith.constant dense<0.000000e+00> : vector<2x128xf32>
    %49 = tpu.matmul %48, %2, %cst_25 {dimension_numbers = #tpu.dot_dimension_numbers<[1], [0], [0], [1], [0, 0, 1, 1], [], []>} : vector<2x32xf32>, vector<32x128xf32>, vector<2x128xf32> -> vector<2x128xf32>
    %cst_26 = arith.constant dense<0.000000e+00> : vector<2x128xf32>
    %50 = tpu.matmul %17, %3, %cst_26 {dimension_numbers = #tpu.dot_dimension_numbers<[1], [0], [0], [1], [0, 0, 1, 1], [], []>} : vector<2x32xf32>, vector<32x128xf32>, vector<2x128xf32> -> vector<2x128xf32>
    %51 = arith.addf %49, %50 : vector<2x128xf32>
    %52 = vector.broadcast %5 : vector<1x128xf32> to vector<2x128xf32>
    %53 = arith.addf %51, %52 : vector<2x128xf32>
    %54 = vector.extract_strided_slice %53 {offsets = [0, 0], sizes = [2, 32], strides = [1, 1]} : vector<2x128xf32> to vector<2x32xf32>
    %55 = arith.negf %54 : vector<2x32xf32>
    %56 = math.exp %55 : vector<2x32xf32>
    %cst_27 = arith.constant 1.000000e+00 : f32
    %57 = vector.broadcast %cst_27 : f32 to vector<2x32xf32>
    %58 = arith.addf %57, %56 : vector<2x32xf32>
    %59 = arith.divf %57, %58 : vector<2x32xf32>
    %60 = vector.extract_strided_slice %53 {offsets = [0, 32], sizes = [2, 32], strides = [1, 1]} : vector<2x128xf32> to vector<2x32xf32>
    %61 = arith.negf %60 : vector<2x32xf32>
    %62 = math.exp %61 : vector<2x32xf32>
    %cst_28 = arith.constant 1.000000e+00 : f32
    %63 = vector.broadcast %cst_28 : f32 to vector<2x32xf32>
    %64 = arith.addf %63, %62 : vector<2x32xf32>
    %65 = arith.divf %63, %64 : vector<2x32xf32>
    %66 = vector.extract_strided_slice %53 {offsets = [0, 64], sizes = [2, 32], strides = [1, 1]} : vector<2x128xf32> to vector<2x32xf32>
    %67 = math.tanh %66 : vector<2x32xf32>
    %68 = vector.extract_strided_slice %53 {offsets = [0, 96], sizes = [2, 32], strides = [1, 1]} : vector<2x128xf32> to vector<2x32xf32>
    %69 = arith.negf %68 : vector<2x32xf32>
    %70 = math.exp %69 : vector<2x32xf32>
    %cst_29 = arith.constant 1.000000e+00 : f32
    %71 = vector.broadcast %cst_29 : f32 to vector<2x32xf32>
    %72 = arith.addf %71, %70 : vector<2x32xf32>
    %73 = arith.divf %71, %72 : vector<2x32xf32>
    %74 = arith.mulf %65, %18 : vector<2x32xf32>
    %75 = arith.mulf %59, %67 : vector<2x32xf32>
    %76 = arith.addf %74, %75 : vector<2x32xf32>
    %77 = math.tanh %76 : vector<2x32xf32>
    %78 = arith.mulf %73, %77 : vector<2x32xf32>
    %79 = vector.extract_strided_slice %14 {offsets = [1, 0], sizes = [1, 128], strides = [1, 1]} : vector<16x128xf32> to vector<1x128xf32>
    %80 = vector.extract_strided_slice %14 {offsets = [9, 0], sizes = [1, 128], strides = [1, 1]} : vector<16x128xf32> to vector<1x128xf32>
    %81 = tpu.concatenate %79, %80 in 0 : vector<1x128xf32>, vector<1x128xf32> -> vector<2x128xf32>
    %cst_30 = arith.constant dense<0.000000e+00> : vector<2x128xf32>
    %82 = tpu.matmul %48, %1, %cst_30 {dimension_numbers = #tpu.dot_dimension_numbers<[1], [0], [0], [1], [0, 0, 1, 1], [], []>} : vector<2x32xf32>, vector<32x128xf32>, vector<2x128xf32> -> vector<2x128xf32>
    %83 = arith.addf %81, %82 : vector<2x128xf32>
    %84 = vector.extract_strided_slice %83 {offsets = [0, 0], sizes = [2, 32], strides = [1, 1]} : vector<2x128xf32> to vector<2x32xf32>
    %85 = arith.negf %84 : vector<2x32xf32>
    %86 = math.exp %85 : vector<2x32xf32>
    %cst_31 = arith.constant 1.000000e+00 : f32
    %87 = vector.broadcast %cst_31 : f32 to vector<2x32xf32>
    %88 = arith.addf %87, %86 : vector<2x32xf32>
    %89 = arith.divf %87, %88 : vector<2x32xf32>
    %90 = vector.extract_strided_slice %83 {offsets = [0, 32], sizes = [2, 32], strides = [1, 1]} : vector<2x128xf32> to vector<2x32xf32>
    %91 = arith.negf %90 : vector<2x32xf32>
    %92 = math.exp %91 : vector<2x32xf32>
    %cst_32 = arith.constant 1.000000e+00 : f32
    %93 = vector.broadcast %cst_32 : f32 to vector<2x32xf32>
    %94 = arith.addf %93, %92 : vector<2x32xf32>
    %95 = arith.divf %93, %94 : vector<2x32xf32>
    %96 = vector.extract_strided_slice %83 {offsets = [0, 64], sizes = [2, 32], strides = [1, 1]} : vector<2x128xf32> to vector<2x32xf32>
    %97 = math.tanh %96 : vector<2x32xf32>
    %98 = vector.extract_strided_slice %83 {offsets = [0, 96], sizes = [2, 32], strides = [1, 1]} : vector<2x128xf32> to vector<2x32xf32>
    %99 = arith.negf %98 : vector<2x32xf32>
    %100 = math.exp %99 : vector<2x32xf32>
    %cst_33 = arith.constant 1.000000e+00 : f32
    %101 = vector.broadcast %cst_33 : f32 to vector<2x32xf32>
    %102 = arith.addf %101, %100 : vector<2x32xf32>
    %103 = arith.divf %101, %102 : vector<2x32xf32>
    %104 = arith.mulf %95, %46 : vector<2x32xf32>
    %105 = arith.mulf %89, %97 : vector<2x32xf32>
    %106 = arith.addf %104, %105 : vector<2x32xf32>
    %107 = math.tanh %106 : vector<2x32xf32>
    %108 = arith.mulf %103, %107 : vector<2x32xf32>
    %cst_34 = arith.constant dense<0.000000e+00> : vector<2x128xf32>
    %109 = tpu.matmul %108, %2, %cst_34 {dimension_numbers = #tpu.dot_dimension_numbers<[1], [0], [0], [1], [0, 0, 1, 1], [], []>} : vector<2x32xf32>, vector<32x128xf32>, vector<2x128xf32> -> vector<2x128xf32>
    %cst_35 = arith.constant dense<0.000000e+00> : vector<2x128xf32>
    %110 = tpu.matmul %78, %3, %cst_35 {dimension_numbers = #tpu.dot_dimension_numbers<[1], [0], [0], [1], [0, 0, 1, 1], [], []>} : vector<2x32xf32>, vector<32x128xf32>, vector<2x128xf32> -> vector<2x128xf32>
    %111 = arith.addf %109, %110 : vector<2x128xf32>
    %112 = vector.broadcast %5 : vector<1x128xf32> to vector<2x128xf32>
    %113 = arith.addf %111, %112 : vector<2x128xf32>
    %114 = vector.extract_strided_slice %113 {offsets = [0, 0], sizes = [2, 32], strides = [1, 1]} : vector<2x128xf32> to vector<2x32xf32>
    %115 = arith.negf %114 : vector<2x32xf32>
    %116 = math.exp %115 : vector<2x32xf32>
    %cst_36 = arith.constant 1.000000e+00 : f32
    %117 = vector.broadcast %cst_36 : f32 to vector<2x32xf32>
    %118 = arith.addf %117, %116 : vector<2x32xf32>
    %119 = arith.divf %117, %118 : vector<2x32xf32>
    %120 = vector.extract_strided_slice %113 {offsets = [0, 32], sizes = [2, 32], strides = [1, 1]} : vector<2x128xf32> to vector<2x32xf32>
    %121 = arith.negf %120 : vector<2x32xf32>
    %122 = math.exp %121 : vector<2x32xf32>
    %cst_37 = arith.constant 1.000000e+00 : f32
    %123 = vector.broadcast %cst_37 : f32 to vector<2x32xf32>
    %124 = arith.addf %123, %122 : vector<2x32xf32>
    %125 = arith.divf %123, %124 : vector<2x32xf32>
    %126 = vector.extract_strided_slice %113 {offsets = [0, 64], sizes = [2, 32], strides = [1, 1]} : vector<2x128xf32> to vector<2x32xf32>
    %127 = math.tanh %126 : vector<2x32xf32>
    %128 = vector.extract_strided_slice %113 {offsets = [0, 96], sizes = [2, 32], strides = [1, 1]} : vector<2x128xf32> to vector<2x32xf32>
    %129 = arith.negf %128 : vector<2x32xf32>
    %130 = math.exp %129 : vector<2x32xf32>
    %cst_38 = arith.constant 1.000000e+00 : f32
    %131 = vector.broadcast %cst_38 : f32 to vector<2x32xf32>
    %132 = arith.addf %131, %130 : vector<2x32xf32>
    %133 = arith.divf %131, %132 : vector<2x32xf32>
    %134 = arith.mulf %125, %76 : vector<2x32xf32>
    %135 = arith.mulf %119, %127 : vector<2x32xf32>
    %136 = arith.addf %134, %135 : vector<2x32xf32>
    %137 = math.tanh %136 : vector<2x32xf32>
    %138 = arith.mulf %133, %137 : vector<2x32xf32>
    %139 = vector.extract_strided_slice %14 {offsets = [2, 0], sizes = [1, 128], strides = [1, 1]} : vector<16x128xf32> to vector<1x128xf32>
    %140 = vector.extract_strided_slice %14 {offsets = [10, 0], sizes = [1, 128], strides = [1, 1]} : vector<16x128xf32> to vector<1x128xf32>
    %141 = tpu.concatenate %139, %140 in 0 : vector<1x128xf32>, vector<1x128xf32> -> vector<2x128xf32>
    %cst_39 = arith.constant dense<0.000000e+00> : vector<2x128xf32>
    %142 = tpu.matmul %108, %1, %cst_39 {dimension_numbers = #tpu.dot_dimension_numbers<[1], [0], [0], [1], [0, 0, 1, 1], [], []>} : vector<2x32xf32>, vector<32x128xf32>, vector<2x128xf32> -> vector<2x128xf32>
    %143 = arith.addf %141, %142 : vector<2x128xf32>
    %144 = vector.extract_strided_slice %143 {offsets = [0, 0], sizes = [2, 32], strides = [1, 1]} : vector<2x128xf32> to vector<2x32xf32>
    %145 = arith.negf %144 : vector<2x32xf32>
    %146 = math.exp %145 : vector<2x32xf32>
    %cst_40 = arith.constant 1.000000e+00 : f32
    %147 = vector.broadcast %cst_40 : f32 to vector<2x32xf32>
    %148 = arith.addf %147, %146 : vector<2x32xf32>
    %149 = arith.divf %147, %148 : vector<2x32xf32>
    %150 = vector.extract_strided_slice %143 {offsets = [0, 32], sizes = [2, 32], strides = [1, 1]} : vector<2x128xf32> to vector<2x32xf32>
    %151 = arith.negf %150 : vector<2x32xf32>
    %152 = math.exp %151 : vector<2x32xf32>
    %cst_41 = arith.constant 1.000000e+00 : f32
    %153 = vector.broadcast %cst_41 : f32 to vector<2x32xf32>
    %154 = arith.addf %153, %152 : vector<2x32xf32>
    %155 = arith.divf %153, %154 : vector<2x32xf32>
    %156 = vector.extract_strided_slice %143 {offsets = [0, 64], sizes = [2, 32], strides = [1, 1]} : vector<2x128xf32> to vector<2x32xf32>
    %157 = math.tanh %156 : vector<2x32xf32>
    %158 = vector.extract_strided_slice %143 {offsets = [0, 96], sizes = [2, 32], strides = [1, 1]} : vector<2x128xf32> to vector<2x32xf32>
    %159 = arith.negf %158 : vector<2x32xf32>
    %160 = math.exp %159 : vector<2x32xf32>
    %cst_42 = arith.constant 1.000000e+00 : f32
    %161 = vector.broadcast %cst_42 : f32 to vector<2x32xf32>
    %162 = arith.addf %161, %160 : vector<2x32xf32>
    %163 = arith.divf %161, %162 : vector<2x32xf32>
    %164 = arith.mulf %155, %106 : vector<2x32xf32>
    %165 = arith.mulf %149, %157 : vector<2x32xf32>
    %166 = arith.addf %164, %165 : vector<2x32xf32>
    %167 = math.tanh %166 : vector<2x32xf32>
    %168 = arith.mulf %163, %167 : vector<2x32xf32>
    %cst_43 = arith.constant dense<0.000000e+00> : vector<2x128xf32>
    %169 = tpu.matmul %168, %2, %cst_43 {dimension_numbers = #tpu.dot_dimension_numbers<[1], [0], [0], [1], [0, 0, 1, 1], [], []>} : vector<2x32xf32>, vector<32x128xf32>, vector<2x128xf32> -> vector<2x128xf32>
    %cst_44 = arith.constant dense<0.000000e+00> : vector<2x128xf32>
    %170 = tpu.matmul %138, %3, %cst_44 {dimension_numbers = #tpu.dot_dimension_numbers<[1], [0], [0], [1], [0, 0, 1, 1], [], []>} : vector<2x32xf32>, vector<32x128xf32>, vector<2x128xf32> -> vector<2x128xf32>
    %171 = arith.addf %169, %170 : vector<2x128xf32>
    %172 = vector.broadcast %5 : vector<1x128xf32> to vector<2x128xf32>
    %173 = arith.addf %171, %172 : vector<2x128xf32>
    %174 = vector.extract_strided_slice %173 {offsets = [0, 0], sizes = [2, 32], strides = [1, 1]} : vector<2x128xf32> to vector<2x32xf32>
    %175 = arith.negf %174 : vector<2x32xf32>
    %176 = math.exp %175 : vector<2x32xf32>
    %cst_45 = arith.constant 1.000000e+00 : f32
    %177 = vector.broadcast %cst_45 : f32 to vector<2x32xf32>
    %178 = arith.addf %177, %176 : vector<2x32xf32>
    %179 = arith.divf %177, %178 : vector<2x32xf32>
    %180 = vector.extract_strided_slice %173 {offsets = [0, 32], sizes = [2, 32], strides = [1, 1]} : vector<2x128xf32> to vector<2x32xf32>
    %181 = arith.negf %180 : vector<2x32xf32>
    %182 = math.exp %181 : vector<2x32xf32>
    %cst_46 = arith.constant 1.000000e+00 : f32
    %183 = vector.broadcast %cst_46 : f32 to vector<2x32xf32>
    %184 = arith.addf %183, %182 : vector<2x32xf32>
    %185 = arith.divf %183, %184 : vector<2x32xf32>
    %186 = vector.extract_strided_slice %173 {offsets = [0, 64], sizes = [2, 32], strides = [1, 1]} : vector<2x128xf32> to vector<2x32xf32>
    %187 = math.tanh %186 : vector<2x32xf32>
    %188 = vector.extract_strided_slice %173 {offsets = [0, 96], sizes = [2, 32], strides = [1, 1]} : vector<2x128xf32> to vector<2x32xf32>
    %189 = arith.negf %188 : vector<2x32xf32>
    %190 = math.exp %189 : vector<2x32xf32>
    %cst_47 = arith.constant 1.000000e+00 : f32
    %191 = vector.broadcast %cst_47 : f32 to vector<2x32xf32>
    %192 = arith.addf %191, %190 : vector<2x32xf32>
    %193 = arith.divf %191, %192 : vector<2x32xf32>
    %194 = arith.mulf %185, %136 : vector<2x32xf32>
    %195 = arith.mulf %179, %187 : vector<2x32xf32>
    %196 = arith.addf %194, %195 : vector<2x32xf32>
    %197 = math.tanh %196 : vector<2x32xf32>
    %198 = arith.mulf %193, %197 : vector<2x32xf32>
    %199 = vector.extract_strided_slice %14 {offsets = [3, 0], sizes = [1, 128], strides = [1, 1]} : vector<16x128xf32> to vector<1x128xf32>
    %200 = vector.extract_strided_slice %14 {offsets = [11, 0], sizes = [1, 128], strides = [1, 1]} : vector<16x128xf32> to vector<1x128xf32>
    %201 = tpu.concatenate %199, %200 in 0 : vector<1x128xf32>, vector<1x128xf32> -> vector<2x128xf32>
    %cst_48 = arith.constant dense<0.000000e+00> : vector<2x128xf32>
    %202 = tpu.matmul %168, %1, %cst_48 {dimension_numbers = #tpu.dot_dimension_numbers<[1], [0], [0], [1], [0, 0, 1, 1], [], []>} : vector<2x32xf32>, vector<32x128xf32>, vector<2x128xf32> -> vector<2x128xf32>
    %203 = arith.addf %201, %202 : vector<2x128xf32>
    %204 = vector.extract_strided_slice %203 {offsets = [0, 0], sizes = [2, 32], strides = [1, 1]} : vector<2x128xf32> to vector<2x32xf32>
    %205 = arith.negf %204 : vector<2x32xf32>
    %206 = math.exp %205 : vector<2x32xf32>
    %cst_49 = arith.constant 1.000000e+00 : f32
    %207 = vector.broadcast %cst_49 : f32 to vector<2x32xf32>
    %208 = arith.addf %207, %206 : vector<2x32xf32>
    %209 = arith.divf %207, %208 : vector<2x32xf32>
    %210 = vector.extract_strided_slice %203 {offsets = [0, 32], sizes = [2, 32], strides = [1, 1]} : vector<2x128xf32> to vector<2x32xf32>
    %211 = arith.negf %210 : vector<2x32xf32>
    %212 = math.exp %211 : vector<2x32xf32>
    %cst_50 = arith.constant 1.000000e+00 : f32
    %213 = vector.broadcast %cst_50 : f32 to vector<2x32xf32>
    %214 = arith.addf %213, %212 : vector<2x32xf32>
    %215 = arith.divf %213, %214 : vector<2x32xf32>
    %216 = vector.extract_strided_slice %203 {offsets = [0, 64], sizes = [2, 32], strides = [1, 1]} : vector<2x128xf32> to vector<2x32xf32>
    %217 = math.tanh %216 : vector<2x32xf32>
    %218 = vector.extract_strided_slice %203 {offsets = [0, 96], sizes = [2, 32], strides = [1, 1]} : vector<2x128xf32> to vector<2x32xf32>
    %219 = arith.negf %218 : vector<2x32xf32>
    %220 = math.exp %219 : vector<2x32xf32>
    %cst_51 = arith.constant 1.000000e+00 : f32
    %221 = vector.broadcast %cst_51 : f32 to vector<2x32xf32>
    %222 = arith.addf %221, %220 : vector<2x32xf32>
    %223 = arith.divf %221, %222 : vector<2x32xf32>
    %224 = arith.mulf %215, %166 : vector<2x32xf32>
    %225 = arith.mulf %209, %217 : vector<2x32xf32>
    %226 = arith.addf %224, %225 : vector<2x32xf32>
    %227 = math.tanh %226 : vector<2x32xf32>
    %228 = arith.mulf %223, %227 : vector<2x32xf32>
    %cst_52 = arith.constant dense<0.000000e+00> : vector<2x128xf32>
    %229 = tpu.matmul %228, %2, %cst_52 {dimension_numbers = #tpu.dot_dimension_numbers<[1], [0], [0], [1], [0, 0, 1, 1], [], []>} : vector<2x32xf32>, vector<32x128xf32>, vector<2x128xf32> -> vector<2x128xf32>
    %cst_53 = arith.constant dense<0.000000e+00> : vector<2x128xf32>
    %230 = tpu.matmul %198, %3, %cst_53 {dimension_numbers = #tpu.dot_dimension_numbers<[1], [0], [0], [1], [0, 0, 1, 1], [], []>} : vector<2x32xf32>, vector<32x128xf32>, vector<2x128xf32> -> vector<2x128xf32>
    %231 = arith.addf %229, %230 : vector<2x128xf32>
    %232 = vector.broadcast %5 : vector<1x128xf32> to vector<2x128xf32>
    %233 = arith.addf %231, %232 : vector<2x128xf32>
    %234 = vector.extract_strided_slice %233 {offsets = [0, 0], sizes = [2, 32], strides = [1, 1]} : vector<2x128xf32> to vector<2x32xf32>
    %235 = arith.negf %234 : vector<2x32xf32>
    %236 = math.exp %235 : vector<2x32xf32>
    %cst_54 = arith.constant 1.000000e+00 : f32
    %237 = vector.broadcast %cst_54 : f32 to vector<2x32xf32>
    %238 = arith.addf %237, %236 : vector<2x32xf32>
    %239 = arith.divf %237, %238 : vector<2x32xf32>
    %240 = vector.extract_strided_slice %233 {offsets = [0, 32], sizes = [2, 32], strides = [1, 1]} : vector<2x128xf32> to vector<2x32xf32>
    %241 = arith.negf %240 : vector<2x32xf32>
    %242 = math.exp %241 : vector<2x32xf32>
    %cst_55 = arith.constant 1.000000e+00 : f32
    %243 = vector.broadcast %cst_55 : f32 to vector<2x32xf32>
    %244 = arith.addf %243, %242 : vector<2x32xf32>
    %245 = arith.divf %243, %244 : vector<2x32xf32>
    %246 = vector.extract_strided_slice %233 {offsets = [0, 64], sizes = [2, 32], strides = [1, 1]} : vector<2x128xf32> to vector<2x32xf32>
    %247 = math.tanh %246 : vector<2x32xf32>
    %248 = vector.extract_strided_slice %233 {offsets = [0, 96], sizes = [2, 32], strides = [1, 1]} : vector<2x128xf32> to vector<2x32xf32>
    %249 = arith.negf %248 : vector<2x32xf32>
    %250 = math.exp %249 : vector<2x32xf32>
    %cst_56 = arith.constant 1.000000e+00 : f32
    %251 = vector.broadcast %cst_56 : f32 to vector<2x32xf32>
    %252 = arith.addf %251, %250 : vector<2x32xf32>
    %253 = arith.divf %251, %252 : vector<2x32xf32>
    %254 = arith.mulf %245, %196 : vector<2x32xf32>
    %255 = arith.mulf %239, %247 : vector<2x32xf32>
    %256 = arith.addf %254, %255 : vector<2x32xf32>
    %257 = math.tanh %256 : vector<2x32xf32>
    %258 = arith.mulf %253, %257 : vector<2x32xf32>
    %259 = vector.extract_strided_slice %14 {offsets = [4, 0], sizes = [1, 128], strides = [1, 1]} : vector<16x128xf32> to vector<1x128xf32>
    %260 = vector.extract_strided_slice %14 {offsets = [12, 0], sizes = [1, 128], strides = [1, 1]} : vector<16x128xf32> to vector<1x128xf32>
    %261 = tpu.concatenate %259, %260 in 0 : vector<1x128xf32>, vector<1x128xf32> -> vector<2x128xf32>
    %cst_57 = arith.constant dense<0.000000e+00> : vector<2x128xf32>
    %262 = tpu.matmul %228, %1, %cst_57 {dimension_numbers = #tpu.dot_dimension_numbers<[1], [0], [0], [1], [0, 0, 1, 1], [], []>} : vector<2x32xf32>, vector<32x128xf32>, vector<2x128xf32> -> vector<2x128xf32>
    %263 = arith.addf %261, %262 : vector<2x128xf32>
    %264 = vector.extract_strided_slice %263 {offsets = [0, 0], sizes = [2, 32], strides = [1, 1]} : vector<2x128xf32> to vector<2x32xf32>
    %265 = arith.negf %264 : vector<2x32xf32>
    %266 = math.exp %265 : vector<2x32xf32>
    %cst_58 = arith.constant 1.000000e+00 : f32
    %267 = vector.broadcast %cst_58 : f32 to vector<2x32xf32>
    %268 = arith.addf %267, %266 : vector<2x32xf32>
    %269 = arith.divf %267, %268 : vector<2x32xf32>
    %270 = vector.extract_strided_slice %263 {offsets = [0, 32], sizes = [2, 32], strides = [1, 1]} : vector<2x128xf32> to vector<2x32xf32>
    %271 = arith.negf %270 : vector<2x32xf32>
    %272 = math.exp %271 : vector<2x32xf32>
    %cst_59 = arith.constant 1.000000e+00 : f32
    %273 = vector.broadcast %cst_59 : f32 to vector<2x32xf32>
    %274 = arith.addf %273, %272 : vector<2x32xf32>
    %275 = arith.divf %273, %274 : vector<2x32xf32>
    %276 = vector.extract_strided_slice %263 {offsets = [0, 64], sizes = [2, 32], strides = [1, 1]} : vector<2x128xf32> to vector<2x32xf32>
    %277 = math.tanh %276 : vector<2x32xf32>
    %278 = vector.extract_strided_slice %263 {offsets = [0, 96], sizes = [2, 32], strides = [1, 1]} : vector<2x128xf32> to vector<2x32xf32>
    %279 = arith.negf %278 : vector<2x32xf32>
    %280 = math.exp %279 : vector<2x32xf32>
    %cst_60 = arith.constant 1.000000e+00 : f32
    %281 = vector.broadcast %cst_60 : f32 to vector<2x32xf32>
    %282 = arith.addf %281, %280 : vector<2x32xf32>
    %283 = arith.divf %281, %282 : vector<2x32xf32>
    %284 = arith.mulf %275, %226 : vector<2x32xf32>
    %285 = arith.mulf %269, %277 : vector<2x32xf32>
    %286 = arith.addf %284, %285 : vector<2x32xf32>
    %287 = math.tanh %286 : vector<2x32xf32>
    %288 = arith.mulf %283, %287 : vector<2x32xf32>
    %cst_61 = arith.constant dense<0.000000e+00> : vector<2x128xf32>
    %289 = tpu.matmul %288, %2, %cst_61 {dimension_numbers = #tpu.dot_dimension_numbers<[1], [0], [0], [1], [0, 0, 1, 1], [], []>} : vector<2x32xf32>, vector<32x128xf32>, vector<2x128xf32> -> vector<2x128xf32>
    %cst_62 = arith.constant dense<0.000000e+00> : vector<2x128xf32>
    %290 = tpu.matmul %258, %3, %cst_62 {dimension_numbers = #tpu.dot_dimension_numbers<[1], [0], [0], [1], [0, 0, 1, 1], [], []>} : vector<2x32xf32>, vector<32x128xf32>, vector<2x128xf32> -> vector<2x128xf32>
    %291 = arith.addf %289, %290 : vector<2x128xf32>
    %292 = vector.broadcast %5 : vector<1x128xf32> to vector<2x128xf32>
    %293 = arith.addf %291, %292 : vector<2x128xf32>
    %294 = vector.extract_strided_slice %293 {offsets = [0, 0], sizes = [2, 32], strides = [1, 1]} : vector<2x128xf32> to vector<2x32xf32>
    %295 = arith.negf %294 : vector<2x32xf32>
    %296 = math.exp %295 : vector<2x32xf32>
    %cst_63 = arith.constant 1.000000e+00 : f32
    %297 = vector.broadcast %cst_63 : f32 to vector<2x32xf32>
    %298 = arith.addf %297, %296 : vector<2x32xf32>
    %299 = arith.divf %297, %298 : vector<2x32xf32>
    %300 = vector.extract_strided_slice %293 {offsets = [0, 32], sizes = [2, 32], strides = [1, 1]} : vector<2x128xf32> to vector<2x32xf32>
    %301 = arith.negf %300 : vector<2x32xf32>
    %302 = math.exp %301 : vector<2x32xf32>
    %cst_64 = arith.constant 1.000000e+00 : f32
    %303 = vector.broadcast %cst_64 : f32 to vector<2x32xf32>
    %304 = arith.addf %303, %302 : vector<2x32xf32>
    %305 = arith.divf %303, %304 : vector<2x32xf32>
    %306 = vector.extract_strided_slice %293 {offsets = [0, 64], sizes = [2, 32], strides = [1, 1]} : vector<2x128xf32> to vector<2x32xf32>
    %307 = math.tanh %306 : vector<2x32xf32>
    %308 = vector.extract_strided_slice %293 {offsets = [0, 96], sizes = [2, 32], strides = [1, 1]} : vector<2x128xf32> to vector<2x32xf32>
    %309 = arith.negf %308 : vector<2x32xf32>
    %310 = math.exp %309 : vector<2x32xf32>
    %cst_65 = arith.constant 1.000000e+00 : f32
    %311 = vector.broadcast %cst_65 : f32 to vector<2x32xf32>
    %312 = arith.addf %311, %310 : vector<2x32xf32>
    %313 = arith.divf %311, %312 : vector<2x32xf32>
    %314 = arith.mulf %305, %256 : vector<2x32xf32>
    %315 = arith.mulf %299, %307 : vector<2x32xf32>
    %316 = arith.addf %314, %315 : vector<2x32xf32>
    %317 = math.tanh %316 : vector<2x32xf32>
    %318 = arith.mulf %313, %317 : vector<2x32xf32>
    %319 = vector.extract_strided_slice %14 {offsets = [5, 0], sizes = [1, 128], strides = [1, 1]} : vector<16x128xf32> to vector<1x128xf32>
    %320 = vector.extract_strided_slice %14 {offsets = [13, 0], sizes = [1, 128], strides = [1, 1]} : vector<16x128xf32> to vector<1x128xf32>
    %321 = tpu.concatenate %319, %320 in 0 : vector<1x128xf32>, vector<1x128xf32> -> vector<2x128xf32>
    %cst_66 = arith.constant dense<0.000000e+00> : vector<2x128xf32>
    %322 = tpu.matmul %288, %1, %cst_66 {dimension_numbers = #tpu.dot_dimension_numbers<[1], [0], [0], [1], [0, 0, 1, 1], [], []>} : vector<2x32xf32>, vector<32x128xf32>, vector<2x128xf32> -> vector<2x128xf32>
    %323 = arith.addf %321, %322 : vector<2x128xf32>
    %324 = vector.extract_strided_slice %323 {offsets = [0, 0], sizes = [2, 32], strides = [1, 1]} : vector<2x128xf32> to vector<2x32xf32>
    %325 = arith.negf %324 : vector<2x32xf32>
    %326 = math.exp %325 : vector<2x32xf32>
    %cst_67 = arith.constant 1.000000e+00 : f32
    %327 = vector.broadcast %cst_67 : f32 to vector<2x32xf32>
    %328 = arith.addf %327, %326 : vector<2x32xf32>
    %329 = arith.divf %327, %328 : vector<2x32xf32>
    %330 = vector.extract_strided_slice %323 {offsets = [0, 32], sizes = [2, 32], strides = [1, 1]} : vector<2x128xf32> to vector<2x32xf32>
    %331 = arith.negf %330 : vector<2x32xf32>
    %332 = math.exp %331 : vector<2x32xf32>
    %cst_68 = arith.constant 1.000000e+00 : f32
    %333 = vector.broadcast %cst_68 : f32 to vector<2x32xf32>
    %334 = arith.addf %333, %332 : vector<2x32xf32>
    %335 = arith.divf %333, %334 : vector<2x32xf32>
    %336 = vector.extract_strided_slice %323 {offsets = [0, 64], sizes = [2, 32], strides = [1, 1]} : vector<2x128xf32> to vector<2x32xf32>
    %337 = math.tanh %336 : vector<2x32xf32>
    %338 = vector.extract_strided_slice %323 {offsets = [0, 96], sizes = [2, 32], strides = [1, 1]} : vector<2x128xf32> to vector<2x32xf32>
    %339 = arith.negf %338 : vector<2x32xf32>
    %340 = math.exp %339 : vector<2x32xf32>
    %cst_69 = arith.constant 1.000000e+00 : f32
    %341 = vector.broadcast %cst_69 : f32 to vector<2x32xf32>
    %342 = arith.addf %341, %340 : vector<2x32xf32>
    %343 = arith.divf %341, %342 : vector<2x32xf32>
    %344 = arith.mulf %335, %286 : vector<2x32xf32>
    %345 = arith.mulf %329, %337 : vector<2x32xf32>
    %346 = arith.addf %344, %345 : vector<2x32xf32>
    %347 = math.tanh %346 : vector<2x32xf32>
    %348 = arith.mulf %343, %347 : vector<2x32xf32>
    %cst_70 = arith.constant dense<0.000000e+00> : vector<2x128xf32>
    %349 = tpu.matmul %348, %2, %cst_70 {dimension_numbers = #tpu.dot_dimension_numbers<[1], [0], [0], [1], [0, 0, 1, 1], [], []>} : vector<2x32xf32>, vector<32x128xf32>, vector<2x128xf32> -> vector<2x128xf32>
    %cst_71 = arith.constant dense<0.000000e+00> : vector<2x128xf32>
    %350 = tpu.matmul %318, %3, %cst_71 {dimension_numbers = #tpu.dot_dimension_numbers<[1], [0], [0], [1], [0, 0, 1, 1], [], []>} : vector<2x32xf32>, vector<32x128xf32>, vector<2x128xf32> -> vector<2x128xf32>
    %351 = arith.addf %349, %350 : vector<2x128xf32>
    %352 = vector.broadcast %5 : vector<1x128xf32> to vector<2x128xf32>
    %353 = arith.addf %351, %352 : vector<2x128xf32>
    %354 = vector.extract_strided_slice %353 {offsets = [0, 0], sizes = [2, 32], strides = [1, 1]} : vector<2x128xf32> to vector<2x32xf32>
    %355 = arith.negf %354 : vector<2x32xf32>
    %356 = math.exp %355 : vector<2x32xf32>
    %cst_72 = arith.constant 1.000000e+00 : f32
    %357 = vector.broadcast %cst_72 : f32 to vector<2x32xf32>
    %358 = arith.addf %357, %356 : vector<2x32xf32>
    %359 = arith.divf %357, %358 : vector<2x32xf32>
    %360 = vector.extract_strided_slice %353 {offsets = [0, 32], sizes = [2, 32], strides = [1, 1]} : vector<2x128xf32> to vector<2x32xf32>
    %361 = arith.negf %360 : vector<2x32xf32>
    %362 = math.exp %361 : vector<2x32xf32>
    %cst_73 = arith.constant 1.000000e+00 : f32
    %363 = vector.broadcast %cst_73 : f32 to vector<2x32xf32>
    %364 = arith.addf %363, %362 : vector<2x32xf32>
    %365 = arith.divf %363, %364 : vector<2x32xf32>
    %366 = vector.extract_strided_slice %353 {offsets = [0, 64], sizes = [2, 32], strides = [1, 1]} : vector<2x128xf32> to vector<2x32xf32>
    %367 = math.tanh %366 : vector<2x32xf32>
    %368 = vector.extract_strided_slice %353 {offsets = [0, 96], sizes = [2, 32], strides = [1, 1]} : vector<2x128xf32> to vector<2x32xf32>
    %369 = arith.negf %368 : vector<2x32xf32>
    %370 = math.exp %369 : vector<2x32xf32>
    %cst_74 = arith.constant 1.000000e+00 : f32
    %371 = vector.broadcast %cst_74 : f32 to vector<2x32xf32>
    %372 = arith.addf %371, %370 : vector<2x32xf32>
    %373 = arith.divf %371, %372 : vector<2x32xf32>
    %374 = arith.mulf %365, %316 : vector<2x32xf32>
    %375 = arith.mulf %359, %367 : vector<2x32xf32>
    %376 = arith.addf %374, %375 : vector<2x32xf32>
    %377 = math.tanh %376 : vector<2x32xf32>
    %378 = arith.mulf %373, %377 : vector<2x32xf32>
    %379 = vector.extract_strided_slice %14 {offsets = [6, 0], sizes = [1, 128], strides = [1, 1]} : vector<16x128xf32> to vector<1x128xf32>
    %380 = vector.extract_strided_slice %14 {offsets = [14, 0], sizes = [1, 128], strides = [1, 1]} : vector<16x128xf32> to vector<1x128xf32>
    %381 = tpu.concatenate %379, %380 in 0 : vector<1x128xf32>, vector<1x128xf32> -> vector<2x128xf32>
    %cst_75 = arith.constant dense<0.000000e+00> : vector<2x128xf32>
    %382 = tpu.matmul %348, %1, %cst_75 {dimension_numbers = #tpu.dot_dimension_numbers<[1], [0], [0], [1], [0, 0, 1, 1], [], []>} : vector<2x32xf32>, vector<32x128xf32>, vector<2x128xf32> -> vector<2x128xf32>
    %383 = arith.addf %381, %382 : vector<2x128xf32>
    %384 = vector.extract_strided_slice %383 {offsets = [0, 0], sizes = [2, 32], strides = [1, 1]} : vector<2x128xf32> to vector<2x32xf32>
    %385 = arith.negf %384 : vector<2x32xf32>
    %386 = math.exp %385 : vector<2x32xf32>
    %cst_76 = arith.constant 1.000000e+00 : f32
    %387 = vector.broadcast %cst_76 : f32 to vector<2x32xf32>
    %388 = arith.addf %387, %386 : vector<2x32xf32>
    %389 = arith.divf %387, %388 : vector<2x32xf32>
    %390 = vector.extract_strided_slice %383 {offsets = [0, 32], sizes = [2, 32], strides = [1, 1]} : vector<2x128xf32> to vector<2x32xf32>
    %391 = arith.negf %390 : vector<2x32xf32>
    %392 = math.exp %391 : vector<2x32xf32>
    %cst_77 = arith.constant 1.000000e+00 : f32
    %393 = vector.broadcast %cst_77 : f32 to vector<2x32xf32>
    %394 = arith.addf %393, %392 : vector<2x32xf32>
    %395 = arith.divf %393, %394 : vector<2x32xf32>
    %396 = vector.extract_strided_slice %383 {offsets = [0, 64], sizes = [2, 32], strides = [1, 1]} : vector<2x128xf32> to vector<2x32xf32>
    %397 = math.tanh %396 : vector<2x32xf32>
    %398 = vector.extract_strided_slice %383 {offsets = [0, 96], sizes = [2, 32], strides = [1, 1]} : vector<2x128xf32> to vector<2x32xf32>
    %399 = arith.negf %398 : vector<2x32xf32>
    %400 = math.exp %399 : vector<2x32xf32>
    %cst_78 = arith.constant 1.000000e+00 : f32
    %401 = vector.broadcast %cst_78 : f32 to vector<2x32xf32>
    %402 = arith.addf %401, %400 : vector<2x32xf32>
    %403 = arith.divf %401, %402 : vector<2x32xf32>
    %404 = arith.mulf %395, %346 : vector<2x32xf32>
    %405 = arith.mulf %389, %397 : vector<2x32xf32>
    %406 = arith.addf %404, %405 : vector<2x32xf32>
    %407 = math.tanh %406 : vector<2x32xf32>
    %408 = arith.mulf %403, %407 : vector<2x32xf32>
    %cst_79 = arith.constant dense<0.000000e+00> : vector<2x128xf32>
    %409 = tpu.matmul %408, %2, %cst_79 {dimension_numbers = #tpu.dot_dimension_numbers<[1], [0], [0], [1], [0, 0, 1, 1], [], []>} : vector<2x32xf32>, vector<32x128xf32>, vector<2x128xf32> -> vector<2x128xf32>
    %cst_80 = arith.constant dense<0.000000e+00> : vector<2x128xf32>
    %410 = tpu.matmul %378, %3, %cst_80 {dimension_numbers = #tpu.dot_dimension_numbers<[1], [0], [0], [1], [0, 0, 1, 1], [], []>} : vector<2x32xf32>, vector<32x128xf32>, vector<2x128xf32> -> vector<2x128xf32>
    %411 = arith.addf %409, %410 : vector<2x128xf32>
    %412 = vector.broadcast %5 : vector<1x128xf32> to vector<2x128xf32>
    %413 = arith.addf %411, %412 : vector<2x128xf32>
    %414 = vector.extract_strided_slice %413 {offsets = [0, 0], sizes = [2, 32], strides = [1, 1]} : vector<2x128xf32> to vector<2x32xf32>
    %415 = arith.negf %414 : vector<2x32xf32>
    %416 = math.exp %415 : vector<2x32xf32>
    %cst_81 = arith.constant 1.000000e+00 : f32
    %417 = vector.broadcast %cst_81 : f32 to vector<2x32xf32>
    %418 = arith.addf %417, %416 : vector<2x32xf32>
    %419 = arith.divf %417, %418 : vector<2x32xf32>
    %420 = vector.extract_strided_slice %413 {offsets = [0, 32], sizes = [2, 32], strides = [1, 1]} : vector<2x128xf32> to vector<2x32xf32>
    %421 = arith.negf %420 : vector<2x32xf32>
    %422 = math.exp %421 : vector<2x32xf32>
    %cst_82 = arith.constant 1.000000e+00 : f32
    %423 = vector.broadcast %cst_82 : f32 to vector<2x32xf32>
    %424 = arith.addf %423, %422 : vector<2x32xf32>
    %425 = arith.divf %423, %424 : vector<2x32xf32>
    %426 = vector.extract_strided_slice %413 {offsets = [0, 64], sizes = [2, 32], strides = [1, 1]} : vector<2x128xf32> to vector<2x32xf32>
    %427 = math.tanh %426 : vector<2x32xf32>
    %428 = vector.extract_strided_slice %413 {offsets = [0, 96], sizes = [2, 32], strides = [1, 1]} : vector<2x128xf32> to vector<2x32xf32>
    %429 = arith.negf %428 : vector<2x32xf32>
    %430 = math.exp %429 : vector<2x32xf32>
    %cst_83 = arith.constant 1.000000e+00 : f32
    %431 = vector.broadcast %cst_83 : f32 to vector<2x32xf32>
    %432 = arith.addf %431, %430 : vector<2x32xf32>
    %433 = arith.divf %431, %432 : vector<2x32xf32>
    %434 = arith.mulf %425, %376 : vector<2x32xf32>
    %435 = arith.mulf %419, %427 : vector<2x32xf32>
    %436 = arith.addf %434, %435 : vector<2x32xf32>
    %437 = math.tanh %436 : vector<2x32xf32>
    %438 = arith.mulf %433, %437 : vector<2x32xf32>
    %439 = vector.extract_strided_slice %14 {offsets = [7, 0], sizes = [1, 128], strides = [1, 1]} : vector<16x128xf32> to vector<1x128xf32>
    %440 = vector.extract_strided_slice %14 {offsets = [15, 0], sizes = [1, 128], strides = [1, 1]} : vector<16x128xf32> to vector<1x128xf32>
    %441 = tpu.concatenate %439, %440 in 0 : vector<1x128xf32>, vector<1x128xf32> -> vector<2x128xf32>
    %cst_84 = arith.constant dense<0.000000e+00> : vector<2x128xf32>
    %442 = tpu.matmul %408, %1, %cst_84 {dimension_numbers = #tpu.dot_dimension_numbers<[1], [0], [0], [1], [0, 0, 1, 1], [], []>} : vector<2x32xf32>, vector<32x128xf32>, vector<2x128xf32> -> vector<2x128xf32>
    %443 = arith.addf %441, %442 : vector<2x128xf32>
    %444 = vector.extract_strided_slice %443 {offsets = [0, 0], sizes = [2, 32], strides = [1, 1]} : vector<2x128xf32> to vector<2x32xf32>
    %445 = arith.negf %444 : vector<2x32xf32>
    %446 = math.exp %445 : vector<2x32xf32>
    %cst_85 = arith.constant 1.000000e+00 : f32
    %447 = vector.broadcast %cst_85 : f32 to vector<2x32xf32>
    %448 = arith.addf %447, %446 : vector<2x32xf32>
    %449 = arith.divf %447, %448 : vector<2x32xf32>
    %450 = vector.extract_strided_slice %443 {offsets = [0, 32], sizes = [2, 32], strides = [1, 1]} : vector<2x128xf32> to vector<2x32xf32>
    %451 = arith.negf %450 : vector<2x32xf32>
    %452 = math.exp %451 : vector<2x32xf32>
    %cst_86 = arith.constant 1.000000e+00 : f32
    %453 = vector.broadcast %cst_86 : f32 to vector<2x32xf32>
    %454 = arith.addf %453, %452 : vector<2x32xf32>
    %455 = arith.divf %453, %454 : vector<2x32xf32>
    %456 = vector.extract_strided_slice %443 {offsets = [0, 64], sizes = [2, 32], strides = [1, 1]} : vector<2x128xf32> to vector<2x32xf32>
    %457 = math.tanh %456 : vector<2x32xf32>
    %458 = vector.extract_strided_slice %443 {offsets = [0, 96], sizes = [2, 32], strides = [1, 1]} : vector<2x128xf32> to vector<2x32xf32>
    %459 = arith.negf %458 : vector<2x32xf32>
    %460 = math.exp %459 : vector<2x32xf32>
    %cst_87 = arith.constant 1.000000e+00 : f32
    %461 = vector.broadcast %cst_87 : f32 to vector<2x32xf32>
    %462 = arith.addf %461, %460 : vector<2x32xf32>
    %463 = arith.divf %461, %462 : vector<2x32xf32>
    %464 = arith.mulf %455, %406 : vector<2x32xf32>
    %465 = arith.mulf %449, %457 : vector<2x32xf32>
    %466 = arith.addf %464, %465 : vector<2x32xf32>
    %467 = math.tanh %466 : vector<2x32xf32>
    %468 = arith.mulf %463, %467 : vector<2x32xf32>
    %cst_88 = arith.constant dense<0.000000e+00> : vector<2x128xf32>
    %469 = tpu.matmul %468, %2, %cst_88 {dimension_numbers = #tpu.dot_dimension_numbers<[1], [0], [0], [1], [0, 0, 1, 1], [], []>} : vector<2x32xf32>, vector<32x128xf32>, vector<2x128xf32> -> vector<2x128xf32>
    %cst_89 = arith.constant dense<0.000000e+00> : vector<2x128xf32>
    %470 = tpu.matmul %438, %3, %cst_89 {dimension_numbers = #tpu.dot_dimension_numbers<[1], [0], [0], [1], [0, 0, 1, 1], [], []>} : vector<2x32xf32>, vector<32x128xf32>, vector<2x128xf32> -> vector<2x128xf32>
    %471 = arith.addf %469, %470 : vector<2x128xf32>
    %472 = vector.broadcast %5 : vector<1x128xf32> to vector<2x128xf32>
    %473 = arith.addf %471, %472 : vector<2x128xf32>
    %474 = vector.extract_strided_slice %473 {offsets = [0, 0], sizes = [2, 32], strides = [1, 1]} : vector<2x128xf32> to vector<2x32xf32>
    %475 = arith.negf %474 : vector<2x32xf32>
    %476 = math.exp %475 : vector<2x32xf32>
    %cst_90 = arith.constant 1.000000e+00 : f32
    %477 = vector.broadcast %cst_90 : f32 to vector<2x32xf32>
    %478 = arith.addf %477, %476 : vector<2x32xf32>
    %479 = arith.divf %477, %478 : vector<2x32xf32>
    %480 = vector.extract_strided_slice %473 {offsets = [0, 32], sizes = [2, 32], strides = [1, 1]} : vector<2x128xf32> to vector<2x32xf32>
    %481 = arith.negf %480 : vector<2x32xf32>
    %482 = math.exp %481 : vector<2x32xf32>
    %cst_91 = arith.constant 1.000000e+00 : f32
    %483 = vector.broadcast %cst_91 : f32 to vector<2x32xf32>
    %484 = arith.addf %483, %482 : vector<2x32xf32>
    %485 = arith.divf %483, %484 : vector<2x32xf32>
    %486 = vector.extract_strided_slice %473 {offsets = [0, 64], sizes = [2, 32], strides = [1, 1]} : vector<2x128xf32> to vector<2x32xf32>
    %487 = math.tanh %486 : vector<2x32xf32>
    %488 = vector.extract_strided_slice %473 {offsets = [0, 96], sizes = [2, 32], strides = [1, 1]} : vector<2x128xf32> to vector<2x32xf32>
    %489 = arith.negf %488 : vector<2x32xf32>
    %490 = math.exp %489 : vector<2x32xf32>
    %cst_92 = arith.constant 1.000000e+00 : f32
    %491 = vector.broadcast %cst_92 : f32 to vector<2x32xf32>
    %492 = arith.addf %491, %490 : vector<2x32xf32>
    %493 = arith.divf %491, %492 : vector<2x32xf32>
    %494 = arith.mulf %485, %436 : vector<2x32xf32>
    %495 = arith.mulf %479, %487 : vector<2x32xf32>
    %496 = arith.addf %494, %495 : vector<2x32xf32>
    %497 = math.tanh %496 : vector<2x32xf32>
    %498 = arith.mulf %493, %497 : vector<2x32xf32>
    %499 = vector.extract_strided_slice %78 {offsets = [0, 0], sizes = [1, 32], strides = [1, 1]} : vector<2x32xf32> to vector<1x32xf32>
    %500 = vector.extract_strided_slice %138 {offsets = [0, 0], sizes = [1, 32], strides = [1, 1]} : vector<2x32xf32> to vector<1x32xf32>
    %501 = vector.extract_strided_slice %198 {offsets = [0, 0], sizes = [1, 32], strides = [1, 1]} : vector<2x32xf32> to vector<1x32xf32>
    %502 = vector.extract_strided_slice %258 {offsets = [0, 0], sizes = [1, 32], strides = [1, 1]} : vector<2x32xf32> to vector<1x32xf32>
    %503 = vector.extract_strided_slice %318 {offsets = [0, 0], sizes = [1, 32], strides = [1, 1]} : vector<2x32xf32> to vector<1x32xf32>
    %504 = vector.extract_strided_slice %378 {offsets = [0, 0], sizes = [1, 32], strides = [1, 1]} : vector<2x32xf32> to vector<1x32xf32>
    %505 = vector.extract_strided_slice %438 {offsets = [0, 0], sizes = [1, 32], strides = [1, 1]} : vector<2x32xf32> to vector<1x32xf32>
    %506 = vector.extract_strided_slice %498 {offsets = [0, 0], sizes = [1, 32], strides = [1, 1]} : vector<2x32xf32> to vector<1x32xf32>
    %507 = vector.extract_strided_slice %78 {offsets = [1, 0], sizes = [1, 32], strides = [1, 1]} : vector<2x32xf32> to vector<1x32xf32>
    %508 = vector.extract_strided_slice %138 {offsets = [1, 0], sizes = [1, 32], strides = [1, 1]} : vector<2x32xf32> to vector<1x32xf32>
    %509 = vector.extract_strided_slice %198 {offsets = [1, 0], sizes = [1, 32], strides = [1, 1]} : vector<2x32xf32> to vector<1x32xf32>
    %510 = vector.extract_strided_slice %258 {offsets = [1, 0], sizes = [1, 32], strides = [1, 1]} : vector<2x32xf32> to vector<1x32xf32>
    %511 = vector.extract_strided_slice %318 {offsets = [1, 0], sizes = [1, 32], strides = [1, 1]} : vector<2x32xf32> to vector<1x32xf32>
    %512 = vector.extract_strided_slice %378 {offsets = [1, 0], sizes = [1, 32], strides = [1, 1]} : vector<2x32xf32> to vector<1x32xf32>
    %513 = vector.extract_strided_slice %438 {offsets = [1, 0], sizes = [1, 32], strides = [1, 1]} : vector<2x32xf32> to vector<1x32xf32>
    %514 = vector.extract_strided_slice %498 {offsets = [1, 0], sizes = [1, 32], strides = [1, 1]} : vector<2x32xf32> to vector<1x32xf32>
    %515 = tpu.concatenate %499, %500, %501, %502, %503, %504, %505, %506, %507, %508, %509, %510, %511, %512, %513, %514 in 0 : vector<1x32xf32>, vector<1x32xf32>, vector<1x32xf32>, vector<1x32xf32>, vector<1x32xf32>, vector<1x32xf32>, vector<1x32xf32>, vector<1x32xf32>, vector<1x32xf32>, vector<1x32xf32>, vector<1x32xf32>, vector<1x32xf32>, vector<1x32xf32>, vector<1x32xf32>, vector<1x32xf32>, vector<1x32xf32> -> vector<16x32xf32>
    %cst_93 = arith.constant dense<0.000000e+00> : vector<16x32xf32>
    %516 = tpu.matmul %515, %6, %cst_93 {dimension_numbers = #tpu.dot_dimension_numbers<[1], [0], [0], [1], [0, 0, 1, 1], [], []>} : vector<16x32xf32>, vector<32x32xf32>, vector<16x32xf32> -> vector<16x32xf32>
    %517 = vector.broadcast %7 : vector<1x32xf32> to vector<16x32xf32>
    %518 = arith.addf %516, %517 : vector<16x32xf32>
    %cst_94 = arith.constant 0.000000e+00 : f32
    %519 = vector.broadcast %cst_94 : f32 to vector<16x32xf32>
    %520 = arith.maximumf %518, %519 : vector<16x32xf32>
    %cst_95 = arith.constant dense<0.000000e+00> : vector<16x2xf32>
    %521 = tpu.matmul %520, %8, %cst_95 {dimension_numbers = #tpu.dot_dimension_numbers<[1], [0], [0], [1], [0, 0, 1, 1], [], []>} : vector<16x32xf32>, vector<32x2xf32>, vector<16x2xf32> -> vector<16x2xf32>
    %522 = vector.broadcast %9 : vector<1x2xf32> to vector<16x2xf32>
    %523 = arith.addf %521, %522 : vector<16x2xf32>
    %524 = math.tanh %523 : vector<16x2xf32>
    %525 = vector.broadcast %10 : vector<1x2xf32> to vector<16x2xf32>
    %526 = arith.mulf %524, %525 : vector<16x2xf32>
    %c0_96 = arith.constant 0 : index
    %c0_97 = arith.constant 0 : index
    %527 = vector.load %arg5[%c0_96, %c0_97] : memref<16x2xf32, #tpu.memory_space<vmem>>, vector<16x2xf32>
    tpu.vector_store %arg5[%c0_96, %c0_97], %526 {strides = array<i32>} : memref<16x2xf32, #tpu.memory_space<vmem>>, vector<16x2xf32>,
    return
  }
}

</mosaic_0001>

<llo_original>
// kernel: lstm_model_forward.1
$region0: #{lstm_model_forward.1}
  #allocation0 [shape = 'u32[]', space=smem, size = 0x4, offset = 0x4, fixed_abs, tag = 'smem constant byte address 0x4 - core index']
  #allocation1 [shape = 'u32[144,128]{1,0:T(1,128)}', space=vmem, size = 0x12000, scoped, tag = 'internal scratch']
  %s0 = inlined_call_operand.vmem [shape: f32[16,4], index: 0, kind: input, shape index: {}]
  %s1 = inlined_call_operand.vmem [shape: f32[104,128], index: 1, kind: input, shape index: {}]
  %s2 = inlined_call_operand.vmem [shape: f32[2,128], index: 2, kind: input, shape index: {}]
  %s3 = inlined_call_operand.vmem [shape: f32[33,32], index: 3, kind: input, shape index: {}]
  %s4 = inlined_call_operand.vmem [shape: f32[34,2], index: 4, kind: input, shape index: {}]
  %s5 = inlined_call_operand.vmem [shape: f32[16,2], index: 5, kind: output, shape index: {}]
  %s6 = sld [smem:[#allocation0]]
  $region30: #{lstm_model_forward.1} parent=0
    _
  %s8 = ssub.s32 1, %s6
  %s9 = scalar_select 0, %s8, %s6
  // Predicated region
  $region2: #{lstm_model_forward.1} parent=0 // pred_check
    _
  $region3: #{lstm_model_forward.1} parent=0 // pred_check_branch
    %11 = sbr.rel (0) target = $region5
  $region4: #{lstm_model_forward.1} parent=0 // pred_region
    _
  $region5: #{lstm_model_forward.1} parent=0 // pred_fallthru
    _
  // Predicated region
  $region6: #{lstm_model_forward.1} parent=0 // pred_check
    _
  $region7: #{lstm_model_forward.1} parent=0 // pred_check_branch
    %13 = sbr.rel (0) target = $region9
  $region8: #{lstm_model_forward.1} parent=0 // pred_region
    _
  $region9: #{lstm_model_forward.1} parent=0 // pred_fallthru
    _
  // Predicated region
  $region10: #{lstm_model_forward.1} parent=0 // pred_check
    _
  $region11: #{lstm_model_forward.1} parent=0 // pred_check_branch
    %15 = sbr.rel (0) target = $region13
  $region12: #{lstm_model_forward.1} parent=0 // pred_region
    _
  $region13: #{lstm_model_forward.1} parent=0 // pred_fallthru
    _
  // Predicated region
  $region14: #{lstm_model_forward.1} parent=0 // pred_check
    _
  $region15: #{lstm_model_forward.1} parent=0 // pred_check_branch
    %17 = sbr.rel (0) target = $region17
  $region16: #{lstm_model_forward.1} parent=0 // pred_region
    _
  $region17: #{lstm_model_forward.1} parent=0 // pred_fallthru
    _
  // Predicated region
  $region18: #{lstm_model_forward.1} parent=0 // pred_check
    _
  $region19: #{lstm_model_forward.1} parent=0 // pred_check_branch
    %19 = sbr.rel (0) target = $region21
  $region20: #{lstm_model_forward.1} parent=0 // pred_region
    _
  $region21: #{lstm_model_forward.1} parent=0 // pred_fallthru
    _
  %v20 = vld [vmem:[%s1] sm:$0xf]
  %v21 = vld [vmem:[%s1 + $0x8] sm:$0xff]
  %v22 = vld [vmem:[%s1 + $0x10] sm:$0xff]
  %v23 = vld [vmem:[%s1 + $0x18] sm:$0xff]
  %v24 = vld [vmem:[%s1 + $0x20] sm:$0xff]
  %v25 = vld [vmem:[%s1 + $0x28] sm:$0xff]
  %v26 = vld [vmem:[%s1 + $0x30] sm:$0xff]
  %v27 = vld [vmem:[%s1 + $0x38] sm:$0xff]
  %v28 = vld [vmem:[%s1 + $0x40] sm:$0xff]
  %v29 = vld [vmem:[%s1 + $0x48] sm:$0xff]
  %v30 = vld [vmem:[%s1 + $0x50] sm:$0xff]
  %v31 = vld [vmem:[%s1 + $0x58] sm:$0xff]
  %v32 = vld [vmem:[%s1 + $0x60] sm:$0xff]
  %v33 = vld [vmem:[%s2] sm:$0x1]
  %v34 = vld [vmem:[%s2 + $0x1] sm:$0x1]
  %v35 = vld [vmem:[%s3] sm:$0xff]
  %v36 = vld [vmem:[%s3 + $0x8] sm:$0xff]
  %v37 = vld [vmem:[%s3 + $0x10] sm:$0xff]
  %v38 = vld [vmem:[%s3 + $0x18] sm:$0xff]
  %v39 = vld [vmem:[%s3 + $0x20] sm:$0x1]
  %v40 = vld [vmem:[%s4] sm:$0xff]
  %v41 = vld [vmem:[%s4 + $0x8] sm:$0xff]
  %v42 = vld [vmem:[%s4 + $0x10] sm:$0xff]
  %v43 = vld [vmem:[%s4 + $0x18] sm:$0xff]
  %v44 = vld [vmem:[%s4 + $0x20] sm:$0x1]
  %v45 = vld [vmem:[%s4 + $0x21] sm:$0x1]
  %v46 = vld [vmem:[%s0] sm:$0xff]
  %v47 = vld [vmem:[%s0 + $0x8] sm:$0xff]
  %v48 = vlaneseq
  %v49 = vshrl.u32 %v48, 7
  %v50 = vsub.s32 0, %v49
  %v51 = vrot.slane %v33, %v50
  %vm52 = vcmask 31744
  %v54 = vsel %vm52, %v46, 0
  %v57 = vsel %vm52, %v47, 0
  %vm59 = vcmask 1043456
  %v61 = vsel %vm59, %v20, 0
  %63 = vmatprep.subr.mxu0 0.0
  %64 = vmatpush1.msra.mxu0 0.0
  %65 = vmatprep.subr.mxu0 0.0
  %66 = vmatpush1.msra.mxu0 0.0
  %67 = vmatprep.subr.mxu0 0.0
  %68 = vmatpush1.msra.mxu0 0.0
  %69 = vmatprep.subr.mxu0 0.0
  %70 = vmatpush1.msra.mxu0 0.0
  %71 = vmatprep.subr.mxu0 0.0
  %72 = vmatpush1.msra.mxu0 0.0
  %73 = vmatprep.subr.mxu0 0.0
  %74 = vmatpush1.msra.mxu0 0.0
  %75 = vmatprep.subr.mxu0 0.0
  %76 = vmatpush1.msra.mxu0 0.0
  %77 = vmatprep.subr.mxu0 0.0
  %78 = vmatpush1.msra.mxu0 0.0
  %79 = vmatprep.subr.mxu0 0.0
  %80 = vmatpush1.msra.mxu0 0.0
  %81 = vmatprep.subr.mxu0 0.0
  %82 = vmatpush1.msra.mxu0 0.0
  %83 = vmatprep.subr.mxu0 0.0
  %84 = vmatpush1.msra.mxu0 0.0
  %85 = vmatprep.subr.mxu0 0.0
  %86 = vmatpush1.msra.mxu0 0.0
  %87 = vmatprep.subr.mxu0 0.0
  %88 = vmatpush1.msra.mxu0 0.0
  %89 = vmatprep.subr.mxu0 0.0
  %90 = vmatpush1.msra.mxu0 0.0
  %91 = vmatprep.subr.mxu0 0.0
  %92 = vmatpush1.msra.mxu0 0.0
  %93 = vmatprep.subr.mxu0 0.0
  %94 = vmatpush1.msra.mxu0 %v61
  %95 = vmatprep.subr.mxu0 0.0
  %96 = vmatpush2.msra.mxu0 0.0
  %97 = vmatprep.subr.mxu0 0.0
  %98 = vmatpush2.msra.mxu0 0.0
  %99 = vmatprep.subr.mxu0 0.0
  %100 = vmatpush2.msra.mxu0 0.0
  %101 = vmatprep.subr.mxu0 0.0
  %102 = vmatpush2.msra.mxu0 0.0
  %103 = vmatprep.subr.mxu0 0.0
  %104 = vmatpush2.msra.mxu0 0.0
  %105 = vmatprep.subr.mxu0 0.0
  %106 = vmatpush2.msra.mxu0 0.0
  %107 = vmatprep.subr.mxu0 0.0
  %108 = vmatpush2.msra.mxu0 0.0
  %109 = vmatprep.subr.mxu0 0.0
  %110 = vmatpush2.msra.mxu0 0.0
  %111 = vmatprep.subr.mxu0 0.0
  %112 = vmatpush2.msra.mxu0 0.0
  %113 = vmatprep.subr.mxu0 0.0
  %114 = vmatpush2.msra.mxu0 0.0
  %115 = vmatprep.subr.mxu0 0.0
  %116 = vmatpush2.msra.mxu0 0.0
  %117 = vmatprep.subr.mxu0 0.0
  %118 = vmatpush2.msra.mxu0 0.0
  %119 = vmatprep.subr.mxu0 0.0
  %120 = vmatpush2.msra.mxu0 0.0
  %121 = vmatprep.subr.mxu0 0.0
  %122 = vmatpush2.msra.mxu0 0.0
  %123 = vmatprep.subr.mxu0 0.0
  %124 = vmatpush2.msra.mxu0 0.0
  %125 = vmatprep.subr.mxu0 0.0
  %126 = vmatpush2.msra.mxu0 0.0
  %127 = vmatprep.mubr.f32.mxu0 0.0
  %128 = vmatmul.mubr.f32.gmra.mxu0 %v54
  %v129 = vpop.f32.mrf.mxu0
  %v130 = vadd.f32 %v51, %v129
  %v131 = vpop.f32.mrf.mxu0
  %132 = vmatprep.mubr.f32.mxu0 0.0
  %133 = vmatmul.mubr.f32.gmra.mxu0 %v57
  %v134 = vpop.f32.mrf.mxu0
  %v135 = vadd.f32 %v51, %v134
  %v136 = vpop.f32.mrf.mxu0
  %137 = vdwg.mxu0
  %v139 = vrot.slane %v135, 7
  %vm141 = vcmask 1040384
  %v142 = vsel %vm141, %v130, %v139
  %vm143 = vcmask 261120
  %v145 = vsel %vm143, 0.0, 0
  %147 = vmatprep.subr.mxu0 0.0
  %148 = vmatpush1.msra.mxu0 0.0
  %149 = vmatprep.subr.mxu0 0.0
  %150 = vmatpush1.msra.mxu0 0.0
  %151 = vmatprep.subr.mxu0 0.0
  %152 = vmatpush1.msra.mxu0 0.0
  %153 = vmatprep.subr.mxu0 0.0
  %154 = vmatpush1.msra.mxu0 0.0
  %155 = vmatprep.subr.mxu0 0.0
  %156 = vmatpush1.msra.mxu0 0.0
  %157 = vmatprep.subr.mxu0 0.0
  %158 = vmatpush1.msra.mxu0 0.0
  %159 = vmatprep.subr.mxu0 0.0
  %160 = vmatpush1.msra.mxu0 0.0
  %161 = vmatprep.subr.mxu0 0.0
  %162 = vmatpush1.msra.mxu0 0.0
  %163 = vmatprep.subr.mxu0 0.0
  %164 = vmatpush1.msra.mxu0 0.0
  %165 = vmatprep.subr.mxu0 0.0
  %166 = vmatpush1.msra.mxu0 0.0
  %167 = vmatprep.subr.mxu0 0.0
  %168 = vmatpush1.msra.mxu0 0.0
  %169 = vmatprep.subr.mxu0 0.0
  %170 = vmatpush1.msra.mxu0 0.0
  %171 = vmatprep.subr.mxu0 0.0
  %172 = vmatpush1.msra.mxu0 %v24
  %173 = vmatprep.subr.mxu0 0.0
  %174 = vmatpush1.msra.mxu0 %v23
  %175 = vmatprep.subr.mxu0 0.0
  %176 = vmatpush1.msra.mxu0 %v22
  %177 = vmatprep.subr.mxu0 0.0
  %178 = vmatpush1.msra.mxu0 %v21
  %179 = vmatprep.subr.mxu0 0.0
  %180 = vmatpush2.msra.mxu0 0.0
  %181 = vmatprep.subr.mxu0 0.0
  %182 = vmatpush2.msra.mxu0 0.0
  %183 = vmatprep.subr.mxu0 0.0
  %184 = vmatpush2.msra.mxu0 0.0
  %185 = vmatprep.subr.mxu0 0.0
  %186 = vmatpush2.msra.mxu0 0.0
  %187 = vmatprep.subr.mxu0 0.0
  %188 = vmatpush2.msra.mxu0 0.0
  %189 = vmatprep.subr.mxu0 0.0
  %190 = vmatpush2.msra.mxu0 0.0
  %191 = vmatprep.subr.mxu0 0.0
  %192 = vmatpush2.msra.mxu0 0.0
  %193 = vmatprep.subr.mxu0 0.0
  %194 = vmatpush2.msra.mxu0 0.0
  %195 = vmatprep.subr.mxu0 0.0
  %196 = vmatpush2.msra.mxu0 0.0
  %197 = vmatprep.subr.mxu0 0.0
  %198 = vmatpush2.msra.mxu0 0.0
  %199 = vmatprep.subr.mxu0 0.0
  %200 = vmatpush2.msra.mxu0 0.0
  %201 = vmatprep.subr.mxu0 0.0
  %202 = vmatpush2.msra.mxu0 0.0
  %203 = vmatprep.subr.mxu0 0.0
  %204 = vmatpush2.msra.mxu0 0.0
  %205 = vmatprep.subr.mxu0 0.0
  %206 = vmatpush2.msra.mxu0 0.0
  %207 = vmatprep.subr.mxu0 0.0
  %208 = vmatpush2.msra.mxu0 0.0
  %209 = vmatprep.subr.mxu0 0.0
  %210 = vmatpush2.msra.mxu0 0.0
  %211 = vmatprep.mubr.f32.mxu0 0.0
  %212 = vmatmul.mubr.f32.gmra.mxu0 %v145
  %v213 = vpop.f32.mrf.mxu0
  %v214 = vadd.f32 0.0, %v213
  %v215 = vpop.f32.mrf.mxu0
  %216 = vdwg.mxu0
  %v217 = vadd.f32 %v142, %v214
  %v218 = vxor.u32 %v217, 2147483648
  %v219 = vmul.f32 %v218, 1.442695
  %v220 = vpow.pop %v219
  %v221 = vadd.f32 %v220, 1.0
  %v222 = vrcp.pop %v221
  %v223 = vmul.f32 1.0, %v222
  %v224 = vtanh.pop %v217
  %v225 = vmul.f32 %v223, 0.0
  %227 = vrot.lane.b32.xlu0 %v224, 64
  %v228 = vpop.permute.xlu0 %227
  %v230 = vmul.f32 %v223, %v228
  %232 = vrot.lane.b32.xlu0 %v230, 32
  %v233 = vpop.permute.xlu0 %232
  %v235 = vadd.f32 %v225, %v233
  %v236 = vtanh.pop %v235
  %238 = vrot.lane.b32.xlu0 %v236, 64
  %v239 = vpop.permute.xlu0 %238
  %v241 = vmul.f32 %v223, %v239
  %242 = vmatprep.subr.mxu0 0.0
  %243 = vmatpush1.msra.mxu0 0.0
  %244 = vmatprep.subr.mxu0 0.0
  %245 = vmatpush1.msra.mxu0 0.0
  %246 = vmatprep.subr.mxu0 0.0
  %247 = vmatpush1.msra.mxu0 0.0
  %248 = vmatprep.subr.mxu0 0.0
  %249 = vmatpush1.msra.mxu0 0.0
  %250 = vmatprep.subr.mxu0 0.0
  %251 = vmatpush1.msra.mxu0 0.0
  %252 = vmatprep.subr.mxu0 0.0
  %253 = vmatpush1.msra.mxu0 0.0
  %254 = vmatprep.subr.mxu0 0.0
  %255 = vmatpush1.msra.mxu0 0.0
  %256 = vmatprep.subr.mxu0 0.0
  %257 = vmatpush1.msra.mxu0 0.0
  %258 = vmatprep.subr.mxu0 0.0
  %259 = vmatpush1.msra.mxu0 0.0
  %260 = vmatprep.subr.mxu0 0.0
  %261 = vmatpush1.msra.mxu0 0.0
  %262 = vmatprep.subr.mxu0 0.0
  %263 = vmatpush1.msra.mxu0 0.0
  %264 = vmatprep.subr.mxu0 0.0
  %265 = vmatpush1.msra.mxu0 0.0
  %266 = vmatprep.subr.mxu0 0.0
  %267 = vmatpush1.msra.mxu0 %v32
  %268 = vmatprep.subr.mxu0 0.0
  %269 = vmatpush1.msra.mxu0 %v31
  %270 = vmatprep.subr.mxu0 0.0
  %271 = vmatpush1.msra.mxu0 %v30
  %272 = vmatprep.subr.mxu0 0.0
  %273 = vmatpush1.msra.mxu0 %v29
  %274 = vmatprep.subr.mxu0 0.0
  %275 = vmatpush2.msra.mxu0 0.0
  %276 = vmatprep.subr.mxu0 0.0
  %277 = vmatpush2.msra.mxu0 0.0
  %278 = vmatprep.subr.mxu0 0.0
  %279 = vmatpush2.msra.mxu0 0.0
  %280 = vmatprep.subr.mxu0 0.0
  %281 = vmatpush2.msra.mxu0 0.0
  %282 = vmatprep.subr.mxu0 0.0
  %283 = vmatpush2.msra.mxu0 0.0
  %284 = vmatprep.subr.mxu0 0.0
  %285 = vmatpush2.msra.mxu0 0.0
  %286 = vmatprep.subr.mxu0 0.0
  %287 = vmatpush2.msra.mxu0 0.0
  %288 = vmatprep.subr.mxu0 0.0
  %289 = vmatpush2.msra.mxu0 0.0
  %290 = vmatprep.subr.mxu0 0.0
  %291 = vmatpush2.msra.mxu0 0.0
  %292 = vmatprep.subr.mxu0 0.0
  %293 = vmatpush2.msra.mxu0 0.0
  %294 = vmatprep.subr.mxu0 0.0
  %295 = vmatpush2.msra.mxu0 0.0
  %296 = vmatprep.subr.mxu0 0.0
  %297 = vmatpush2.msra.mxu0 0.0
  %298 = vmatprep.subr.mxu0 0.0
  %299 = vmatpush2.msra.mxu0 0.0
  %300 = vmatprep.subr.mxu0 0.0
  %301 = vmatpush2.msra.mxu0 0.0
  %302 = vmatprep.subr.mxu0 0.0
  %303 = vmatpush2.msra.mxu0 0.0
  %304 = vmatprep.subr.mxu0 0.0
  %305 = vmatpush2.msra.mxu0 0.0
  %306 = vmatprep.mubr.f32.mxu0 0.0
  %307 = vmatmul.mubr.f32.gmra.mxu0 %v145
  %v308 = vpop.f32.mrf.mxu0
  %v309 = vadd.f32 0.0, %v308
  %v310 = vpop.f32.mrf.mxu0
  %311 = vdwg.mxu0
  %313 = vrot.lane.b32.xlu0 %v241, 32
  %v314 = vpop.permute.xlu0 %313
  %v315 = vsel %vm143, %v314, 0
  %317 = vmatprep.subr.mxu0 0.0
  %318 = vmatpush1.msra.mxu0 0.0
  %319 = vmatprep.subr.mxu0 0.0
  %320 = vmatpush1.msra.mxu0 0.0
  %321 = vmatprep.subr.mxu0 0.0
  %322 = vmatpush1.msra.mxu0 0.0
  %323 = vmatprep.subr.mxu0 0.0
  %324 = vmatpush1.msra.mxu0 0.0
  %325 = vmatprep.subr.mxu0 0.0
  %326 = vmatpush1.msra.mxu0 0.0
  %327 = vmatprep.subr.mxu0 0.0
  %328 = vmatpush1.msra.mxu0 0.0
  %329 = vmatprep.subr.mxu0 0.0
  %330 = vmatpush1.msra.mxu0 0.0
  %331 = vmatprep.subr.mxu0 0.0
  %332 = vmatpush1.msra.mxu0 0.0
  %333 = vmatprep.subr.mxu0 0.0
  %334 = vmatpush1.msra.mxu0 0.0
  %335 = vmatprep.subr.mxu0 0.0
  %336 = vmatpush1.msra.mxu0 0.0
  %337 = vmatprep.subr.mxu0 0.0
  %338 = vmatpush1.msra.mxu0 0.0
  %339 = vmatprep.subr.mxu0 0.0
  %340 = vmatpush1.msra.mxu0 0.0
  %341 = vmatprep.subr.mxu0 0.0
  %342 = vmatpush1.msra.mxu0 %v28
  %343 = vmatprep.subr.mxu0 0.0
  %344 = vmatpush1.msra.mxu0 %v27
  %345 = vmatprep.subr.mxu0 0.0
  %346 = vmatpush1.msra.mxu0 %v26
  %347 = vmatprep.subr.mxu0 0.0
  %348 = vmatpush1.msra.mxu0 %v25
  %349 = vmatprep.subr.mxu0 0.0
  %350 = vmatpush2.msra.mxu0 0.0
  %351 = vmatprep.subr.mxu0 0.0
  %352 = vmatpush2.msra.mxu0 0.0
  %353 = vmatprep.subr.mxu0 0.0
  %354 = vmatpush2.msra.mxu0 0.0
  %355 = vmatprep.subr.mxu0 0.0
  %356 = vmatpush2.msra.mxu0 0.0
  %357 = vmatprep.subr.mxu0 0.0
  %358 = vmatpush2.msra.mxu0 0.0
  %359 = vmatprep.subr.mxu0 0.0
  %360 = vmatpush2.msra.mxu0 0.0
  %361 = vmatprep.subr.mxu0 0.0
  %362 = vmatpush2.msra.mxu0 0.0
  %363 = vmatprep.subr.mxu0 0.0
  %364 = vmatpush2.msra.mxu0 0.0
  %365 = vmatprep.subr.mxu0 0.0
  %366 = vmatpush2.msra.mxu0 0.0
  %367 = vmatprep.subr.mxu0 0.0
  %368 = vmatpush2.msra.mxu0 0.0
  %369 = vmatprep.subr.mxu0 0.0
  %370 = vmatpush2.msra.mxu0 0.0
  %371 = vmatprep.subr.mxu0 0.0
  %372 = vmatpush2.msra.mxu0 0.0
  %373 = vmatprep.subr.mxu0 0.0
  %374 = vmatpush2.msra.mxu0 0.0
  %375 = vmatprep.subr.mxu0 0.0
  %376 = vmatpush2.msra.mxu0 0.0
  %377 = vmatprep.subr.mxu0 0.0
  %378 = vmatpush2.msra.mxu0 0.0
  %379 = vmatprep.subr.mxu0 0.0
  %380 = vmatpush2.msra.mxu0 0.0
  %381 = vmatprep.mubr.f32.mxu0 0.0
  %382 = vmatmul.mubr.f32.gmra.mxu0 %v315
  %v383 = vpop.f32.mrf.mxu0
  %v384 = vadd.f32 %v309, %v383
  %v385 = vpop.f32.mrf.mxu0
  %386 = vdwg.mxu0
  %v387 = vlaneseq
  %v388 = vshrl.u32 %v387, 7
  %v389 = vsub.s32 0, %v388
  %v390 = vrot.slane %v34, %v389
  %v391 = vadd.f32 %v384, %v390
  %v392 = vxor.u32 %v391, 2147483648
  %v393 = vmul.f32 %v392, 1.442695
  %v394 = vpow.pop %v393
  %v395 = vadd.f32 %v394, 1.0
  %v396 = vrcp.pop %v395
  %v397 = vmul.f32 1.0, %v396
  %v398 = vtanh.pop %v391
  %v399 = vmul.f32 %v397, 0.0
  %401 = vrot.lane.b32.xlu0 %v398, 64
  %v402 = vpop.permute.xlu0 %401
  %v404 = vmul.f32 %v397, %v402
  %406 = vrot.lane.b32.xlu0 %v404, 32
  %v407 = vpop.permute.xlu0 %406
  %v409 = vadd.f32 %v399, %v407
  %v410 = vtanh.pop %v409
  %412 = vrot.lane.b32.xlu0 %v410, 64
  %v413 = vpop.permute.xlu0 %412
  %v415 = vmul.f32 %v397, %v413
  %v417 = vrot.slane %v130, 1
  %v419 = vsel %vm141, %v417, %v135
  %420 = vmatprep.subr.mxu0 0.0
  %421 = vmatpush1.msra.mxu0 0.0
  %422 = vmatprep.subr.mxu0 0.0
  %423 = vmatpush1.msra.mxu0 0.0
  %424 = vmatprep.subr.mxu0 0.0
  %425 = vmatpush1.msra.mxu0 0.0
  %426 = vmatprep.subr.mxu0 0.0
  %427 = vmatpush1.msra.mxu0 0.0
  %428 = vmatprep.subr.mxu0 0.0
  %429 = vmatpush1.msra.mxu0 0.0
  %430 = vmatprep.subr.mxu0 0.0
  %431 = vmatpush1.msra.mxu0 0.0
  %432 = vmatprep.subr.mxu0 0.0
  %433 = vmatpush1.msra.mxu0 0.0
  %434 = vmatprep.subr.mxu0 0.0
  %435 = vmatpush1.msra.mxu0 0.0
  %436 = vmatprep.subr.mxu0 0.0
  %437 = vmatpush1.msra.mxu0 0.0
  %438 = vmatprep.subr.mxu0 0.0
  %439 = vmatpush1.msra.mxu0 0.0
  %440 = vmatprep.subr.mxu0 0.0
  %441 = vmatpush1.msra.mxu0 0.0
  %442 = vmatprep.subr.mxu0 0.0
  %443 = vmatpush1.msra.mxu0 0.0
  %444 = vmatprep.subr.mxu0 0.0
  %445 = vmatpush1.msra.mxu0 %v24
  %446 = vmatprep.subr.mxu0 0.0
  %447 = vmatpush1.msra.mxu0 %v23
  %448 = vmatprep.subr.mxu0 0.0
  %449 = vmatpush1.msra.mxu0 %v22
  %450 = vmatprep.subr.mxu0 0.0
  %451 = vmatpush1.msra.mxu0 %v21
  %452 = vmatprep.subr.mxu0 0.0
  %453 = vmatpush2.msra.mxu0 0.0
  %454 = vmatprep.subr.mxu0 0.0
  %455 = vmatpush2.msra.mxu0 0.0
  %456 = vmatprep.subr.mxu0 0.0
  %457 = vmatpush2.msra.mxu0 0.0
  %458 = vmatprep.subr.mxu0 0.0
  %459 = vmatpush2.msra.mxu0 0.0
  %460 = vmatprep.subr.mxu0 0.0
  %461 = vmatpush2.msra.mxu0 0.0
  %462 = vmatprep.subr.mxu0 0.0
  %463 = vmatpush2.msra.mxu0 0.0
  %464 = vmatprep.subr.mxu0 0.0
  %465 = vmatpush2.msra.mxu0 0.0
  %466 = vmatprep.subr.mxu0 0.0
  %467 = vmatpush2.msra.mxu0 0.0
  %468 = vmatprep.subr.mxu0 0.0
  %469 = vmatpush2.msra.mxu0 0.0
  %470 = vmatprep.subr.mxu0 0.0
  %471 = vmatpush2.msra.mxu0 0.0
  %472 = vmatprep.subr.mxu0 0.0
  %473 = vmatpush2.msra.mxu0 0.0
  %474 = vmatprep.subr.mxu0 0.0
  %475 = vmatpush2.msra.mxu0 0.0
  %476 = vmatprep.subr.mxu0 0.0
  %477 = vmatpush2.msra.mxu0 0.0
  %478 = vmatprep.subr.mxu0 0.0
  %479 = vmatpush2.msra.mxu0 0.0
  %480 = vmatprep.subr.mxu0 0.0
  %481 = vmatpush2.msra.mxu0 0.0
  %482 = vmatprep.subr.mxu0 0.0
  %483 = vmatpush2.msra.mxu0 0.0
  %484 = vmatprep.mubr.f32.mxu0 0.0
  %485 = vmatmul.mubr.f32.gmra.mxu0 %v315
  %v486 = vpop.f32.mrf.mxu0
  %v487 = vadd.f32 0.0, %v486
  %v488 = vpop.f32.mrf.mxu0
  %489 = vdwg.mxu0
  %v490 = vadd.f32 %v419, %v487
  %v491 = vxor.u32 %v490, 2147483648
  %v492 = vmul.f32 %v491, 1.442695
  %v493 = vpow.pop %v492
  %v494 = vadd.f32 %v493, 1.0
  %v495 = vrcp.pop %v494
  %v496 = vmul.f32 1.0, %v495
  %v497 = vtanh.pop %v490
  %v498 = vmul.f32 %v496, %v235
  %500 = vrot.lane.b32.xlu0 %v497, 64
  %v501 = vpop.permute.xlu0 %500
  %v503 = vmul.f32 %v496, %v501
  %505 = vrot.lane.b32.xlu0 %v503, 32
  %v506 = vpop.permute.xlu0 %505
  %v508 = vadd.f32 %v498, %v506
  %v509 = vtanh.pop %v508
  %511 = vrot.lane.b32.xlu0 %v509, 64
  %v512 = vpop.permute.xlu0 %511
  %v514 = vmul.f32 %v496, %v512
  %516 = vrot.lane.b32.xlu0 %v415, 32
  %v517 = vpop.permute.xlu0 %516
  %v518 = vsel %vm143, %v517, 0
  %520 = vmatprep.subr.mxu0 0.0
  %521 = vmatpush1.msra.mxu0 0.0
  %522 = vmatprep.subr.mxu0 0.0
  %523 = vmatpush1.msra.mxu0 0.0
  %524 = vmatprep.subr.mxu0 0.0
  %525 = vmatpush1.msra.mxu0 0.0
  %526 = vmatprep.subr.mxu0 0.0
  %527 = vmatpush1.msra.mxu0 0.0
  %528 = vmatprep.subr.mxu0 0.0
  %529 = vmatpush1.msra.mxu0 0.0
  %530 = vmatprep.subr.mxu0 0.0
  %531 = vmatpush1.msra.mxu0 0.0
  %532 = vmatprep.subr.mxu0 0.0
  %533 = vmatpush1.msra.mxu0 0.0
  %534 = vmatprep.subr.mxu0 0.0
  %535 = vmatpush1.msra.mxu0 0.0
  %536 = vmatprep.subr.mxu0 0.0
  %537 = vmatpush1.msra.mxu0 0.0
  %538 = vmatprep.subr.mxu0 0.0
  %539 = vmatpush1.msra.mxu0 0.0
  %540 = vmatprep.subr.mxu0 0.0
  %541 = vmatpush1.msra.mxu0 0.0
  %542 = vmatprep.subr.mxu0 0.0
  %543 = vmatpush1.msra.mxu0 0.0
  %544 = vmatprep.subr.mxu0 0.0
  %545 = vmatpush1.msra.mxu0 %v32
  %546 = vmatprep.subr.mxu0 0.0
  %547 = vmatpush1.msra.mxu0 %v31
  %548 = vmatprep.subr.mxu0 0.0
  %549 = vmatpush1.msra.mxu0 %v30
  %550 = vmatprep.subr.mxu0 0.0
  %551 = vmatpush1.msra.mxu0 %v29
  %552 = vmatprep.subr.mxu0 0.0
  %553 = vmatpush2.msra.mxu0 0.0
  %554 = vmatprep.subr.mxu0 0.0
  %555 = vmatpush2.msra.mxu0 0.0
  %556 = vmatprep.subr.mxu0 0.0
  %557 = vmatpush2.msra.mxu0 0.0
  %558 = vmatprep.subr.mxu0 0.0
  %559 = vmatpush2.msra.mxu0 0.0
  %560 = vmatprep.subr.mxu0 0.0
  %561 = vmatpush2.msra.mxu0 0.0
  %562 = vmatprep.subr.mxu0 0.0
  %563 = vmatpush2.msra.mxu0 0.0
  %564 = vmatprep.subr.mxu0 0.0
  %565 = vmatpush2.msra.mxu0 0.0
  %566 = vmatprep.subr.mxu0 0.0
  %567 = vmatpush2.msra.mxu0 0.0
  %568 = vmatprep.subr.mxu0 0.0
  %569 = vmatpush2.msra.mxu0 0.0
  %570 = vmatprep.subr.mxu0 0.0
  %571 = vmatpush2.msra.mxu0 0.0
  %572 = vmatprep.subr.mxu0 0.0
  %573 = vmatpush2.msra.mxu0 0.0
  %574 = vmatprep.subr.mxu0 0.0
  %575 = vmatpush2.msra.mxu0 0.0
  %576 = vmatprep.subr.mxu0 0.0
  %577 = vmatpush2.msra.mxu0 0.0
  %578 = vmatprep.subr.mxu0 0.0
  %579 = vmatpush2.msra.mxu0 0.0
  %580 = vmatprep.subr.mxu0 0.0
  %581 = vmatpush2.msra.mxu0 0.0
  %582 = vmatprep.subr.mxu0 0.0
  %583 = vmatpush2.msra.mxu0 0.0
  %584 = vmatprep.mubr.f32.mxu0 0.0
  %585 = vmatmul.mubr.f32.gmra.mxu0 %v518
  %v586 = vpop.f32.mrf.mxu0
  %v587 = vadd.f32 0.0, %v586
  %v588 = vpop.f32.mrf.mxu0
  %589 = vdwg.mxu0
  %591 = vrot.lane.b32.xlu0 %v514, 32
  %v592 = vpop.permute.xlu0 %591
  %v593 = vsel %vm143, %v592, 0
  %595 = vmatprep.subr.mxu0 0.0
  %596 = vmatpush1.msra.mxu0 0.0
  %597 = vmatprep.subr.mxu0 0.0
  %598 = vmatpush1.msra.mxu0 0.0
  %599 = vmatprep.subr.mxu0 0.0
  %600 = vmatpush1.msra.mxu0 0.0
  %601 = vmatprep.subr.mxu0 0.0
  %602 = vmatpush1.msra.mxu0 0.0
  %603 = vmatprep.subr.mxu0 0.0
  %604 = vmatpush1.msra.mxu0 0.0
  %605 = vmatprep.subr.mxu0 0.0
  %606 = vmatpush1.msra.mxu0 0.0
  %607 = vmatprep.subr.mxu0 0.0
  %608 = vmatpush1.msra.mxu0 0.0
  %609 = vmatprep.subr.mxu0 0.0
  %610 = vmatpush1.msra.mxu0 0.0
  %611 = vmatprep.subr.mxu0 0.0
  %612 = vmatpush1.msra.mxu0 0.0
  %613 = vmatprep.subr.mxu0 0.0
  %614 = vmatpush1.msra.mxu0 0.0
  %615 = vmatprep.subr.mxu0 0.0
  %616 = vmatpush1.msra.mxu0 0.0
  %617 = vmatprep.subr.mxu0 0.0
  %618 = vmatpush1.msra.mxu0 0.0
  %619 = vmatprep.subr.mxu0 0.0
  %620 = vmatpush1.msra.mxu0 %v28
  %621 = vmatprep.subr.mxu0 0.0
  %622 = vmatpush1.msra.mxu0 %v27
  %623 = vmatprep.subr.mxu0 0.0
  %624 = vmatpush1.msra.mxu0 %v26
  %625 = vmatprep.subr.mxu0 0.0
  %626 = vmatpush1.msra.mxu0 %v25
  %627 = vmatprep.subr.mxu0 0.0
  %628 = vmatpush2.msra.mxu0 0.0
  %629 = vmatprep.subr.mxu0 0.0
  %630 = vmatpush2.msra.mxu0 0.0
  %631 = vmatprep.subr.mxu0 0.0
  %632 = vmatpush2.msra.mxu0 0.0
  %633 = vmatprep.subr.mxu0 0.0
  %634 = vmatpush2.msra.mxu0 0.0
  %635 = vmatprep.subr.mxu0 0.0
  %636 = vmatpush2.msra.mxu0 0.0
  %637 = vmatprep.subr.mxu0 0.0
  %638 = vmatpush2.msra.mxu0 0.0
  %639 = vmatprep.subr.mxu0 0.0
  %640 = vmatpush2.msra.mxu0 0.0
  %641 = vmatprep.subr.mxu0 0.0
  %642 = vmatpush2.msra.mxu0 0.0
  %643 = vmatprep.subr.mxu0 0.0
  %644 = vmatpush2.msra.mxu0 0.0
  %645 = vmatprep.subr.mxu0 0.0
  %646 = vmatpush2.msra.mxu0 0.0
  %647 = vmatprep.subr.mxu0 0.0
  %648 = vmatpush2.msra.mxu0 0.0
  %649 = vmatprep.subr.mxu0 0.0
  %650 = vmatpush2.msra.mxu0 0.0
  %651 = vmatprep.subr.mxu0 0.0
  %652 = vmatpush2.msra.mxu0 0.0
  %653 = vmatprep.subr.mxu0 0.0
  %654 = vmatpush2.msra.mxu0 0.0
  %655 = vmatprep.subr.mxu0 0.0
  %656 = vmatpush2.msra.mxu0 0.0
  %657 = vmatprep.subr.mxu0 0.0
  %658 = vmatpush2.msra.mxu0 0.0
  %659 = vmatprep.mubr.f32.mxu0 0.0
  %660 = vmatmul.mubr.f32.gmra.mxu0 %v593
  %v661 = vpop.f32.mrf.mxu0
  %v662 = vadd.f32 %v587, %v661
  %v663 = vpop.f32.mrf.mxu0
  %664 = vdwg.mxu0
  %v665 = vadd.f32 %v662, %v390
  %v666 = vxor.u32 %v665, 2147483648
  %v667 = vmul.f32 %v666, 1.442695
  %v668 = vpow.pop %v667
  %v669 = vadd.f32 %v668, 1.0
  %v670 = vrcp.pop %v669
  %v671 = vmul.f32 1.0, %v670
  %v672 = vtanh.pop %v665
  %v673 = vmul.f32 %v671, %v409
  %675 = vrot.lane.b32.xlu0 %v672, 64
  %v676 = vpop.permute.xlu0 %675
  %v678 = vmul.f32 %v671, %v676
  %680 = vrot.lane.b32.xlu0 %v678, 32
  %v681 = vpop.permute.xlu0 %680
  %v683 = vadd.f32 %v673, %v681
  %v684 = vtanh.pop %v683
  %686 = vrot.lane.b32.xlu0 %v684, 64
  %v687 = vpop.permute.xlu0 %686
  %v689 = vmul.f32 %v671, %v687
  %v690 = vrot.slane %v130, 2
  %v692 = vrot.slane %v135, 1
  %v694 = vsel %vm141, %v690, %v692
  %695 = vmatprep.subr.mxu0 0.0
  %696 = vmatpush1.msra.mxu0 0.0
  %697 = vmatprep.subr.mxu0 0.0
  %698 = vmatpush1.msra.mxu0 0.0
  %699 = vmatprep.subr.mxu0 0.0
  %700 = vmatpush1.msra.mxu0 0.0
  %701 = vmatprep.subr.mxu0 0.0
  %702 = vmatpush1.msra.mxu0 0.0
  %703 = vmatprep.subr.mxu0 0.0
  %704 = vmatpush1.msra.mxu0 0.0
  %705 = vmatprep.subr.mxu0 0.0
  %706 = vmatpush1.msra.mxu0 0.0
  %707 = vmatprep.subr.mxu0 0.0
  %708 = vmatpush1.msra.mxu0 0.0
  %709 = vmatprep.subr.mxu0 0.0
  %710 = vmatpush1.msra.mxu0 0.0
  %711 = vmatprep.subr.mxu0 0.0
  %712 = vmatpush1.msra.mxu0 0.0
  %713 = vmatprep.subr.mxu0 0.0
  %714 = vmatpush1.msra.mxu0 0.0
  %715 = vmatprep.subr.mxu0 0.0
  %716 = vmatpush1.msra.mxu0 0.0
  %717 = vmatprep.subr.mxu0 0.0
  %718 = vmatpush1.msra.mxu0 0.0
  %719 = vmatprep.subr.mxu0 0.0
  %720 = vmatpush1.msra.mxu0 %v24
  %721 = vmatprep.subr.mxu0 0.0
  %722 = vmatpush1.msra.mxu0 %v23
  %723 = vmatprep.subr.mxu0 0.0
  %724 = vmatpush1.msra.mxu0 %v22
  %725 = vmatprep.subr.mxu0 0.0
  %726 = vmatpush1.msra.mxu0 %v21
  %727 = vmatprep.subr.mxu0 0.0
  %728 = vmatpush2.msra.mxu0 0.0
  %729 = vmatprep.subr.mxu0 0.0
  %730 = vmatpush2.msra.mxu0 0.0
  %731 = vmatprep.subr.mxu0 0.0
  %732 = vmatpush2.msra.mxu0 0.0
  %733 = vmatprep.subr.mxu0 0.0
  %734 = vmatpush2.msra.mxu0 0.0
  %735 = vmatprep.subr.mxu0 0.0
  %736 = vmatpush2.msra.mxu0 0.0
  %737 = vmatprep.subr.mxu0 0.0
  %738 = vmatpush2.msra.mxu0 0.0
  %739 = vmatprep.subr.mxu0 0.0
  %740 = vmatpush2.msra.mxu0 0.0
  %741 = vmatprep.subr.mxu0 0.0
  %742 = vmatpush2.msra.mxu0 0.0
  %743 = vmatprep.subr.mxu0 0.0
  %744 = vmatpush2.msra.mxu0 0.0
  %745 = vmatprep.subr.mxu0 0.0
  %746 = vmatpush2.msra.mxu0 0.0
  %747 = vmatprep.subr.mxu0 0.0
  %748 = vmatpush2.msra.mxu0 0.0
  %749 = vmatprep.subr.mxu0 0.0
  %750 = vmatpush2.msra.mxu0 0.0
  %751 = vmatprep.subr.mxu0 0.0
  %752 = vmatpush2.msra.mxu0 0.0
  %753 = vmatprep.subr.mxu0 0.0
  %754 = vmatpush2.msra.mxu0 0.0
  %755 = vmatprep.subr.mxu0 0.0
  %756 = vmatpush2.msra.mxu0 0.0
  %757 = vmatprep.subr.mxu0 0.0
  %758 = vmatpush2.msra.mxu0 0.0
  %759 = vmatprep.mubr.f32.mxu0 0.0
  %760 = vmatmul.mubr.f32.gmra.mxu0 %v593
  %v761 = vpop.f32.mrf.mxu0
  %v762 = vadd.f32 0.0, %v761
  %v763 = vpop.f32.mrf.mxu0
  %764 = vdwg.mxu0
  %v765 = vadd.f32 %v694, %v762
  %v766 = vxor.u32 %v765, 2147483648
  %v767 = vmul.f32 %v766, 1.442695
  %v768 = vpow.pop %v767
  %v769 = vadd.f32 %v768, 1.0
  %v770 = vrcp.pop %v769
  %v771 = vmul.f32 1.0, %v770
  %v772 = vtanh.pop %v765
  %v773 = vmul.f32 %v771, %v508
  %775 = vrot.lane.b32.xlu0 %v772, 64
  %v776 = vpop.permute.xlu0 %775
  %v778 = vmul.f32 %v771, %v776
  %780 = vrot.lane.b32.xlu0 %v778, 32
  %v781 = vpop.permute.xlu0 %780
  %v783 = vadd.f32 %v773, %v781
  %v784 = vtanh.pop %v783
  %786 = vrot.lane.b32.xlu0 %v784, 64
  %v787 = vpop.permute.xlu0 %786
  %v789 = vmul.f32 %v771, %v787
  %791 = vrot.lane.b32.xlu0 %v689, 32
  %v792 = vpop.permute.xlu0 %791
  %v793 = vsel %vm143, %v792, 0
  %795 = vmatprep.subr.mxu0 0.0
  %796 = vmatpush1.msra.mxu0 0.0
  %797 = vmatprep.subr.mxu0 0.0
  %798 = vmatpush1.msra.mxu0 0.0
  %799 = vmatprep.subr.mxu0 0.0
  %800 = vmatpush1.msra.mxu0 0.0
  %801 = vmatprep.subr.mxu0 0.0
  %802 = vmatpush1.msra.mxu0 0.0
  %803 = vmatprep.subr.mxu0 0.0
  %804 = vmatpush1.msra.mxu0 0.0
  %805 = vmatprep.subr.mxu0 0.0
  %806 = vmatpush1.msra.mxu0 0.0
  %807 = vmatprep.subr.mxu0 0.0
  %808 = vmatpush1.msra.mxu0 0.0
  %809 = vmatprep.subr.mxu0 0.0
  %810 = vmatpush1.msra.mxu0 0.0
  %811 = vmatprep.subr.mxu0 0.0
  %812 = vmatpush1.msra.mxu0 0.0
  %813 = vmatprep.subr.mxu0 0.0
  %814 = vmatpush1.msra.mxu0 0.0
  %815 = vmatprep.subr.mxu0 0.0
  %816 = vmatpush1.msra.mxu0 0.0
  %817 = vmatprep.subr.mxu0 0.0
  %818 = vmatpush1.msra.mxu0 0.0
  %819 = vmatprep.subr.mxu0 0.0
  %820 = vmatpush1.msra.mxu0 %v32
  %821 = vmatprep.subr.mxu0 0.0
  %822 = vmatpush1.msra.mxu0 %v31
  %823 = vmatprep.subr.mxu0 0.0
  %824 = vmatpush1.msra.mxu0 %v30
  %825 = vmatprep.subr.mxu0 0.0
  %826 = vmatpush1.msra.mxu0 %v29
  %827 = vmatprep.subr.mxu0 0.0
  %828 = vmatpush2.msra.mxu0 0.0
  %829 = vmatprep.subr.mxu0 0.0
  %830 = vmatpush2.msra.mxu0 0.0
  %831 = vmatprep.subr.mxu0 0.0
  %832 = vmatpush2.msra.mxu0 0.0
  %833 = vmatprep.subr.mxu0 0.0
  %834 = vmatpush2.msra.mxu0 0.0
  %835 = vmatprep.subr.mxu0 0.0
  %836 = vmatpush2.msra.mxu0 0.0
  %837 = vmatprep.subr.mxu0 0.0
  %838 = vmatpush2.msra.mxu0 0.0
  %839 = vmatprep.subr.mxu0 0.0
  %840 = vmatpush2.msra.mxu0 0.0
  %841 = vmatprep.subr.mxu0 0.0
  %842 = vmatpush2.msra.mxu0 0.0
  %843 = vmatprep.subr.mxu0 0.0
  %844 = vmatpush2.msra.mxu0 0.0
  %845 = vmatprep.subr.mxu0 0.0
  %846 = vmatpush2.msra.mxu0 0.0
  %847 = vmatprep.subr.mxu0 0.0
  %848 = vmatpush2.msra.mxu0 0.0
  %849 = vmatprep.subr.mxu0 0.0
  %850 = vmatpush2.msra.mxu0 0.0
  %851 = vmatprep.subr.mxu0 0.0
  %852 = vmatpush2.msra.mxu0 0.0
  %853 = vmatprep.subr.mxu0 0.0
  %854 = vmatpush2.msra.mxu0 0.0
  %855 = vmatprep.subr.mxu0 0.0
  %856 = vmatpush2.msra.mxu0 0.0
  %857 = vmatprep.subr.mxu0 0.0
  %858 = vmatpush2.msra.mxu0 0.0
  %859 = vmatprep.mubr.f32.mxu0 0.0
  %860 = vmatmul.mubr.f32.gmra.mxu0 %v793
  %v861 = vpop.f32.mrf.mxu0
  %v862 = vadd.f32 0.0, %v861
  %v863 = vpop.f32.mrf.mxu0
  %864 = vdwg.mxu0
  %866 = vrot.lane.b32.xlu0 %v789, 32
  %v867 = vpop.permute.xlu0 %866
  %v868 = vsel %vm143, %v867, 0
  %870 = vmatprep.subr.mxu0 0.0
  %871 = vmatpush1.msra.mxu0 0.0
  %872 = vmatprep.subr.mxu0 0.0
  %873 = vmatpush1.msra.mxu0 0.0
  %874 = vmatprep.subr.mxu0 0.0
  %875 = vmatpush1.msra.mxu0 0.0
  %876 = vmatprep.subr.mxu0 0.0
  %877 = vmatpush1.msra.mxu0 0.0
  %878 = vmatprep.subr.mxu0 0.0
  %879 = vmatpush1.msra.mxu0 0.0
  %880 = vmatprep.subr.mxu0 0.0
  %881 = vmatpush1.msra.mxu0 0.0
  %882 = vmatprep.subr.mxu0 0.0
  %883 = vmatpush1.msra.mxu0 0.0
  %884 = vmatprep.subr.mxu0 0.0
  %885 = vmatpush1.msra.mxu0 0.0
  %886 = vmatprep.subr.mxu0 0.0
  %887 = vmatpush1.msra.mxu0 0.0
  %888 = vmatprep.subr.mxu0 0.0
  %889 = vmatpush1.msra.mxu0 0.0
  %890 = vmatprep.subr.mxu0 0.0
  %891 = vmatpush1.msra.mxu0 0.0
  %892 = vmatprep.subr.mxu0 0.0
  %893 = vmatpush1.msra.mxu0 0.0
  %894 = vmatprep.subr.mxu0 0.0
  %895 = vmatpush1.msra.mxu0 %v28
  %896 = vmatprep.subr.mxu0 0.0
  %897 = vmatpush1.msra.mxu0 %v27
  %898 = vmatprep.subr.mxu0 0.0
  %899 = vmatpush1.msra.mxu0 %v26
  %900 = vmatprep.subr.mxu0 0.0
  %901 = vmatpush1.msra.mxu0 %v25
  %902 = vmatprep.subr.mxu0 0.0
  %903 = vmatpush2.msra.mxu0 0.0
  %904 = vmatprep.subr.mxu0 0.0
  %905 = vmatpush2.msra.mxu0 0.0
  %906 = vmatprep.subr.mxu0 0.0
  %907 = vmatpush2.msra.mxu0 0.0
  %908 = vmatprep.subr.mxu0 0.0
  %909 = vmatpush2.msra.mxu0 0.0
  %910 = vmatprep.subr.mxu0 0.0
  %911 = vmatpush2.msra.mxu0 0.0
  %912 = vmatprep.subr.mxu0 0.0
  %913 = vmatpush2.msra.mxu0 0.0
  %914 = vmatprep.subr.mxu0 0.0
  %915 = vmatpush2.msra.mxu0 0.0
  %916 = vmatprep.subr.mxu0 0.0
  %917 = vmatpush2.msra.mxu0 0.0
  %918 = vmatprep.subr.mxu0 0.0
  %919 = vmatpush2.msra.mxu0 0.0
  %920 = vmatprep.subr.mxu0 0.0
  %921 = vmatpush2.msra.mxu0 0.0
  %922 = vmatprep.subr.mxu0 0.0
  %923 = vmatpush2.msra.mxu0 0.0
  %924 = vmatprep.subr.mxu0 0.0
  %925 = vmatpush2.msra.mxu0 0.0
  %926 = vmatprep.subr.mxu0 0.0
  %927 = vmatpush2.msra.mxu0 0.0
  %928 = vmatprep.subr.mxu0 0.0
  %929 = vmatpush2.msra.mxu0 0.0
  %930 = vmatprep.subr.mxu0 0.0
  %931 = vmatpush2.msra.mxu0 0.0
  %932 = vmatprep.subr.mxu0 0.0
  %933 = vmatpush2.msra.mxu0 0.0
  %934 = vmatprep.mubr.f32.mxu0 0.0
  %935 = vmatmul.mubr.f32.gmra.mxu0 %v868
  %v936 = vpop.f32.mrf.mxu0
  %v937 = vadd.f32 %v862, %v936
  %v938 = vpop.f32.mrf.mxu0
  %939 = vdwg.mxu0
  %v940 = vadd.f32 %v937, %v390
  %v941 = vxor.u32 %v940, 2147483648
  %v942 = vmul.f32 %v941, 1.442695
  %v943 = vpow.pop %v942
  %v944 = vadd.f32 %v943, 1.0
  %v945 = vrcp.pop %v944
  %v946 = vmul.f32 1.0, %v945
  %v947 = vtanh.pop %v940
  %v948 = vmul.f32 %v946, %v683
  %950 = vrot.lane.b32.xlu0 %v947, 64
  %v951 = vpop.permute.xlu0 %950
  %v953 = vmul.f32 %v946, %v951
  %955 = vrot.lane.b32.xlu0 %v953, 32
  %v956 = vpop.permute.xlu0 %955
  %v958 = vadd.f32 %v948, %v956
  %v959 = vtanh.pop %v958
  %961 = vrot.lane.b32.xlu0 %v959, 64
  %v962 = vpop.permute.xlu0 %961
  %v964 = vmul.f32 %v946, %v962
  %v965 = vrot.slane %v130, 3
  %v967 = vrot.slane %v135, 2
  %v969 = vsel %vm141, %v965, %v967
  %970 = vmatprep.subr.mxu0 0.0
  %971 = vmatpush1.msra.mxu0 0.0
  %972 = vmatprep.subr.mxu0 0.0
  %973 = vmatpush1.msra.mxu0 0.0
  %974 = vmatprep.subr.mxu0 0.0
  %975 = vmatpush1.msra.mxu0 0.0
  %976 = vmatprep.subr.mxu0 0.0
  %977 = vmatpush1.msra.mxu0 0.0
  %978 = vmatprep.subr.mxu0 0.0
  %979 = vmatpush1.msra.mxu0 0.0
  %980 = vmatprep.subr.mxu0 0.0
  %981 = vmatpush1.msra.mxu0 0.0
  %982 = vmatprep.subr.mxu0 0.0
  %983 = vmatpush1.msra.mxu0 0.0
  %984 = vmatprep.subr.mxu0 0.0
  %985 = vmatpush1.msra.mxu0 0.0
  %986 = vmatprep.subr.mxu0 0.0
  %987 = vmatpush1.msra.mxu0 0.0
  %988 = vmatprep.subr.mxu0 0.0
  %989 = vmatpush1.msra.mxu0 0.0
  %990 = vmatprep.subr.mxu0 0.0
  %991 = vmatpush1.msra.mxu0 0.0
  %992 = vmatprep.subr.mxu0 0.0
  %993 = vmatpush1.msra.mxu0 0.0
  %994 = vmatprep.subr.mxu0 0.0
  %995 = vmatpush1.msra.mxu0 %v24
  %996 = vmatprep.subr.mxu0 0.0
  %997 = vmatpush1.msra.mxu0 %v23
  %998 = vmatprep.subr.mxu0 0.0
  %999 = vmatpush1.msra.mxu0 %v22
  %1000 = vmatprep.subr.mxu0 0.0
  %1001 = vmatpush1.msra.mxu0 %v21
  %1002 = vmatprep.subr.mxu0 0.0
  %1003 = vmatpush2.msra.mxu0 0.0
  %1004 = vmatprep.subr.mxu0 0.0
  %1005 = vmatpush2.msra.mxu0 0.0
  %1006 = vmatprep.subr.mxu0 0.0
  %1007 = vmatpush2.msra.mxu0 0.0
  %1008 = vmatprep.subr.mxu0 0.0
  %1009 = vmatpush2.msra.mxu0 0.0
  %1010 = vmatprep.subr.mxu0 0.0
  %1011 = vmatpush2.msra.mxu0 0.0
  %1012 = vmatprep.subr.mxu0 0.0
  %1013 = vmatpush2.msra.mxu0 0.0
  %1014 = vmatprep.subr.mxu0 0.0
  %1015 = vmatpush2.msra.mxu0 0.0
  %1016 = vmatprep.subr.mxu0 0.0
  %1017 = vmatpush2.msra.mxu0 0.0
  %1018 = vmatprep.subr.mxu0 0.0
  %1019 = vmatpush2.msra.mxu0 0.0
  %1020 = vmatprep.subr.mxu0 0.0
  %1021 = vmatpush2.msra.mxu0 0.0
  %1022 = vmatprep.subr.mxu0 0.0
  %1023 = vmatpush2.msra.mxu0 0.0
  %1024 = vmatprep.subr.mxu0 0.0
  %1025 = vmatpush2.msra.mxu0 0.0
  %1026 = vmatprep.subr.mxu0 0.0
  %1027 = vmatpush2.msra.mxu0 0.0
  %1028 = vmatprep.subr.mxu0 0.0
  %1029 = vmatpush2.msra.mxu0 0.0
  %1030 = vmatprep.subr.mxu0 0.0
  %1031 = vmatpush2.msra.mxu0 0.0
  %1032 = vmatprep.subr.mxu0 0.0
  %1033 = vmatpush2.msra.mxu0 0.0
  %1034 = vmatprep.mubr.f32.mxu0 0.0
  %1035 = vmatmul.mubr.f32.gmra.mxu0 %v868
  %v1036 = vpop.f32.mrf.mxu0
  %v1037 = vadd.f32 0.0, %v1036
  %v1038 = vpop.f32.mrf.mxu0
  %1039 = vdwg.mxu0
  %v1040 = vadd.f32 %v969, %v1037
  %v1041 = vxor.u32 %v1040, 2147483648
  %v1042 = vmul.f32 %v1041, 1.442695
  %v1043 = vpow.pop %v1042
  %v1044 = vadd.f32 %v1043, 1.0
  %v1045 = vrcp.pop %v1044
  %v1046 = vmul.f32 1.0, %v1045
  %v1047 = vtanh.pop %v1040
  %v1048 = vmul.f32 %v1046, %v783
  %1050 = vrot.lane.b32.xlu0 %v1047, 64
  %v1051 = vpop.permute.xlu0 %1050
  %v1053 = vmul.f32 %v1046, %v1051
  %1055 = vrot.lane.b32.xlu0 %v1053, 32
  %v1056 = vpop.permute.xlu0 %1055
  %v1058 = vadd.f32 %v1048, %v1056
  %v1059 = vtanh.pop %v1058
  %1061 = vrot.lane.b32.xlu0 %v1059, 64
  %v1062 = vpop.permute.xlu0 %1061
  %v1064 = vmul.f32 %v1046, %v1062
  %1066 = vrot.lane.b32.xlu0 %v964, 32
  %v1067 = vpop.permute.xlu0 %1066
  %v1068 = vsel %vm143, %v1067, 0
  %1070 = vmatprep.subr.mxu0 0.0
  %1071 = vmatpush1.msra.mxu0 0.0
  %1072 = vmatprep.subr.mxu0 0.0
  %1073 = vmatpush1.msra.mxu0 0.0
  %1074 = vmatprep.subr.mxu0 0.0
  %1075 = vmatpush1.msra.mxu0 0.0
  %1076 = vmatprep.subr.mxu0 0.0
  %1077 = vmatpush1.msra.mxu0 0.0
  %1078 = vmatprep.subr.mxu0 0.0
  %1079 = vmatpush1.msra.mxu0 0.0
  %1080 = vmatprep.subr.mxu0 0.0
  %1081 = vmatpush1.msra.mxu0 0.0
  %1082 = vmatprep.subr.mxu0 0.0
  %1083 = vmatpush1.msra.mxu0 0.0
  %1084 = vmatprep.subr.mxu0 0.0
  %1085 = vmatpush1.msra.mxu0 0.0
  %1086 = vmatprep.subr.mxu0 0.0
  %1087 = vmatpush1.msra.mxu0 0.0
  %1088 = vmatprep.subr.mxu0 0.0
  %1089 = vmatpush1.msra.mxu0 0.0
  %1090 = vmatprep.subr.mxu0 0.0
  %1091 = vmatpush1.msra.mxu0 0.0
  %1092 = vmatprep.subr.mxu0 0.0
  %1093 = vmatpush1.msra.mxu0 0.0
  %1094 = vmatprep.subr.mxu0 0.0
  %1095 = vmatpush1.msra.mxu0 %v32
  %1096 = vmatprep.subr.mxu0 0.0
  %1097 = vmatpush1.msra.mxu0 %v31
  %1098 = vmatprep.subr.mxu0 0.0
  %1099 = vmatpush1.msra.mxu0 %v30
  %1100 = vmatprep.subr.mxu0 0.0
  %1101 = vmatpush1.msra.mxu0 %v29
  %1102 = vmatprep.subr.mxu0 0.0
  %1103 = vmatpush2.msra.mxu0 0.0
  %1104 = vmatprep.subr.mxu0 0.0
  %1105 = vmatpush2.msra.mxu0 0.0
  %1106 = vmatprep.subr.mxu0 0.0
  %1107 = vmatpush2.msra.mxu0 0.0
  %1108 = vmatprep.subr.mxu0 0.0
  %1109 = vmatpush2.msra.mxu0 0.0
  %1110 = vmatprep.subr.mxu0 0.0
  %1111 = vmatpush2.msra.mxu0 0.0
  %1112 = vmatprep.subr.mxu0 0.0
  %1113 = vmatpush2.msra.mxu0 0.0
  %1114 = vmatprep.subr.mxu0 0.0
  %1115 = vmatpush2.msra.mxu0 0.0
  %1116 = vmatprep.subr.mxu0 0.0
  %1117 = vmatpush2.msra.mxu0 0.0
  %1118 = vmatprep.subr.mxu0 0.0
  %1119 = vmatpush2.msra.mxu0 0.0
  %1120 = vmatprep.subr.mxu0 0.0
  %1121 = vmatpush2.msra.mxu0 0.0
  %1122 = vmatprep.subr.mxu0 0.0
  %1123 = vmatpush2.msra.mxu0 0.0
  %1124 = vmatprep.subr.mxu0 0.0
  %1125 = vmatpush2.msra.mxu0 0.0
  %1126 = vmatprep.subr.mxu0 0.0
  %1127 = vmatpush2.msra.mxu0 0.0
  %1128 = vmatprep.subr.mxu0 0.0
  %1129 = vmatpush2.msra.mxu0 0.0
  %1130 = vmatprep.subr.mxu0 0.0
  %1131 = vmatpush2.msra.mxu0 0.0
  %1132 = vmatprep.subr.mxu0 0.0
  %1133 = vmatpush2.msra.mxu0 0.0
  %1134 = vmatprep.mubr.f32.mxu0 0.0
  %1135 = vmatmul.mubr.f32.gmra.mxu0 %v1068
  %v1136 = vpop.f32.mrf.mxu0
  %v1137 = vadd.f32 0.0, %v1136
  %v1138 = vpop.f32.mrf.mxu0
  %1139 = vdwg.mxu0
  %1141 = vrot.lane.b32.xlu0 %v1064, 32
  %v1142 = vpop.permute.xlu0 %1141
  %v1143 = vsel %vm143, %v1142, 0
  %1145 = vmatprep.subr.mxu0 0.0
  %1146 = vmatpush1.msra.mxu0 0.0
  %1147 = vmatprep.subr.mxu0 0.0
  %1148 = vmatpush1.msra.mxu0 0.0
  %1149 = vmatprep.subr.mxu0 0.0
  %1150 = vmatpush1.msra.mxu0 0.0
  %1151 = vmatprep.subr.mxu0 0.0
  %1152 = vmatpush1.msra.mxu0 0.0
  %1153 = vmatprep.subr.mxu0 0.0
  %1154 = vmatpush1.msra.mxu0 0.0
  %1155 = vmatprep.subr.mxu0 0.0
  %1156 = vmatpush1.msra.mxu0 0.0
  %1157 = vmatprep.subr.mxu0 0.0
  %1158 = vmatpush1.msra.mxu0 0.0
  %1159 = vmatprep.subr.mxu0 0.0
  %1160 = vmatpush1.msra.mxu0 0.0
  %1161 = vmatprep.subr.mxu0 0.0
  %1162 = vmatpush1.msra.mxu0 0.0
  %1163 = vmatprep.subr.mxu0 0.0
  %1164 = vmatpush1.msra.mxu0 0.0
  %1165 = vmatprep.subr.mxu0 0.0
  %1166 = vmatpush1.msra.mxu0 0.0
  %1167 = vmatprep.subr.mxu0 0.0
  %1168 = vmatpush1.msra.mxu0 0.0
  %1169 = vmatprep.subr.mxu0 0.0
  %1170 = vmatpush1.msra.mxu0 %v28
  %1171 = vmatprep.subr.mxu0 0.0
  %1172 = vmatpush1.msra.mxu0 %v27
  %1173 = vmatprep.subr.mxu0 0.0
  %1174 = vmatpush1.msra.mxu0 %v26
  %1175 = vmatprep.subr.mxu0 0.0
  %1176 = vmatpush1.msra.mxu0 %v25
  %1177 = vmatprep.subr.mxu0 0.0
  %1178 = vmatpush2.msra.mxu0 0.0
  %1179 = vmatprep.subr.mxu0 0.0
  %1180 = vmatpush2.msra.mxu0 0.0
  %1181 = vmatprep.subr.mxu0 0.0
  %1182 = vmatpush2.msra.mxu0 0.0
  %1183 = vmatprep.subr.mxu0 0.0
  %1184 = vmatpush2.msra.mxu0 0.0
  %1185 = vmatprep.subr.mxu0 0.0
  %1186 = vmatpush2.msra.mxu0 0.0
  %1187 = vmatprep.subr.mxu0 0.0
  %1188 = vmatpush2.msra.mxu0 0.0
  %1189 = vmatprep.subr.mxu0 0.0
  %1190 = vmatpush2.msra.mxu0 0.0
  %1191 = vmatprep.subr.mxu0 0.0
  %1192 = vmatpush2.msra.mxu0 0.0
  %1193 = vmatprep.subr.mxu0 0.0
  %1194 = vmatpush2.msra.mxu0 0.0
  %1195 = vmatprep.subr.mxu0 0.0
  %1196 = vmatpush2.msra.mxu0 0.0
  %1197 = vmatprep.subr.mxu0 0.0
  %1198 = vmatpush2.msra.mxu0 0.0
  %1199 = vmatprep.subr.mxu0 0.0
  %1200 = vmatpush2.msra.mxu0 0.0
  %1201 = vmatprep.subr.mxu0 0.0
  %1202 = vmatpush2.msra.mxu0 0.0
  %1203 = vmatprep.subr.mxu0 0.0
  %1204 = vmatpush2.msra.mxu0 0.0
  %1205 = vmatprep.subr.mxu0 0.0
  %1206 = vmatpush2.msra.mxu0 0.0
  %1207 = vmatprep.subr.mxu0 0.0
  %1208 = vmatpush2.msra.mxu0 0.0
  %1209 = vmatprep.mubr.f32.mxu0 0.0
  %1210 = vmatmul.mubr.f32.gmra.mxu0 %v1143
  %v1211 = vpop.f32.mrf.mxu0
  %v1212 = vadd.f32 %v1137, %v1211
  %v1213 = vpop.f32.mrf.mxu0
  %1214 = vdwg.mxu0
  %v1215 = vadd.f32 %v1212, %v390
  %v1216 = vxor.u32 %v1215, 2147483648
  %v1217 = vmul.f32 %v1216, 1.442695
  %v1218 = vpow.pop %v1217
  %v1219 = vadd.f32 %v1218, 1.0
  %v1220 = vrcp.pop %v1219
  %v1221 = vmul.f32 1.0, %v1220
  %v1222 = vtanh.pop %v1215
  %v1223 = vmul.f32 %v1221, %v958
  %1225 = vrot.lane.b32.xlu0 %v1222, 64
  %v1226 = vpop.permute.xlu0 %1225
  %v1228 = vmul.f32 %v1221, %v1226
  %1230 = vrot.lane.b32.xlu0 %v1228, 32
  %v1231 = vpop.permute.xlu0 %1230
  %v1233 = vadd.f32 %v1223, %v1231
  %v1234 = vtanh.pop %v1233
  %1236 = vrot.lane.b32.xlu0 %v1234, 64
  %v1237 = vpop.permute.xlu0 %1236
  %v1239 = vmul.f32 %v1221, %v1237
  %v1240 = vrot.slane %v130, 4
  %v1242 = vrot.slane %v135, 3
  %v1244 = vsel %vm141, %v1240, %v1242
  %1245 = vmatprep.subr.mxu0 0.0
  %1246 = vmatpush1.msra.mxu0 0.0
  %1247 = vmatprep.subr.mxu0 0.0
  %1248 = vmatpush1.msra.mxu0 0.0
  %1249 = vmatprep.subr.mxu0 0.0
  %1250 = vmatpush1.msra.mxu0 0.0
  %1251 = vmatprep.subr.mxu0 0.0
  %1252 = vmatpush1.msra.mxu0 0.0
  %1253 = vmatprep.subr.mxu0 0.0
  %1254 = vmatpush1.msra.mxu0 0.0
  %1255 = vmatprep.subr.mxu0 0.0
  %1256 = vmatpush1.msra.mxu0 0.0
  %1257 = vmatprep.subr.mxu0 0.0
  %1258 = vmatpush1.msra.mxu0 0.0
  %1259 = vmatprep.subr.mxu0 0.0
  %1260 = vmatpush1.msra.mxu0 0.0
  %1261 = vmatprep.subr.mxu0 0.0
  %1262 = vmatpush1.msra.mxu0 0.0
  %1263 = vmatprep.subr.mxu0 0.0
  %1264 = vmatpush1.msra.mxu0 0.0
  %1265 = vmatprep.subr.mxu0 0.0
  %1266 = vmatpush1.msra.mxu0 0.0
  %1267 = vmatprep.subr.mxu0 0.0
  %1268 = vmatpush1.msra.mxu0 0.0
  %1269 = vmatprep.subr.mxu0 0.0
  %1270 = vmatpush1.msra.mxu0 %v24
  %1271 = vmatprep.subr.mxu0 0.0
  %1272 = vmatpush1.msra.mxu0 %v23
  %1273 = vmatprep.subr.mxu0 0.0
  %1274 = vmatpush1.msra.mxu0 %v22
  %1275 = vmatprep.subr.mxu0 0.0
  %1276 = vmatpush1.msra.mxu0 %v21
  %1277 = vmatprep.subr.mxu0 0.0
  %1278 = vmatpush2.msra.mxu0 0.0
  %1279 = vmatprep.subr.mxu0 0.0
  %1280 = vmatpush2.msra.mxu0 0.0
  %1281 = vmatprep.subr.mxu0 0.0
  %1282 = vmatpush2.msra.mxu0 0.0
  %1283 = vmatprep.subr.mxu0 0.0
  %1284 = vmatpush2.msra.mxu0 0.0
  %1285 = vmatprep.subr.mxu0 0.0
  %1286 = vmatpush2.msra.mxu0 0.0
  %1287 = vmatprep.subr.mxu0 0.0
  %1288 = vmatpush2.msra.mxu0 0.0
  %1289 = vmatprep.subr.mxu0 0.0
  %1290 = vmatpush2.msra.mxu0 0.0
  %1291 = vmatprep.subr.mxu0 0.0
  %1292 = vmatpush2.msra.mxu0 0.0
  %1293 = vmatprep.subr.mxu0 0.0
  %1294 = vmatpush2.msra.mxu0 0.0
  %1295 = vmatprep.subr.mxu0 0.0
  %1296 = vmatpush2.msra.mxu0 0.0
  %1297 = vmatprep.subr.mxu0 0.0
  %1298 = vmatpush2.msra.mxu0 0.0
  %1299 = vmatprep.subr.mxu0 0.0
  %1300 = vmatpush2.msra.mxu0 0.0
  %1301 = vmatprep.subr.mxu0 0.0
  %1302 = vmatpush2.msra.mxu0 0.0
  %1303 = vmatprep.subr.mxu0 0.0
  %1304 = vmatpush2.msra.mxu0 0.0
  %1305 = vmatprep.subr.mxu0 0.0
  %1306 = vmatpush2.msra.mxu0 0.0
  %1307 = vmatprep.subr.mxu0 0.0
  %1308 = vmatpush2.msra.mxu0 0.0
  %1309 = vmatprep.mubr.f32.mxu0 0.0
  %1310 = vmatmul.mubr.f32.gmra.mxu0 %v1143
  %v1311 = vpop.f32.mrf.mxu0
  %v1312 = vadd.f32 0.0, %v1311
  %v1313 = vpop.f32.mrf.mxu0
  %1314 = vdwg.mxu0
  %v1315 = vadd.f32 %v1244, %v1312
  %v1316 = vxor.u32 %v1315, 2147483648
  %v1317 = vmul.f32 %v1316, 1.442695
  %v1318 = vpow.pop %v1317
  %v1319 = vadd.f32 %v1318, 1.0
  %v1320 = vrcp.pop %v1319
  %v1321 = vmul.f32 1.0, %v1320
  %v1322 = vtanh.pop %v1315
  %v1323 = vmul.f32 %v1321, %v1058
  %1325 = vrot.lane.b32.xlu0 %v1322, 64
  %v1326 = vpop.permute.xlu0 %1325
  %v1328 = vmul.f32 %v1321, %v1326
  %1330 = vrot.lane.b32.xlu0 %v1328, 32
  %v1331 = vpop.permute.xlu0 %1330
  %v1333 = vadd.f32 %v1323, %v1331
  %v1334 = vtanh.pop %v1333
  %1336 = vrot.lane.b32.xlu0 %v1334, 64
  %v1337 = vpop.permute.xlu0 %1336
  %v1339 = vmul.f32 %v1321, %v1337
  %1341 = vrot.lane.b32.xlu0 %v1239, 32
  %v1342 = vpop.permute.xlu0 %1341
  %v1343 = vsel %vm143, %v1342, 0
  %1345 = vmatprep.subr.mxu0 0.0
  %1346 = vmatpush1.msra.mxu0 0.0
  %1347 = vmatprep.subr.mxu0 0.0
  %1348 = vmatpush1.msra.mxu0 0.0
  %1349 = vmatprep.subr.mxu0 0.0
  %1350 = vmatpush1.msra.mxu0 0.0
  %1351 = vmatprep.subr.mxu0 0.0
  %1352 = vmatpush1.msra.mxu0 0.0
  %1353 = vmatprep.subr.mxu0 0.0
  %1354 = vmatpush1.msra.mxu0 0.0
  %1355 = vmatprep.subr.mxu0 0.0
  %1356 = vmatpush1.msra.mxu0 0.0
  %1357 = vmatprep.subr.mxu0 0.0
  %1358 = vmatpush1.msra.mxu0 0.0
  %1359 = vmatprep.subr.mxu0 0.0
  %1360 = vmatpush1.msra.mxu0 0.0
  %1361 = vmatprep.subr.mxu0 0.0
  %1362 = vmatpush1.msra.mxu0 0.0
  %1363 = vmatprep.subr.mxu0 0.0
  %1364 = vmatpush1.msra.mxu0 0.0
  %1365 = vmatprep.subr.mxu0 0.0
  %1366 = vmatpush1.msra.mxu0 0.0
  %1367 = vmatprep.subr.mxu0 0.0
  %1368 = vmatpush1.msra.mxu0 0.0
  %1369 = vmatprep.subr.mxu0 0.0
  %1370 = vmatpush1.msra.mxu0 %v32
  %1371 = vmatprep.subr.mxu0 0.0
  %1372 = vmatpush1.msra.mxu0 %v31
  %1373 = vmatprep.subr.mxu0 0.0
  %1374 = vmatpush1.msra.mxu0 %v30
  %1375 = vmatprep.subr.mxu0 0.0
  %1376 = vmatpush1.msra.mxu0 %v29
  %1377 = vmatprep.subr.mxu0 0.0
  %1378 = vmatpush2.msra.mxu0 0.0
  %1379 = vmatprep.subr.mxu0 0.0
  %1380 = vmatpush2.msra.mxu0 0.0
  %1381 = vmatprep.subr.mxu0 0.0
  %1382 = vmatpush2.msra.mxu0 0.0
  %1383 = vmatprep.subr.mxu0 0.0
  %1384 = vmatpush2.msra.mxu0 0.0
  %1385 = vmatprep.subr.mxu0 0.0
  %1386 = vmatpush2.msra.mxu0 0.0
  %1387 = vmatprep.subr.mxu0 0.0
  %1388 = vmatpush2.msra.mxu0 0.0
  %1389 = vmatprep.subr.mxu0 0.0
  %1390 = vmatpush2.msra.mxu0 0.0
  %1391 = vmatprep.subr.mxu0 0.0
  %1392 = vmatpush2.msra.mxu0 0.0
  %1393 = vmatprep.subr.mxu0 0.0
  %1394 = vmatpush2.msra.mxu0 0.0
  %1395 = vmatprep.subr.mxu0 0.0
  %1396 = vmatpush2.msra.mxu0 0.0
  %1397 = vmatprep.subr.mxu0 0.0
  %1398 = vmatpush2.msra.mxu0 0.0
  %1399 = vmatprep.subr.mxu0 0.0
  %1400 = vmatpush2.msra.mxu0 0.0
  %1401 = vmatprep.subr.mxu0 0.0
  %1402 = vmatpush2.msra.mxu0 0.0
  %1403 = vmatprep.subr.mxu0 0.0
  %1404 = vmatpush2.msra.mxu0 0.0
  %1405 = vmatprep.subr.mxu0 0.0
  %1406 = vmatpush2.msra.mxu0 0.0
  %1407 = vmatprep.subr.mxu0 0.0
  %1408 = vmatpush2.msra.mxu0 0.0
  %1409 = vmatprep.mubr.f32.mxu0 0.0
  %1410 = vmatmul.mubr.f32.gmra.mxu0 %v1343
  %v1411 = vpop.f32.mrf.mxu0
  %v1412 = vadd.f32 0.0, %v1411
  %v1413 = vpop.f32.mrf.mxu0
  %1414 = vdwg.mxu0
  %1416 = vrot.lane.b32.xlu0 %v1339, 32
  %v1417 = vpop.permute.xlu0 %1416
  %v1418 = vsel %vm143, %v1417, 0
  %1420 = vmatprep.subr.mxu0 0.0
  %1421 = vmatpush1.msra.mxu0 0.0
  %1422 = vmatprep.subr.mxu0 0.0
  %1423 = vmatpush1.msra.mxu0 0.0
  %1424 = vmatprep.subr.mxu0 0.0
  %1425 = vmatpush1.msra.mxu0 0.0
  %1426 = vmatprep.subr.mxu0 0.0
  %1427 = vmatpush1.msra.mxu0 0.0
  %1428 = vmatprep.subr.mxu0 0.0
  %1429 = vmatpush1.msra.mxu0 0.0
  %1430 = vmatprep.subr.mxu0 0.0
  %1431 = vmatpush1.msra.mxu0 0.0
  %1432 = vmatprep.subr.mxu0 0.0
  %1433 = vmatpush1.msra.mxu0 0.0
  %1434 = vmatprep.subr.mxu0 0.0
  %1435 = vmatpush1.msra.mxu0 0.0
  %1436 = vmatprep.subr.mxu0 0.0
  %1437 = vmatpush1.msra.mxu0 0.0
  %1438 = vmatprep.subr.mxu0 0.0
  %1439 = vmatpush1.msra.mxu0 0.0
  %1440 = vmatprep.subr.mxu0 0.0
  %1441 = vmatpush1.msra.mxu0 0.0
  %1442 = vmatprep.subr.mxu0 0.0
  %1443 = vmatpush1.msra.mxu0 0.0
  %1444 = vmatprep.subr.mxu0 0.0
  %1445 = vmatpush1.msra.mxu0 %v28
  %1446 = vmatprep.subr.mxu0 0.0
  %1447 = vmatpush1.msra.mxu0 %v27
  %1448 = vmatprep.subr.mxu0 0.0
  %1449 = vmatpush1.msra.mxu0 %v26
  %1450 = vmatprep.subr.mxu0 0.0
  %1451 = vmatpush1.msra.mxu0 %v25
  %1452 = vmatprep.subr.mxu0 0.0
  %1453 = vmatpush2.msra.mxu0 0.0
  %1454 = vmatprep.subr.mxu0 0.0
  %1455 = vmatpush2.msra.mxu0 0.0
  %1456 = vmatprep.subr.mxu0 0.0
  %1457 = vmatpush2.msra.mxu0 0.0
  %1458 = vmatprep.subr.mxu0 0.0
  %1459 = vmatpush2.msra.mxu0 0.0
  %1460 = vmatprep.subr.mxu0 0.0
  %1461 = vmatpush2.msra.mxu0 0.0
  %1462 = vmatprep.subr.mxu0 0.0
  %1463 = vmatpush2.msra.mxu0 0.0
  %1464 = vmatprep.subr.mxu0 0.0
  %1465 = vmatpush2.msra.mxu0 0.0
  %1466 = vmatprep.subr.mxu0 0.0
  %1467 = vmatpush2.msra.mxu0 0.0
  %1468 = vmatprep.subr.mxu0 0.0
  %1469 = vmatpush2.msra.mxu0 0.0
  %1470 = vmatprep.subr.mxu0 0.0
  %1471 = vmatpush2.msra.mxu0 0.0
  %1472 = vmatprep.subr.mxu0 0.0
  %1473 = vmatpush2.msra.mxu0 0.0
  %1474 = vmatprep.subr.mxu0 0.0
  %1475 = vmatpush2.msra.mxu0 0.0
  %1476 = vmatprep.subr.mxu0 0.0
  %1477 = vmatpush2.msra.mxu0 0.0
  %1478 = vmatprep.subr.mxu0 0.0
  %1479 = vmatpush2.msra.mxu0 0.0
  %1480 = vmatprep.subr.mxu0 0.0
  %1481 = vmatpush2.msra.mxu0 0.0
  %1482 = vmatprep.subr.mxu0 0.0
  %1483 = vmatpush2.msra.mxu0 0.0
  %1484 = vmatprep.mubr.f32.mxu0 0.0
  %1485 = vmatmul.mubr.f32.gmra.mxu0 %v1418
  %v1486 = vpop.f32.mrf.mxu0
  %v1487 = vadd.f32 %v1412, %v1486
  %v1488 = vpop.f32.mrf.mxu0
  %1489 = vdwg.mxu0
  %v1490 = vadd.f32 %v1487, %v390
  %v1491 = vxor.u32 %v1490, 2147483648
  %v1492 = vmul.f32 %v1491, 1.442695
  %v1493 = vpow.pop %v1492
  %v1494 = vadd.f32 %v1493, 1.0
  %v1495 = vrcp.pop %v1494
  %v1496 = vmul.f32 1.0, %v1495
  %v1497 = vtanh.pop %v1490
  %v1498 = vmul.f32 %v1496, %v1233
  %1500 = vrot.lane.b32.xlu0 %v1497, 64
  %v1501 = vpop.permute.xlu0 %1500
  %v1503 = vmul.f32 %v1496, %v1501
  %1505 = vrot.lane.b32.xlu0 %v1503, 32
  %v1506 = vpop.permute.xlu0 %1505
  %v1508 = vadd.f32 %v1498, %v1506
  %v1509 = vtanh.pop %v1508
  %1511 = vrot.lane.b32.xlu0 %v1509, 64
  %v1512 = vpop.permute.xlu0 %1511
  %v1514 = vmul.f32 %v1496, %v1512
  %v1515 = vrot.slane %v130, 5
  %v1517 = vrot.slane %v135, 4
  %v1519 = vsel %vm141, %v1515, %v1517
  %1520 = vmatprep.subr.mxu0 0.0
  %1521 = vmatpush1.msra.mxu0 0.0
  %1522 = vmatprep.subr.mxu0 0.0
  %1523 = vmatpush1.msra.mxu0 0.0
  %1524 = vmatprep.subr.mxu0 0.0
  %1525 = vmatpush1.msra.mxu0 0.0
  %1526 = vmatprep.subr.mxu0 0.0
  %1527 = vmatpush1.msra.mxu0 0.0
  %1528 = vmatprep.subr.mxu0 0.0
  %1529 = vmatpush1.msra.mxu0 0.0
  %1530 = vmatprep.subr.mxu0 0.0
  %1531 = vmatpush1.msra.mxu0 0.0
  %1532 = vmatprep.subr.mxu0 0.0
  %1533 = vmatpush1.msra.mxu0 0.0
  %1534 = vmatprep.subr.mxu0 0.0
  %1535 = vmatpush1.msra.mxu0 0.0
  %1536 = vmatprep.subr.mxu0 0.0
  %1537 = vmatpush1.msra.mxu0 0.0
  %1538 = vmatprep.subr.mxu0 0.0
  %1539 = vmatpush1.msra.mxu0 0.0
  %1540 = vmatprep.subr.mxu0 0.0
  %1541 = vmatpush1.msra.mxu0 0.0
  %1542 = vmatprep.subr.mxu0 0.0
  %1543 = vmatpush1.msra.mxu0 0.0
  %1544 = vmatprep.subr.mxu0 0.0
  %1545 = vmatpush1.msra.mxu0 %v24
  %1546 = vmatprep.subr.mxu0 0.0
  %1547 = vmatpush1.msra.mxu0 %v23
  %1548 = vmatprep.subr.mxu0 0.0
  %1549 = vmatpush1.msra.mxu0 %v22
  %1550 = vmatprep.subr.mxu0 0.0
  %1551 = vmatpush1.msra.mxu0 %v21
  %1552 = vmatprep.subr.mxu0 0.0
  %1553 = vmatpush2.msra.mxu0 0.0
  %1554 = vmatprep.subr.mxu0 0.0
  %1555 = vmatpush2.msra.mxu0 0.0
  %1556 = vmatprep.subr.mxu0 0.0
  %1557 = vmatpush2.msra.mxu0 0.0
  %1558 = vmatprep.subr.mxu0 0.0
  %1559 = vmatpush2.msra.mxu0 0.0
  %1560 = vmatprep.subr.mxu0 0.0
  %1561 = vmatpush2.msra.mxu0 0.0
  %1562 = vmatprep.subr.mxu0 0.0
  %1563 = vmatpush2.msra.mxu0 0.0
  %1564 = vmatprep.subr.mxu0 0.0
  %1565 = vmatpush2.msra.mxu0 0.0
  %1566 = vmatprep.subr.mxu0 0.0
  %1567 = vmatpush2.msra.mxu0 0.0
  %1568 = vmatprep.subr.mxu0 0.0
  %1569 = vmatpush2.msra.mxu0 0.0
  %1570 = vmatprep.subr.mxu0 0.0
  %1571 = vmatpush2.msra.mxu0 0.0
  %1572 = vmatprep.subr.mxu0 0.0
  %1573 = vmatpush2.msra.mxu0 0.0
  %1574 = vmatprep.subr.mxu0 0.0
  %1575 = vmatpush2.msra.mxu0 0.0
  %1576 = vmatprep.subr.mxu0 0.0
  %1577 = vmatpush2.msra.mxu0 0.0
  %1578 = vmatprep.subr.mxu0 0.0
  %1579 = vmatpush2.msra.mxu0 0.0
  %1580 = vmatprep.subr.mxu0 0.0
  %1581 = vmatpush2.msra.mxu0 0.0
  %1582 = vmatprep.subr.mxu0 0.0
  %1583 = vmatpush2.msra.mxu0 0.0
  %1584 = vmatprep.mubr.f32.mxu0 0.0
  %1585 = vmatmul.mubr.f32.gmra.mxu0 %v1418
  %v1586 = vpop.f32.mrf.mxu0
  %v1587 = vadd.f32 0.0, %v1586
  %v1588 = vpop.f32.mrf.mxu0
  %1589 = vdwg.mxu0
  %v1590 = vadd.f32 %v1519, %v1587
  %v1591 = vxor.u32 %v1590, 2147483648
  %v1592 = vmul.f32 %v1591, 1.442695
  %v1593 = vpow.pop %v1592
  %v1594 = vadd.f32 %v1593, 1.0
  %v1595 = vrcp.pop %v1594
  %v1596 = vmul.f32 1.0, %v1595
  %v1597 = vtanh.pop %v1590
  %v1598 = vmul.f32 %v1596, %v1333
  %1600 = vrot.lane.b32.xlu0 %v1597, 64
  %v1601 = vpop.permute.xlu0 %1600
  %v1603 = vmul.f32 %v1596, %v1601
  %1605 = vrot.lane.b32.xlu0 %v1603, 32
  %v1606 = vpop.permute.xlu0 %1605
  %v1608 = vadd.f32 %v1598, %v1606
  %v1609 = vtanh.pop %v1608
  %1611 = vrot.lane.b32.xlu0 %v1609, 64
  %v1612 = vpop.permute.xlu0 %1611
  %v1614 = vmul.f32 %v1596, %v1612
  %1616 = vrot.lane.b32.xlu0 %v1514, 32
  %v1617 = vpop.permute.xlu0 %1616
  %v1618 = vsel %vm143, %v1617, 0
  %1620 = vmatprep.subr.mxu0 0.0
  %1621 = vmatpush1.msra.mxu0 0.0
  %1622 = vmatprep.subr.mxu0 0.0
  %1623 = vmatpush1.msra.mxu0 0.0
  %1624 = vmatprep.subr.mxu0 0.0
  %1625 = vmatpush1.msra.mxu0 0.0
  %1626 = vmatprep.subr.mxu0 0.0
  %1627 = vmatpush1.msra.mxu0 0.0
  %1628 = vmatprep.subr.mxu0 0.0
  %1629 = vmatpush1.msra.mxu0 0.0
  %1630 = vmatprep.subr.mxu0 0.0
  %1631 = vmatpush1.msra.mxu0 0.0
  %1632 = vmatprep.subr.mxu0 0.0
  %1633 = vmatpush1.msra.mxu0 0.0
  %1634 = vmatprep.subr.mxu0 0.0
  %1635 = vmatpush1.msra.mxu0 0.0
  %1636 = vmatprep.subr.mxu0 0.0
  %1637 = vmatpush1.msra.mxu0 0.0
  %1638 = vmatprep.subr.mxu0 0.0
  %1639 = vmatpush1.msra.mxu0 0.0
  %1640 = vmatprep.subr.mxu0 0.0
  %1641 = vmatpush1.msra.mxu0 0.0
  %1642 = vmatprep.subr.mxu0 0.0
  %1643 = vmatpush1.msra.mxu0 0.0
  %1644 = vmatprep.subr.mxu0 0.0
  %1645 = vmatpush1.msra.mxu0 %v32
  %1646 = vmatprep.subr.mxu0 0.0
  %1647 = vmatpush1.msra.mxu0 %v31
  %1648 = vmatprep.subr.mxu0 0.0
  %1649 = vmatpush1.msra.mxu0 %v30
  %1650 = vmatprep.subr.mxu0 0.0
  %1651 = vmatpush1.msra.mxu0 %v29
  %1652 = vmatprep.subr.mxu0 0.0
  %1653 = vmatpush2.msra.mxu0 0.0
  %1654 = vmatprep.subr.mxu0 0.0
  %1655 = vmatpush2.msra.mxu0 0.0
  %1656 = vmatprep.subr.mxu0 0.0
  %1657 = vmatpush2.msra.mxu0 0.0
  %1658 = vmatprep.subr.mxu0 0.0
  %1659 = vmatpush2.msra.mxu0 0.0
  %1660 = vmatprep.subr.mxu0 0.0
  %1661 = vmatpush2.msra.mxu0 0.0
  %1662 = vmatprep.subr.mxu0 0.0
  %1663 = vmatpush2.msra.mxu0 0.0
  %1664 = vmatprep.subr.mxu0 0.0
  %1665 = vmatpush2.msra.mxu0 0.0
  %1666 = vmatprep.subr.mxu0 0.0
  %1667 = vmatpush2.msra.mxu0 0.0
  %1668 = vmatprep.subr.mxu0 0.0
  %1669 = vmatpush2.msra.mxu0 0.0
  %1670 = vmatprep.subr.mxu0 0.0
  %1671 = vmatpush2.msra.mxu0 0.0
  %1672 = vmatprep.subr.mxu0 0.0
  %1673 = vmatpush2.msra.mxu0 0.0
  %1674 = vmatprep.subr.mxu0 0.0
  %1675 = vmatpush2.msra.mxu0 0.0
  %1676 = vmatprep.subr.mxu0 0.0
  %1677 = vmatpush2.msra.mxu0 0.0
  %1678 = vmatprep.subr.mxu0 0.0
  %1679 = vmatpush2.msra.mxu0 0.0
  %1680 = vmatprep.subr.mxu0 0.0
  %1681 = vmatpush2.msra.mxu0 0.0
  %1682 = vmatprep.subr.mxu0 0.0
  %1683 = vmatpush2.msra.mxu0 0.0
  %1684 = vmatprep.mubr.f32.mxu0 0.0
  %1685 = vmatmul.mubr.f32.gmra.mxu0 %v1618
  %v1686 = vpop.f32.mrf.mxu0
  %v1687 = vadd.f32 0.0, %v1686
  %v1688 = vpop.f32.mrf.mxu0
  %1689 = vdwg.mxu0
  %1691 = vrot.lane.b32.xlu0 %v1614, 32
  %v1692 = vpop.permute.xlu0 %1691
  %v1693 = vsel %vm143, %v1692, 0
  %1695 = vmatprep.subr.mxu0 0.0
  %1696 = vmatpush1.msra.mxu0 0.0
  %1697 = vmatprep.subr.mxu0 0.0
  %1698 = vmatpush1.msra.mxu0 0.0
  %1699 = vmatprep.subr.mxu0 0.0
  %1700 = vmatpush1.msra.mxu0 0.0
  %1701 = vmatprep.subr.mxu0 0.0
  %1702 = vmatpush1.msra.mxu0 0.0
  %1703 = vmatprep.subr.mxu0 0.0
  %1704 = vmatpush1.msra.mxu0 0.0
  %1705 = vmatprep.subr.mxu0 0.0
  %1706 = vmatpush1.msra.mxu0 0.0
  %1707 = vmatprep.subr.mxu0 0.0
  %1708 = vmatpush1.msra.mxu0 0.0
  %1709 = vmatprep.subr.mxu0 0.0
  %1710 = vmatpush1.msra.mxu0 0.0
  %1711 = vmatprep.subr.mxu0 0.0
  %1712 = vmatpush1.msra.mxu0 0.0
  %1713 = vmatprep.subr.mxu0 0.0
  %1714 = vmatpush1.msra.mxu0 0.0
  %1715 = vmatprep.subr.mxu0 0.0
  %1716 = vmatpush1.msra.mxu0 0.0
  %1717 = vmatprep.subr.mxu0 0.0
  %1718 = vmatpush1.msra.mxu0 0.0
  %1719 = vmatprep.subr.mxu0 0.0
  %1720 = vmatpush1.msra.mxu0 %v28
  %1721 = vmatprep.subr.mxu0 0.0
  %1722 = vmatpush1.msra.mxu0 %v27
  %1723 = vmatprep.subr.mxu0 0.0
  %1724 = vmatpush1.msra.mxu0 %v26
  %1725 = vmatprep.subr.mxu0 0.0
  %1726 = vmatpush1.msra.mxu0 %v25
  %1727 = vmatprep.subr.mxu0 0.0
  %1728 = vmatpush2.msra.mxu0 0.0
  %1729 = vmatprep.subr.mxu0 0.0
  %1730 = vmatpush2.msra.mxu0 0.0
  %1731 = vmatprep.subr.mxu0 0.0
  %1732 = vmatpush2.msra.mxu0 0.0
  %1733 = vmatprep.subr.mxu0 0.0
  %1734 = vmatpush2.msra.mxu0 0.0
  %1735 = vmatprep.subr.mxu0 0.0
  %1736 = vmatpush2.msra.mxu0 0.0
  %1737 = vmatprep.subr.mxu0 0.0
  %1738 = vmatpush2.msra.mxu0 0.0
  %1739 = vmatprep.subr.mxu0 0.0
  %1740 = vmatpush2.msra.mxu0 0.0
  %1741 = vmatprep.subr.mxu0 0.0
  %1742 = vmatpush2.msra.mxu0 0.0
  %1743 = vmatprep.subr.mxu0 0.0
  %1744 = vmatpush2.msra.mxu0 0.0
  %1745 = vmatprep.subr.mxu0 0.0
  %1746 = vmatpush2.msra.mxu0 0.0
  %1747 = vmatprep.subr.mxu0 0.0
  %1748 = vmatpush2.msra.mxu0 0.0
  %1749 = vmatprep.subr.mxu0 0.0
  %1750 = vmatpush2.msra.mxu0 0.0
  %1751 = vmatprep.subr.mxu0 0.0
  %1752 = vmatpush2.msra.mxu0 0.0
  %1753 = vmatprep.subr.mxu0 0.0
  %1754 = vmatpush2.msra.mxu0 0.0
  %1755 = vmatprep.subr.mxu0 0.0
  %1756 = vmatpush2.msra.mxu0 0.0
  %1757 = vmatprep.subr.mxu0 0.0
  %1758 = vmatpush2.msra.mxu0 0.0
  %1759 = vmatprep.mubr.f32.mxu0 0.0
  %1760 = vmatmul.mubr.f32.gmra.mxu0 %v1693
  %v1761 = vpop.f32.mrf.mxu0
  %v1762 = vadd.f32 %v1687, %v1761
  %v1763 = vpop.f32.mrf.mxu0
  %1764 = vdwg.mxu0
  %v1765 = vadd.f32 %v1762, %v390
  %v1766 = vxor.u32 %v1765, 2147483648
  %v1767 = vmul.f32 %v1766, 1.442695
  %v1768 = vpow.pop %v1767
  %v1769 = vadd.f32 %v1768, 1.0
  %v1770 = vrcp.pop %v1769
  %v1771 = vmul.f32 1.0, %v1770
  %v1772 = vtanh.pop %v1765
  %v1773 = vmul.f32 %v1771, %v1508
  %1775 = vrot.lane.b32.xlu0 %v1772, 64
  %v1776 = vpop.permute.xlu0 %1775
  %v1778 = vmul.f32 %v1771, %v1776
  %1780 = vrot.lane.b32.xlu0 %v1778, 32
  %v1781 = vpop.permute.xlu0 %1780
  %v1783 = vadd.f32 %v1773, %v1781
  %v1784 = vtanh.pop %v1783
  %1786 = vrot.lane.b32.xlu0 %v1784, 64
  %v1787 = vpop.permute.xlu0 %1786
  %v1789 = vmul.f32 %v1771, %v1787
  %v1790 = vrot.slane %v130, 6
  %v1792 = vrot.slane %v135, 5
  %v1794 = vsel %vm141, %v1790, %v1792
  %1795 = vmatprep.subr.mxu0 0.0
  %1796 = vmatpush1.msra.mxu0 0.0
  %1797 = vmatprep.subr.mxu0 0.0
  %1798 = vmatpush1.msra.mxu0 0.0
  %1799 = vmatprep.subr.mxu0 0.0
  %1800 = vmatpush1.msra.mxu0 0.0
  %1801 = vmatprep.subr.mxu0 0.0
  %1802 = vmatpush1.msra.mxu0 0.0
  %1803 = vmatprep.subr.mxu0 0.0
  %1804 = vmatpush1.msra.mxu0 0.0
  %1805 = vmatprep.subr.mxu0 0.0
  %1806 = vmatpush1.msra.mxu0 0.0
  %1807 = vmatprep.subr.mxu0 0.0
  %1808 = vmatpush1.msra.mxu0 0.0
  %1809 = vmatprep.subr.mxu0 0.0
  %1810 = vmatpush1.msra.mxu0 0.0
  %1811 = vmatprep.subr.mxu0 0.0
  %1812 = vmatpush1.msra.mxu0 0.0
  %1813 = vmatprep.subr.mxu0 0.0
  %1814 = vmatpush1.msra.mxu0 0.0
  %1815 = vmatprep.subr.mxu0 0.0
  %1816 = vmatpush1.msra.mxu0 0.0
  %1817 = vmatprep.subr.mxu0 0.0
  %1818 = vmatpush1.msra.mxu0 0.0
  %1819 = vmatprep.subr.mxu0 0.0
  %1820 = vmatpush1.msra.mxu0 %v24
  %1821 = vmatprep.subr.mxu0 0.0
  %1822 = vmatpush1.msra.mxu0 %v23
  %1823 = vmatprep.subr.mxu0 0.0
  %1824 = vmatpush1.msra.mxu0 %v22
  %1825 = vmatprep.subr.mxu0 0.0
  %1826 = vmatpush1.msra.mxu0 %v21
  %1827 = vmatprep.subr.mxu0 0.0
  %1828 = vmatpush2.msra.mxu0 0.0
  %1829 = vmatprep.subr.mxu0 0.0
  %1830 = vmatpush2.msra.mxu0 0.0
  %1831 = vmatprep.subr.mxu0 0.0
  %1832 = vmatpush2.msra.mxu0 0.0
  %1833 = vmatprep.subr.mxu0 0.0
  %1834 = vmatpush2.msra.mxu0 0.0
  %1835 = vmatprep.subr.mxu0 0.0
  %1836 = vmatpush2.msra.mxu0 0.0
  %1837 = vmatprep.subr.mxu0 0.0
  %1838 = vmatpush2.msra.mxu0 0.0
  %1839 = vmatprep.subr.mxu0 0.0
  %1840 = vmatpush2.msra.mxu0 0.0
  %1841 = vmatprep.subr.mxu0 0.0
  %1842 = vmatpush2.msra.mxu0 0.0
  %1843 = vmatprep.subr.mxu0 0.0
  %1844 = vmatpush2.msra.mxu0 0.0
  %1845 = vmatprep.subr.mxu0 0.0
  %1846 = vmatpush2.msra.mxu0 0.0
  %1847 = vmatprep.subr.mxu0 0.0
  %1848 = vmatpush2.msra.mxu0 0.0
  %1849 = vmatprep.subr.mxu0 0.0
  %1850 = vmatpush2.msra.mxu0 0.0
  %1851 = vmatprep.subr.mxu0 0.0
  %1852 = vmatpush2.msra.mxu0 0.0
  %1853 = vmatprep.subr.mxu0 0.0
  %1854 = vmatpush2.msra.mxu0 0.0
  %1855 = vmatprep.subr.mxu0 0.0
  %1856 = vmatpush2.msra.mxu0 0.0
  %1857 = vmatprep.subr.mxu0 0.0
  %1858 = vmatpush2.msra.mxu0 0.0
  %1859 = vmatprep.mubr.f32.mxu0 0.0
  %1860 = vmatmul.mubr.f32.gmra.mxu0 %v1693
  %v1861 = vpop.f32.mrf.mxu0
  %v1862 = vadd.f32 0.0, %v1861
  %v1863 = vpop.f32.mrf.mxu0
  %1864 = vdwg.mxu0
  %v1865 = vadd.f32 %v1794, %v1862
  %v1866 = vxor.u32 %v1865, 2147483648
  %v1867 = vmul.f32 %v1866, 1.442695
  %v1868 = vpow.pop %v1867
  %v1869 = vadd.f32 %v1868, 1.0
  %v1870 = vrcp.pop %v1869
  %v1871 = vmul.f32 1.0, %v1870
  %v1872 = vtanh.pop %v1865
  %v1873 = vmul.f32 %v1871, %v1608
  %1875 = vrot.lane.b32.xlu0 %v1872, 64
  %v1876 = vpop.permute.xlu0 %1875
  %v1878 = vmul.f32 %v1871, %v1876
  %1880 = vrot.lane.b32.xlu0 %v1878, 32
  %v1881 = vpop.permute.xlu0 %1880
  %v1883 = vadd.f32 %v1873, %v1881
  %v1884 = vtanh.pop %v1883
  %1886 = vrot.lane.b32.xlu0 %v1884, 64
  %v1887 = vpop.permute.xlu0 %1886
  %v1889 = vmul.f32 %v1871, %v1887
  %1891 = vrot.lane.b32.xlu0 %v1789, 32
  %v1892 = vpop.permute.xlu0 %1891
  %v1893 = vsel %vm143, %v1892, 0
  %1895 = vmatprep.subr.mxu0 0.0
  %1896 = vmatpush1.msra.mxu0 0.0
  %1897 = vmatprep.subr.mxu0 0.0
  %1898 = vmatpush1.msra.mxu0 0.0
  %1899 = vmatprep.subr.mxu0 0.0
  %1900 = vmatpush1.msra.mxu0 0.0
  %1901 = vmatprep.subr.mxu0 0.0
  %1902 = vmatpush1.msra.mxu0 0.0
  %1903 = vmatprep.subr.mxu0 0.0
  %1904 = vmatpush1.msra.mxu0 0.0
  %1905 = vmatprep.subr.mxu0 0.0
  %1906 = vmatpush1.msra.mxu0 0.0
  %1907 = vmatprep.subr.mxu0 0.0
  %1908 = vmatpush1.msra.mxu0 0.0
  %1909 = vmatprep.subr.mxu0 0.0
  %1910 = vmatpush1.msra.mxu0 0.0
  %1911 = vmatprep.subr.mxu0 0.0
  %1912 = vmatpush1.msra.mxu0 0.0
  %1913 = vmatprep.subr.mxu0 0.0
  %1914 = vmatpush1.msra.mxu0 0.0
  %1915 = vmatprep.subr.mxu0 0.0
  %1916 = vmatpush1.msra.mxu0 0.0
  %1917 = vmatprep.subr.mxu0 0.0
  %1918 = vmatpush1.msra.mxu0 0.0
  %1919 = vmatprep.subr.mxu0 0.0
  %1920 = vmatpush1.msra.mxu0 %v32
  %1921 = vmatprep.subr.mxu0 0.0
  %1922 = vmatpush1.msra.mxu0 %v31
  %1923 = vmatprep.subr.mxu0 0.0
  %1924 = vmatpush1.msra.mxu0 %v30
  %1925 = vmatprep.subr.mxu0 0.0
  %1926 = vmatpush1.msra.mxu0 %v29
  %1927 = vmatprep.subr.mxu0 0.0
  %1928 = vmatpush2.msra.mxu0 0.0
  %1929 = vmatprep.subr.mxu0 0.0
  %1930 = vmatpush2.msra.mxu0 0.0
  %1931 = vmatprep.subr.mxu0 0.0
  %1932 = vmatpush2.msra.mxu0 0.0
  %1933 = vmatprep.subr.mxu0 0.0
  %1934 = vmatpush2.msra.mxu0 0.0
  %1935 = vmatprep.subr.mxu0 0.0
  %1936 = vmatpush2.msra.mxu0 0.0
  %1937 = vmatprep.subr.mxu0 0.0
  %1938 = vmatpush2.msra.mxu0 0.0
  %1939 = vmatprep.subr.mxu0 0.0
  %1940 = vmatpush2.msra.mxu0 0.0
  %1941 = vmatprep.subr.mxu0 0.0
  %1942 = vmatpush2.msra.mxu0 0.0
  %1943 = vmatprep.subr.mxu0 0.0
  %1944 = vmatpush2.msra.mxu0 0.0
  %1945 = vmatprep.subr.mxu0 0.0
  %1946 = vmatpush2.msra.mxu0 0.0
  %1947 = vmatprep.subr.mxu0 0.0
  %1948 = vmatpush2.msra.mxu0 0.0
  %1949 = vmatprep.subr.mxu0 0.0
  %1950 = vmatpush2.msra.mxu0 0.0
  %1951 = vmatprep.subr.mxu0 0.0
  %1952 = vmatpush2.msra.mxu0 0.0
  %1953 = vmatprep.subr.mxu0 0.0
  %1954 = vmatpush2.msra.mxu0 0.0
  %1955 = vmatprep.subr.mxu0 0.0
  %1956 = vmatpush2.msra.mxu0 0.0
  %1957 = vmatprep.subr.mxu0 0.0
  %1958 = vmatpush2.msra.mxu0 0.0
  %1959 = vmatprep.mubr.f32.mxu0 0.0
  %1960 = vmatmul.mubr.f32.gmra.mxu0 %v1893
  %v1961 = vpop.f32.mrf.mxu0
  %v1962 = vadd.f32 0.0, %v1961
  %v1963 = vpop.f32.mrf.mxu0
  %1964 = vdwg.mxu0
  %1966 = vrot.lane.b32.xlu0 %v1889, 32
  %v1967 = vpop.permute.xlu0 %1966
  %v1968 = vsel %vm143, %v1967, 0
  %1970 = vmatprep.subr.mxu0 0.0
  %1971 = vmatpush1.msra.mxu0 0.0
  %1972 = vmatprep.subr.mxu0 0.0
  %1973 = vmatpush1.msra.mxu0 0.0
  %1974 = vmatprep.subr.mxu0 0.0
  %1975 = vmatpush1.msra.mxu0 0.0
  %1976 = vmatprep.subr.mxu0 0.0
  %1977 = vmatpush1.msra.mxu0 0.0
  %1978 = vmatprep.subr.mxu0 0.0
  %1979 = vmatpush1.msra.mxu0 0.0
  %1980 = vmatprep.subr.mxu0 0.0
  %1981 = vmatpush1.msra.mxu0 0.0
  %1982 = vmatprep.subr.mxu0 0.0
  %1983 = vmatpush1.msra.mxu0 0.0
  %1984 = vmatprep.subr.mxu0 0.0
  %1985 = vmatpush1.msra.mxu0 0.0
  %1986 = vmatprep.subr.mxu0 0.0
  %1987 = vmatpush1.msra.mxu0 0.0
  %1988 = vmatprep.subr.mxu0 0.0
  %1989 = vmatpush1.msra.mxu0 0.0
  %1990 = vmatprep.subr.mxu0 0.0
  %1991 = vmatpush1.msra.mxu0 0.0
  %1992 = vmatprep.subr.mxu0 0.0
  %1993 = vmatpush1.msra.mxu0 0.0
  %1994 = vmatprep.subr.mxu0 0.0
  %1995 = vmatpush1.msra.mxu0 %v28
  %1996 = vmatprep.subr.mxu0 0.0
  %1997 = vmatpush1.msra.mxu0 %v27
  %1998 = vmatprep.subr.mxu0 0.0
  %1999 = vmatpush1.msra.mxu0 %v26
  %2000 = vmatprep.subr.mxu0 0.0
  %2001 = vmatpush1.msra.mxu0 %v25
  %2002 = vmatprep.subr.mxu0 0.0
  %2003 = vmatpush2.msra.mxu0 0.0
  %2004 = vmatprep.subr.mxu0 0.0
  %2005 = vmatpush2.msra.mxu0 0.0
  %2006 = vmatprep.subr.mxu0 0.0
  %2007 = vmatpush2.msra.mxu0 0.0
  %2008 = vmatprep.subr.mxu0 0.0
  %2009 = vmatpush2.msra.mxu0 0.0
  %2010 = vmatprep.subr.mxu0 0.0
  %2011 = vmatpush2.msra.mxu0 0.0
  %2012 = vmatprep.subr.mxu0 0.0
  %2013 = vmatpush2.msra.mxu0 0.0
  %2014 = vmatprep.subr.mxu0 0.0
  %2015 = vmatpush2.msra.mxu0 0.0
  %2016 = vmatprep.subr.mxu0 0.0
  %2017 = vmatpush2.msra.mxu0 0.0
  %2018 = vmatprep.subr.mxu0 0.0
  %2019 = vmatpush2.msra.mxu0 0.0
  %2020 = vmatprep.subr.mxu0 0.0
  %2021 = vmatpush2.msra.mxu0 0.0
  %2022 = vmatprep.subr.mxu0 0.0
  %2023 = vmatpush2.msra.mxu0 0.0
  %2024 = vmatprep.subr.mxu0 0.0
  %2025 = vmatpush2.msra.mxu0 0.0
  %2026 = vmatprep.subr.mxu0 0.0
  %2027 = vmatpush2.msra.mxu0 0.0
  %2028 = vmatprep.subr.mxu0 0.0
  %2029 = vmatpush2.msra.mxu0 0.0
  %2030 = vmatprep.subr.mxu0 0.0
  %2031 = vmatpush2.msra.mxu0 0.0
  %2032 = vmatprep.subr.mxu0 0.0
  %2033 = vmatpush2.msra.mxu0 0.0
  %2034 = vmatprep.mubr.f32.mxu0 0.0
  %2035 = vmatmul.mubr.f32.gmra.mxu0 %v1968
  %v2036 = vpop.f32.mrf.mxu0
  %v2037 = vadd.f32 %v1962, %v2036
  %v2038 = vpop.f32.mrf.mxu0
  %2039 = vdwg.mxu0
  %v2040 = vadd.f32 %v2037, %v390
  %v2041 = vxor.u32 %v2040, 2147483648
  %v2042 = vmul.f32 %v2041, 1.442695
  %v2043 = vpow.pop %v2042
  %v2044 = vadd.f32 %v2043, 1.0
  %v2045 = vrcp.pop %v2044
  %v2046 = vmul.f32 1.0, %v2045
  %v2047 = vtanh.pop %v2040
  %v2048 = vmul.f32 %v2046, %v1783
  %2050 = vrot.lane.b32.xlu0 %v2047, 64
  %v2051 = vpop.permute.xlu0 %2050
  %v2053 = vmul.f32 %v2046, %v2051
  %2055 = vrot.lane.b32.xlu0 %v2053, 32
  %v2056 = vpop.permute.xlu0 %2055
  %v2058 = vadd.f32 %v2048, %v2056
  %v2059 = vtanh.pop %v2058
  %2061 = vrot.lane.b32.xlu0 %v2059, 64
  %v2062 = vpop.permute.xlu0 %2061
  %v2064 = vmul.f32 %v2046, %v2062
  %v2065 = vrot.slane %v130, 7
  %v2067 = vrot.slane %v135, 6
  %v2069 = vsel %vm141, %v2065, %v2067
  %2070 = vmatprep.subr.mxu0 0.0
  %2071 = vmatpush1.msra.mxu0 0.0
  %2072 = vmatprep.subr.mxu0 0.0
  %2073 = vmatpush1.msra.mxu0 0.0
  %2074 = vmatprep.subr.mxu0 0.0
  %2075 = vmatpush1.msra.mxu0 0.0
  %2076 = vmatprep.subr.mxu0 0.0
  %2077 = vmatpush1.msra.mxu0 0.0
  %2078 = vmatprep.subr.mxu0 0.0
  %2079 = vmatpush1.msra.mxu0 0.0
  %2080 = vmatprep.subr.mxu0 0.0
  %2081 = vmatpush1.msra.mxu0 0.0
  %2082 = vmatprep.subr.mxu0 0.0
  %2083 = vmatpush1.msra.mxu0 0.0
  %2084 = vmatprep.subr.mxu0 0.0
  %2085 = vmatpush1.msra.mxu0 0.0
  %2086 = vmatprep.subr.mxu0 0.0
  %2087 = vmatpush1.msra.mxu0 0.0
  %2088 = vmatprep.subr.mxu0 0.0
  %2089 = vmatpush1.msra.mxu0 0.0
  %2090 = vmatprep.subr.mxu0 0.0
  %2091 = vmatpush1.msra.mxu0 0.0
  %2092 = vmatprep.subr.mxu0 0.0
  %2093 = vmatpush1.msra.mxu0 0.0
  %2094 = vmatprep.subr.mxu0 0.0
  %2095 = vmatpush1.msra.mxu0 %v24
  %2096 = vmatprep.subr.mxu0 0.0
  %2097 = vmatpush1.msra.mxu0 %v23
  %2098 = vmatprep.subr.mxu0 0.0
  %2099 = vmatpush1.msra.mxu0 %v22
  %2100 = vmatprep.subr.mxu0 0.0
  %2101 = vmatpush1.msra.mxu0 %v21
  %2102 = vmatprep.subr.mxu0 0.0
  %2103 = vmatpush2.msra.mxu0 0.0
  %2104 = vmatprep.subr.mxu0 0.0
  %2105 = vmatpush2.msra.mxu0 0.0
  %2106 = vmatprep.subr.mxu0 0.0
  %2107 = vmatpush2.msra.mxu0 0.0
  %2108 = vmatprep.subr.mxu0 0.0
  %2109 = vmatpush2.msra.mxu0 0.0
  %2110 = vmatprep.subr.mxu0 0.0
  %2111 = vmatpush2.msra.mxu0 0.0
  %2112 = vmatprep.subr.mxu0 0.0
  %2113 = vmatpush2.msra.mxu0 0.0
  %2114 = vmatprep.subr.mxu0 0.0
  %2115 = vmatpush2.msra.mxu0 0.0
  %2116 = vmatprep.subr.mxu0 0.0
  %2117 = vmatpush2.msra.mxu0 0.0
  %2118 = vmatprep.subr.mxu0 0.0
  %2119 = vmatpush2.msra.mxu0 0.0
  %2120 = vmatprep.subr.mxu0 0.0
  %2121 = vmatpush2.msra.mxu0 0.0
  %2122 = vmatprep.subr.mxu0 0.0
  %2123 = vmatpush2.msra.mxu0 0.0
  %2124 = vmatprep.subr.mxu0 0.0
  %2125 = vmatpush2.msra.mxu0 0.0
  %2126 = vmatprep.subr.mxu0 0.0
  %2127 = vmatpush2.msra.mxu0 0.0
  %2128 = vmatprep.subr.mxu0 0.0
  %2129 = vmatpush2.msra.mxu0 0.0
  %2130 = vmatprep.subr.mxu0 0.0
  %2131 = vmatpush2.msra.mxu0 0.0
  %2132 = vmatprep.subr.mxu0 0.0
  %2133 = vmatpush2.msra.mxu0 0.0
  %2134 = vmatprep.mubr.f32.mxu0 0.0
  %2135 = vmatmul.mubr.f32.gmra.mxu0 %v1968
  %v2136 = vpop.f32.mrf.mxu0
  %v2137 = vadd.f32 0.0, %v2136
  %v2138 = vpop.f32.mrf.mxu0
  %2139 = vdwg.mxu0
  %v2140 = vadd.f32 %v2069, %v2137
  %v2141 = vxor.u32 %v2140, 2147483648
  %v2142 = vmul.f32 %v2141, 1.442695
  %v2143 = vpow.pop %v2142
  %v2144 = vadd.f32 %v2143, 1.0
  %v2145 = vrcp.pop %v2144
  %v2146 = vmul.f32 1.0, %v2145
  %v2147 = vtanh.pop %v2140
  %v2148 = vmul.f32 %v2146, %v1883
  %2150 = vrot.lane.b32.xlu0 %v2147, 64
  %v2151 = vpop.permute.xlu0 %2150
  %v2153 = vmul.f32 %v2146, %v2151
  %2155 = vrot.lane.b32.xlu0 %v2153, 32
  %v2156 = vpop.permute.xlu0 %2155
  %v2158 = vadd.f32 %v2148, %v2156
  %v2159 = vtanh.pop %v2158
  %2161 = vrot.lane.b32.xlu0 %v2159, 64
  %v2162 = vpop.permute.xlu0 %2161
  %v2164 = vmul.f32 %v2146, %v2162
  %2166 = vrot.lane.b32.xlu0 %v2064, 32
  %v2167 = vpop.permute.xlu0 %2166
  %v2168 = vsel %vm143, %v2167, 0
  %2170 = vmatprep.subr.mxu0 0.0
  %2171 = vmatpush1.msra.mxu0 0.0
  %2172 = vmatprep.subr.mxu0 0.0
  %2173 = vmatpush1.msra.mxu0 0.0
  %2174 = vmatprep.subr.mxu0 0.0
  %2175 = vmatpush1.msra.mxu0 0.0
  %2176 = vmatprep.subr.mxu0 0.0
  %2177 = vmatpush1.msra.mxu0 0.0
  %2178 = vmatprep.subr.mxu0 0.0
  %2179 = vmatpush1.msra.mxu0 0.0
  %2180 = vmatprep.subr.mxu0 0.0
  %2181 = vmatpush1.msra.mxu0 0.0
  %2182 = vmatprep.subr.mxu0 0.0
  %2183 = vmatpush1.msra.mxu0 0.0
  %2184 = vmatprep.subr.mxu0 0.0
  %2185 = vmatpush1.msra.mxu0 0.0
  %2186 = vmatprep.subr.mxu0 0.0
  %2187 = vmatpush1.msra.mxu0 0.0
  %2188 = vmatprep.subr.mxu0 0.0
  %2189 = vmatpush1.msra.mxu0 0.0
  %2190 = vmatprep.subr.mxu0 0.0
  %2191 = vmatpush1.msra.mxu0 0.0
  %2192 = vmatprep.subr.mxu0 0.0
  %2193 = vmatpush1.msra.mxu0 0.0
  %2194 = vmatprep.subr.mxu0 0.0
  %2195 = vmatpush1.msra.mxu0 %v32
  %2196 = vmatprep.subr.mxu0 0.0
  %2197 = vmatpush1.msra.mxu0 %v31
  %2198 = vmatprep.subr.mxu0 0.0
  %2199 = vmatpush1.msra.mxu0 %v30
  %2200 = vmatprep.subr.mxu0 0.0
  %2201 = vmatpush1.msra.mxu0 %v29
  %2202 = vmatprep.subr.mxu0 0.0
  %2203 = vmatpush2.msra.mxu0 0.0
  %2204 = vmatprep.subr.mxu0 0.0
  %2205 = vmatpush2.msra.mxu0 0.0
  %2206 = vmatprep.subr.mxu0 0.0
  %2207 = vmatpush2.msra.mxu0 0.0
  %2208 = vmatprep.subr.mxu0 0.0
  %2209 = vmatpush2.msra.mxu0 0.0
  %2210 = vmatprep.subr.mxu0 0.0
  %2211 = vmatpush2.msra.mxu0 0.0
  %2212 = vmatprep.subr.mxu0 0.0
  %2213 = vmatpush2.msra.mxu0 0.0
  %2214 = vmatprep.subr.mxu0 0.0
  %2215 = vmatpush2.msra.mxu0 0.0
  %2216 = vmatprep.subr.mxu0 0.0
  %2217 = vmatpush2.msra.mxu0 0.0
  %2218 = vmatprep.subr.mxu0 0.0
  %2219 = vmatpush2.msra.mxu0 0.0
  %2220 = vmatprep.subr.mxu0 0.0
  %2221 = vmatpush2.msra.mxu0 0.0
  %2222 = vmatprep.subr.mxu0 0.0
  %2223 = vmatpush2.msra.mxu0 0.0
  %2224 = vmatprep.subr.mxu0 0.0
  %2225 = vmatpush2.msra.mxu0 0.0
  %2226 = vmatprep.subr.mxu0 0.0
  %2227 = vmatpush2.msra.mxu0 0.0
  %2228 = vmatprep.subr.mxu0 0.0
  %2229 = vmatpush2.msra.mxu0 0.0
  %2230 = vmatprep.subr.mxu0 0.0
  %2231 = vmatpush2.msra.mxu0 0.0
  %2232 = vmatprep.subr.mxu0 0.0
  %2233 = vmatpush2.msra.mxu0 0.0
  %2234 = vmatprep.mubr.f32.mxu0 0.0
  %2235 = vmatmul.mubr.f32.gmra.mxu0 %v2168
  %v2236 = vpop.f32.mrf.mxu0
  %v2237 = vadd.f32 0.0, %v2236
  %v2238 = vpop.f32.mrf.mxu0
  %2239 = vdwg.mxu0
  %2241 = vrot.lane.b32.xlu0 %v2164, 32
  %v2242 = vpop.permute.xlu0 %2241
  %v2243 = vsel %vm143, %v2242, 0
  %2245 = vmatprep.subr.mxu0 0.0
  %2246 = vmatpush1.msra.mxu0 0.0
  %2247 = vmatprep.subr.mxu0 0.0
  %2248 = vmatpush1.msra.mxu0 0.0
  %2249 = vmatprep.subr.mxu0 0.0
  %2250 = vmatpush1.msra.mxu0 0.0
  %2251 = vmatprep.subr.mxu0 0.0
  %2252 = vmatpush1.msra.mxu0 0.0
  %2253 = vmatprep.subr.mxu0 0.0
  %2254 = vmatpush1.msra.mxu0 0.0
  %2255 = vmatprep.subr.mxu0 0.0
  %2256 = vmatpush1.msra.mxu0 0.0
  %2257 = vmatprep.subr.mxu0 0.0
  %2258 = vmatpush1.msra.mxu0 0.0
  %2259 = vmatprep.subr.mxu0 0.0
  %2260 = vmatpush1.msra.mxu0 0.0
  %2261 = vmatprep.subr.mxu0 0.0
  %2262 = vmatpush1.msra.mxu0 0.0
  %2263 = vmatprep.subr.mxu0 0.0
  %2264 = vmatpush1.msra.mxu0 0.0
  %2265 = vmatprep.subr.mxu0 0.0
  %2266 = vmatpush1.msra.mxu0 0.0
  %2267 = vmatprep.subr.mxu0 0.0
  %2268 = vmatpush1.msra.mxu0 0.0
  %2269 = vmatprep.subr.mxu0 0.0
  %2270 = vmatpush1.msra.mxu0 %v28
  %2271 = vmatprep.subr.mxu0 0.0
  %2272 = vmatpush1.msra.mxu0 %v27
  %2273 = vmatprep.subr.mxu0 0.0
  %2274 = vmatpush1.msra.mxu0 %v26
  %2275 = vmatprep.subr.mxu0 0.0
  %2276 = vmatpush1.msra.mxu0 %v25
  %2277 = vmatprep.subr.mxu0 0.0
  %2278 = vmatpush2.msra.mxu0 0.0
  %2279 = vmatprep.subr.mxu0 0.0
  %2280 = vmatpush2.msra.mxu0 0.0
  %2281 = vmatprep.subr.mxu0 0.0
  %2282 = vmatpush2.msra.mxu0 0.0
  %2283 = vmatprep.subr.mxu0 0.0
  %2284 = vmatpush2.msra.mxu0 0.0
  %2285 = vmatprep.subr.mxu0 0.0
  %2286 = vmatpush2.msra.mxu0 0.0
  %2287 = vmatprep.subr.mxu0 0.0
  %2288 = vmatpush2.msra.mxu0 0.0
  %2289 = vmatprep.subr.mxu0 0.0
  %2290 = vmatpush2.msra.mxu0 0.0
  %2291 = vmatprep.subr.mxu0 0.0
  %2292 = vmatpush2.msra.mxu0 0.0
  %2293 = vmatprep.subr.mxu0 0.0
  %2294 = vmatpush2.msra.mxu0 0.0
  %2295 = vmatprep.subr.mxu0 0.0
  %2296 = vmatpush2.msra.mxu0 0.0
  %2297 = vmatprep.subr.mxu0 0.0
  %2298 = vmatpush2.msra.mxu0 0.0
  %2299 = vmatprep.subr.mxu0 0.0
  %2300 = vmatpush2.msra.mxu0 0.0
  %2301 = vmatprep.subr.mxu0 0.0
  %2302 = vmatpush2.msra.mxu0 0.0
  %2303 = vmatprep.subr.mxu0 0.0
  %2304 = vmatpush2.msra.mxu0 0.0
  %2305 = vmatprep.subr.mxu0 0.0
  %2306 = vmatpush2.msra.mxu0 0.0
  %2307 = vmatprep.subr.mxu0 0.0
  %2308 = vmatpush2.msra.mxu0 0.0
  %2309 = vmatprep.mubr.f32.mxu0 0.0
  %2310 = vmatmul.mubr.f32.gmra.mxu0 %v2243
  %v2311 = vpop.f32.mrf.mxu0
  %v2312 = vadd.f32 %v2237, %v2311
  %v2313 = vpop.f32.mrf.mxu0
  %2314 = vdwg.mxu0
  %v2315 = vadd.f32 %v2312, %v390
  %v2316 = vxor.u32 %v2315, 2147483648
  %v2317 = vmul.f32 %v2316, 1.442695
  %v2318 = vpow.pop %v2317
  %v2319 = vadd.f32 %v2318, 1.0
  %v2320 = vrcp.pop %v2319
  %v2321 = vmul.f32 1.0, %v2320
  %v2322 = vtanh.pop %v2315
  %v2323 = vmul.f32 %v2321, %v2058
  %2325 = vrot.lane.b32.xlu0 %v2322, 64
  %v2326 = vpop.permute.xlu0 %2325
  %v2328 = vmul.f32 %v2321, %v2326
  %2330 = vrot.lane.b32.xlu0 %v2328, 32
  %v2331 = vpop.permute.xlu0 %2330
  %v2333 = vadd.f32 %v2323, %v2331
  %v2334 = vtanh.pop %v2333
  %2336 = vrot.lane.b32.xlu0 %v2334, 64
  %v2337 = vpop.permute.xlu0 %2336
  %v2339 = vmul.f32 %v2321, %v2337
  %v2340 = vrot.slane %v689, 7
  %v2342 = vrot.slane %v964, 6
  %v2344 = vrot.slane %v1239, 5
  %v2346 = vrot.slane %v1514, 4
  %v2348 = vrot.slane %v1789, 3
  %v2350 = vrot.slane %v2064, 2
  %v2353 = vrot.slane %v2339, 1
  %v2355 = vrot.slane %v415, 1
  %v2357 = vrot.slane %v964, 7
  %v2359 = vrot.slane %v1239, 6
  %v2361 = vrot.slane %v1514, 5
  %v2363 = vrot.slane %v1789, 4
  %v2365 = vrot.slane %v2064, 3
  %v2367 = vrot.slane %v2339, 2
  %v2369 = vsel %vm141, %v415, %v2340
  %vm2370 = vcmask 1041408
  %v2371 = vsel %vm2370, %v2369, %v2342
  %vm2372 = vcmask 1042432
  %v2373 = vsel %vm2372, %v2371, %v2344
  %v2374 = vsel %vm59, %v2373, %v2346
  %vm2375 = vcmask 1044480
  %v2376 = vsel %vm2375, %v2374, %v2348
  %vm2377 = vcmask 1045504
  %v2378 = vsel %vm2377, %v2376, %v2350
  %vm2379 = vcmask 1046528
  %v2380 = vsel %vm2379, %v2378, %v2353
  %v2381 = vsel %vm141, %v2355, %v689
  %v2382 = vsel %vm2370, %v2381, %v2357
  %v2383 = vsel %vm2372, %v2382, %v2359
  %v2384 = vsel %vm59, %v2383, %v2361
  %v2385 = vsel %vm2375, %v2384, %v2363
  %v2386 = vsel %vm2377, %v2385, %v2365
  %v2387 = vsel %vm2379, %v2386, %v2367
  %v2388 = vlaneseq
  %v2389 = vshrl.u32 %v2388, 7
  %v2390 = vsub.s32 0, %v2389
  %v2391 = vrot.slane %v39, %v2390
  %2394 = vrot.lane.b32.xlu0 %v2380, 32
  %v2395 = vpop.permute.xlu0 %2394
  %2396 = vrot.lane.b32.xlu0 %v2387, 32
  %v2397 = vpop.permute.xlu0 %2396
  %v2398 = vsel %vm143, %v2395, 0
  %v2400 = vsel %vm143, %v2397, 0
  %2402 = vmatprep.subr.mxu0 0.0
  %2403 = vmatpush1.msra.mxu0 0.0
  %2404 = vmatprep.subr.mxu0 0.0
  %2405 = vmatpush1.msra.mxu0 0.0
  %2406 = vmatprep.subr.mxu0 0.0
  %2407 = vmatpush1.msra.mxu0 0.0
  %2408 = vmatprep.subr.mxu0 0.0
  %2409 = vmatpush1.msra.mxu0 0.0
  %2410 = vmatprep.subr.mxu0 0.0
  %2411 = vmatpush1.msra.mxu0 0.0
  %2412 = vmatprep.subr.mxu0 0.0
  %2413 = vmatpush1.msra.mxu0 0.0
  %2414 = vmatprep.subr.mxu0 0.0
  %2415 = vmatpush1.msra.mxu0 0.0
  %2416 = vmatprep.subr.mxu0 0.0
  %2417 = vmatpush1.msra.mxu0 0.0
  %2418 = vmatprep.subr.mxu0 0.0
  %2419 = vmatpush1.msra.mxu0 0.0
  %2420 = vmatprep.subr.mxu0 0.0
  %2421 = vmatpush1.msra.mxu0 0.0
  %2422 = vmatprep.subr.mxu0 0.0
  %2423 = vmatpush1.msra.mxu0 0.0
  %2424 = vmatprep.subr.mxu0 0.0
  %2425 = vmatpush1.msra.mxu0 0.0
  %2426 = vmatprep.subr.mxu0 0.0
  %2427 = vmatpush1.msra.mxu0 %v38
  %2428 = vmatprep.subr.mxu0 0.0
  %2429 = vmatpush1.msra.mxu0 %v37
  %2430 = vmatprep.subr.mxu0 0.0
  %2431 = vmatpush1.msra.mxu0 %v36
  %2432 = vmatprep.subr.mxu0 0.0
  %2433 = vmatpush1.msra.mxu0 %v35
  %2434 = vmatprep.subr.mxu0 0.0
  %2435 = vmatpush2.msra.mxu0 0.0
  %2436 = vmatprep.subr.mxu0 0.0
  %2437 = vmatpush2.msra.mxu0 0.0
  %2438 = vmatprep.subr.mxu0 0.0
  %2439 = vmatpush2.msra.mxu0 0.0
  %2440 = vmatprep.subr.mxu0 0.0
  %2441 = vmatpush2.msra.mxu0 0.0
  %2442 = vmatprep.subr.mxu0 0.0
  %2443 = vmatpush2.msra.mxu0 0.0
  %2444 = vmatprep.subr.mxu0 0.0
  %2445 = vmatpush2.msra.mxu0 0.0
  %2446 = vmatprep.subr.mxu0 0.0
  %2447 = vmatpush2.msra.mxu0 0.0
  %2448 = vmatprep.subr.mxu0 0.0
  %2449 = vmatpush2.msra.mxu0 0.0
  %2450 = vmatprep.subr.mxu0 0.0
  %2451 = vmatpush2.msra.mxu0 0.0
  %2452 = vmatprep.subr.mxu0 0.0
  %2453 = vmatpush2.msra.mxu0 0.0
  %2454 = vmatprep.subr.mxu0 0.0
  %2455 = vmatpush2.msra.mxu0 0.0
  %2456 = vmatprep.subr.mxu0 0.0
  %2457 = vmatpush2.msra.mxu0 0.0
  %2458 = vmatprep.subr.mxu0 0.0
  %2459 = vmatpush2.msra.mxu0 0.0
  %2460 = vmatprep.subr.mxu0 0.0
  %2461 = vmatpush2.msra.mxu0 0.0
  %2462 = vmatprep.subr.mxu0 0.0
  %2463 = vmatpush2.msra.mxu0 0.0
  %2464 = vmatprep.subr.mxu0 0.0
  %2465 = vmatpush2.msra.mxu0 0.0
  %2466 = vmatprep.mubr.f32.mxu0 0.0
  %2467 = vmatmul.mubr.f32.gmra.mxu0 %v2398
  %v2468 = vpop.f32.mrf.mxu0
  %v2469 = vadd.f32 %v2391, %v2468
  %v2470 = vpop.f32.mrf.mxu0
  %2471 = vmatprep.mubr.f32.mxu0 0.0
  %2472 = vmatmul.mubr.f32.gmra.mxu0 %v2400
  %v2473 = vpop.f32.mrf.mxu0
  %v2474 = vadd.f32 %v2391, %v2473
  %v2475 = vpop.f32.mrf.mxu0
  %2476 = vdwg.mxu0
  %v2477 = vmax.f32 %v2469, 0.0
  %v2478 = vmax.f32 %v2474, 0.0
  %v2479 = vlaneseq
  %v2480 = vshrl.u32 %v2479, 7
  %v2481 = vsub.s32 0, %v2480
  %v2482 = vrot.slane %v44, %v2481
  %v2484 = vsel %vm143, %v2477, 0
  %v2487 = vsel %vm143, %v2478, 0
  %2489 = vmatprep.subr.mxu0 0.0
  %2490 = vmatpush1.msra.mxu0 0.0
  %2491 = vmatprep.subr.mxu0 0.0
  %2492 = vmatpush1.msra.mxu0 0.0
  %2493 = vmatprep.subr.mxu0 0.0
  %2494 = vmatpush1.msra.mxu0 0.0
  %2495 = vmatprep.subr.mxu0 0.0
  %2496 = vmatpush1.msra.mxu0 0.0
  %2497 = vmatprep.subr.mxu0 0.0
  %2498 = vmatpush1.msra.mxu0 0.0
  %2499 = vmatprep.subr.mxu0 0.0
  %2500 = vmatpush1.msra.mxu0 0.0
  %2501 = vmatprep.subr.mxu0 0.0
  %2502 = vmatpush1.msra.mxu0 0.0
  %2503 = vmatprep.subr.mxu0 0.0
  %2504 = vmatpush1.msra.mxu0 0.0
  %2505 = vmatprep.subr.mxu0 0.0
  %2506 = vmatpush1.msra.mxu0 0.0
  %2507 = vmatprep.subr.mxu0 0.0
  %2508 = vmatpush1.msra.mxu0 0.0
  %2509 = vmatprep.subr.mxu0 0.0
  %2510 = vmatpush1.msra.mxu0 0.0
  %2511 = vmatprep.subr.mxu0 0.0
  %2512 = vmatpush1.msra.mxu0 0.0
  %2513 = vmatprep.subr.mxu0 0.0
  %2514 = vmatpush1.msra.mxu0 %v43
  %2515 = vmatprep.subr.mxu0 0.0
  %2516 = vmatpush1.msra.mxu0 %v42
  %2517 = vmatprep.subr.mxu0 0.0
  %2518 = vmatpush1.msra.mxu0 %v41
  %2519 = vmatprep.subr.mxu0 0.0
  %2520 = vmatpush1.msra.mxu0 %v40
  %2521 = vmatprep.subr.mxu0 0.0
  %2522 = vmatpush2.msra.mxu0 0.0
  %2523 = vmatprep.subr.mxu0 0.0
  %2524 = vmatpush2.msra.mxu0 0.0
  %2525 = vmatprep.subr.mxu0 0.0
  %2526 = vmatpush2.msra.mxu0 0.0
  %2527 = vmatprep.subr.mxu0 0.0
  %2528 = vmatpush2.msra.mxu0 0.0
  %2529 = vmatprep.subr.mxu0 0.0
  %2530 = vmatpush2.msra.mxu0 0.0
  %2531 = vmatprep.subr.mxu0 0.0
  %2532 = vmatpush2.msra.mxu0 0.0
  %2533 = vmatprep.subr.mxu0 0.0
  %2534 = vmatpush2.msra.mxu0 0.0
  %2535 = vmatprep.subr.mxu0 0.0
  %2536 = vmatpush2.msra.mxu0 0.0
  %2537 = vmatprep.subr.mxu0 0.0
  %2538 = vmatpush2.msra.mxu0 0.0
  %2539 = vmatprep.subr.mxu0 0.0
  %2540 = vmatpush2.msra.mxu0 0.0
  %2541 = vmatprep.subr.mxu0 0.0
  %2542 = vmatpush2.msra.mxu0 0.0
  %2543 = vmatprep.subr.mxu0 0.0
  %2544 = vmatpush2.msra.mxu0 0.0
  %2545 = vmatprep.subr.mxu0 0.0
  %2546 = vmatpush2.msra.mxu0 0.0
  %2547 = vmatprep.subr.mxu0 0.0
  %2548 = vmatpush2.msra.mxu0 0.0
  %2549 = vmatprep.subr.mxu0 0.0
  %2550 = vmatpush2.msra.mxu0 0.0
  %2551 = vmatprep.subr.mxu0 0.0
  %2552 = vmatpush2.msra.mxu0 0.0
  %2553 = vmatprep.mubr.f32.mxu0 0.0
  %2554 = vmatmul.mubr.f32.gmra.mxu0 %v2484
  %v2555 = vpop.f32.mrf.mxu0
  %v2556 = vadd.f32 %v2482, %v2555
  %v2557 = vpop.f32.mrf.mxu0
  %2558 = vmatprep.mubr.f32.mxu0 0.0
  %2559 = vmatmul.mubr.f32.gmra.mxu0 %v2487
  %v2560 = vpop.f32.mrf.mxu0
  %v2561 = vadd.f32 %v2482, %v2560
  %v2562 = vpop.f32.mrf.mxu0
  %2563 = vdwg.mxu0
  %v2564 = vtanh.pop %v2556
  %v2565 = vtanh.pop %v2561
  %v2566 = vlaneseq
  %v2567 = vshrl.u32 %v2566, 7
  %v2568 = vsub.s32 0, %v2567
  %v2569 = vrot.slane %v45, %v2568
  %v2570 = vmul.f32 %v2564, %v2569
  %v2571 = vmul.f32 %v2565, %v2569
  %vm2572 = vcmask 15360
  %2573 = vst.msk [vmem:[%s5] sm:$0xff] %vm2572, %v2570
  %2574 = vst.msk [vmem:[%s5 + $0x8] sm:$0xff] %vm2572, %v2571
  // Predicated region
  $region22: #{lstm_model_forward.1} parent=0 // pred_check
    _
  $region23: #{lstm_model_forward.1} parent=0 // pred_check_branch
    %2576 = sbr.rel (0) target = $region25
  $region24: #{lstm_model_forward.1} parent=0 // pred_region
    _
  $region25: #{lstm_model_forward.1} parent=0 // pred_fallthru
    _
  // Predicated region
  $region26: #{lstm_model_forward.1} parent=0 // pred_check
    _
  $region27: #{lstm_model_forward.1} parent=0 // pred_check_branch
    %2578 = sbr.rel (0) target = $region29
  $region28: #{lstm_model_forward.1} parent=0 // pred_region
    _
  $region29: #{lstm_model_forward.1} parent=0 // pred_fallthru
    _

</llo_original>
